<compile_context>
chip_gen: v7x
topology: tpu7x:2x2x1
jax: 0.10.0
libtpu: 0.0.40
codegen_flags: <defaults>
</compile_context>

<pallas_src>
import functools
import math

import jax
import jax.numpy as jnp
import numpy as np
from jax.experimental import pallas as pl
from jax.experimental.pallas import tpu as pltpu


# ----------------------------- kernel helpers -----------------------------
def _layer_norm(x, g, b, eps=1e-6):
    mu = jnp.mean(x, axis=-1, keepdims=True)
    var = jnp.mean((x - mu) ** 2, axis=-1, keepdims=True)
    return (x - mu) * jax.lax.rsqrt(var + eps) * g + b


# ----------------------------- fused stack kernel --------------------------
def encoder_stack_kernel(z_ref, maskb_ref,
                         ln1_g_ref, ln1_b_ref,
                         wqkv_ref, bqkv_ref, wo_ref, bo_ref,
                         ln2_g_ref, ln2_b_ref,
                         w1_ref, b1_ref, w2_ref, b2_ref,
                         fin_g_ref, fin_b_ref,
                         out_ref,
                         *, B, S, num_heads, d_attn, d_mid):
    l = pl.program_id(0)
    num_layers = pl.num_programs(0)
    N = B * S

    # Load the input activations into the VMEM-resident output block once.
    @pl.when(l == 0)
    def _():
        out_ref[...] = z_ref[...]

    z = out_ref[...].astype(jnp.float32)              # (N, D) resident activations

    # Additive key-padding bias (0 valid / -1e30 masked), hoisted out of the
    # head loop so the (B,1,S) broadcast is built exactly once per layer.
    mask_bias = maskb_ref[...][:, None, :]            # (B, 1, S)

    # --- LayerNorm 1 ---
    z1 = _layer_norm(z, ln1_g_ref[0], ln1_b_ref[0])

    # --- Fused QKV projection: one wide MXU matmul (scale already folded in Wq) ---
    qkv = jnp.dot(z1, wqkv_ref[0], preferred_element_type=jnp.float32) + bqkv_ref[0]
    nq = num_heads * d_attn
    nk = num_heads * d_attn

    # --- Multi-head self-attention (per-head scores; static head unroll) ---
    head_outs = []
    for h in range(num_heads):
        qh = qkv[:, h * d_attn:(h + 1) * d_attn].reshape(B, S, d_attn)
        kh = qkv[:, nq + h * d_attn: nq + (h + 1) * d_attn].reshape(B, S, d_attn)
        vh = qkv[:, nq + nk + h * d_mid: nq + nk + (h + 1) * d_mid].reshape(B, S, d_mid)
        s = jnp.einsum('bqd,bkd->bqk', qh, kh,
                       preferred_element_type=jnp.float32)          # (B, S, S)
        s = s + mask_bias                                            # additive mask
        s = s - jnp.max(s, axis=-1, keepdims=True)
        p = jnp.exp(s)
        p = p * pl.reciprocal(jnp.sum(p, axis=-1, keepdims=True))
        oh = jnp.einsum('bqk,bkd->bqd', p, vh,
                        preferred_element_type=jnp.float32)          # (B, S, d_mid)
        head_outs.append(oh.reshape(N, d_mid))
    # One wide output projection (full-K MXU utilization).
    attn = jnp.concatenate(head_outs, axis=-1)                       # (N, H*d_mid)
    attn = jnp.dot(attn, wo_ref[0], preferred_element_type=jnp.float32) + bo_ref[0]

    # residual uses the LN1 output, per the reference forward
    z2 = z1 + attn

    # --- LayerNorm 2 + FeedForward (Linear -> ReLU -> Linear, dropout = identity) ---
    z3 = _layer_norm(z2, ln2_g_ref[0], ln2_b_ref[0])
    h1 = jnp.maximum(
        jnp.dot(z3, w1_ref[0], preferred_element_type=jnp.float32) + b1_ref[0], 0.0)
    ff = jnp.dot(h1, w2_ref[0], preferred_element_type=jnp.float32) + b2_ref[0]
    z_new = z3 + ff

    is_last = l == num_layers - 1

    @pl.when(is_last)
    def _():
        out_ref[...] = _layer_norm(z_new, fin_g_ref[...],
                                   fin_b_ref[...]).astype(out_ref.dtype)

    @pl.when(jnp.logical_not(is_last))
    def _():
        out_ref[...] = z_new.astype(out_ref.dtype)


# ------------------------------ wrappers ------------------------------------
def pack_encoder_params(layer_params, final_g, final_b, num_heads, d_attn, d_mid):
    """Stack per-layer weights along a leading L axis and fuse Q/K/V projections."""
    scale = 1.0 / math.sqrt(d_attn)

    def flat_heads(w):       # (H, D, d) -> (D, H*d)
        H, D, d = w.shape
        return jnp.transpose(w, (1, 0, 2)).reshape(D, H * d)

    def flat_head_bias(b):   # (H, 1, d) -> (1, H*d)
        H, _, d = b.shape
        return jnp.transpose(b, (1, 0, 2)).reshape(1, H * d)

    stack_keys = ["ln1_g", "ln1_b", "wo", "bo", "ln2_g", "ln2_b",
                  "w1", "b1", "w2", "b2"]
    stacks = {k: [] for k in stack_keys}
    wqkv_l, bqkv_l = [], []
    for p in layer_params:
        wq = flat_heads(p["wq"]) * scale          # fold 1/sqrt(d_attn) into Wq, bq
        bq = flat_head_bias(p["bq"]) * scale
        wk = flat_heads(p["wk"])
        bk = flat_head_bias(p["bk"])
        wv = flat_heads(p["wv"])
        bv = flat_head_bias(p["bv"])
        wqkv_l.append(jnp.concatenate([wq, wk, wv], axis=-1))
        bqkv_l.append(jnp.concatenate([bq, bk, bv], axis=-1))
        for k in stack_keys:
            stacks[k].append(p[k])

    packed = {k: jnp.stack(v, axis=0) for k, v in stacks.items()}
    packed["wqkv"] = jnp.stack(wqkv_l, axis=0)
    packed["bqkv"] = jnp.stack(bqkv_l, axis=0)
    packed["fin_g"] = final_g
    packed["fin_b"] = final_b
    return packed


def encoder_forward(z, padding_mask, packed, num_layers, num_heads, d_attn, d_mid):
    B, S, D = z.shape
    N = B * S
    z2d = z.reshape(N, D)                 # fill sublanes; whole batch in one block
    # Precompute the additive key mask bias once (0 valid / -1e30 masked).
    mask_bias = jnp.where(padding_mask.reshape(B, S) > 0.5,
                          jnp.float32(0.0), jnp.float32(-1e30))

    def layer_spec(a):                    # (L, d1, d2): one layer slice per grid step
        return pl.BlockSpec((1,) + a.shape[1:], lambda l: (l, 0, 0))

    def full_spec(a):
        nd = a.ndim
        return pl.BlockSpec(a.shape, lambda l, nd=nd: (0,) * nd)

    weight_keys = ["ln1_g", "ln1_b", "wqkv", "bqkv", "wo", "bo",
                   "ln2_g", "ln2_b", "w1", "b1", "w2", "b2"]
    weights = [packed[k] for k in weight_keys]

    kernel = functools.partial(encoder_stack_kernel, B=B, S=S,
                               num_heads=num_heads, d_attn=d_attn, d_mid=d_mid)

    out2d = pl.pallas_call(
        kernel,
        out_shape=jax.ShapeDtypeStruct((N, D), z.dtype),
        grid=(num_layers,),
        in_specs=([full_spec(z2d), full_spec(mask_bias)]
                  + [layer_spec(w) for w in weights]
                  + [full_spec(packed["fin_g"]), full_spec(packed["fin_b"])]),
        # Constant block index => activations stay resident in VMEM across layers.
        out_specs=pl.BlockSpec((N, D), lambda l: (0, 0)),
        compiler_params=pltpu.CompilerParams(
            dimension_semantics=("arbitrary",)),   # layers are sequential
    )(z2d, mask_bias, *weights, packed["fin_g"], packed["fin_b"])
    # TODO(synk): at production S/D, pad the last dim to a lane-dense (>=128) slab
    # and flash-tile the KV axis to fit v7x's 64 MiB VMEM; shard batch across the
    # 2 v7x TensorCores with a leading "parallel" grid axis.
    return out2d.reshape(B, S, D)


# ------------------------- deterministic params ------------------------------
def make_encoder_params(key, num_layers, num_heads, d_attn, d_z, d_out, d_mid, d_mlp):
    layer_params = []
    for _ in range(num_layers):
        key, *ks = jax.random.split(key, 7)
        p = dict(
            ln1_g=jnp.ones((1, d_z), jnp.float32),
            ln1_b=jnp.zeros((1, d_z), jnp.float32),
            wq=0.05 * jax.random.normal(ks[0], (num_heads, d_z, d_attn), jnp.float32),
            bq=jnp.zeros((num_heads, 1, d_attn), jnp.float32),
            wk=0.05 * jax.random.normal(ks[1], (num_heads, d_z, d_attn), jnp.float32),
            bk=jnp.zeros((num_heads, 1, d_attn), jnp.float32),
            wv=0.05 * jax.random.normal(ks[2], (num_heads, d_z, d_mid), jnp.float32),
            bv=jnp.zeros((num_heads, 1, d_mid), jnp.float32),
            wo=0.05 * jax.random.normal(ks[3], (num_heads * d_mid, d_out), jnp.float32),
            bo=jnp.zeros((1, d_out), jnp.float32),
            ln2_g=jnp.ones((1, d_z), jnp.float32),
            ln2_b=jnp.zeros((1, d_z), jnp.float32),
            w1=0.05 * jax.random.normal(ks[4], (d_z, d_mlp), jnp.float32),
            b1=jnp.zeros((1, d_mlp), jnp.float32),
            w2=0.05 * jax.random.normal(ks[5], (d_mlp, d_z), jnp.float32),
            b2=jnp.zeros((1, d_z), jnp.float32),
        )
        layer_params.append(p)
    final_g = jnp.ones((1, d_z), jnp.float32)
    final_b = jnp.zeros((1, d_z), jnp.float32)
    return layer_params, final_g, final_b


# ---------------------------- pure-JAX reference -----------------------------
def _ref_layer_norm(x, g, b, eps=1e-6):
    mu = jnp.mean(x, axis=-1, keepdims=True)
    var = jnp.mean((x - mu) ** 2, axis=-1, keepdims=True)
    return (x - mu) / jnp.sqrt(var + eps) * g + b


def encoder_ref(z, mask, layer_params, final_g, final_b, num_heads, d_attn):
    key_valid = (mask[:, 0, :] > 0.5)[:, None, :]          # (B, 1, S)
    for p in layer_params:
        z1 = _ref_layer_norm(z, p["ln1_g"], p["ln1_b"])
        heads = []
        for h in range(num_heads):
            q = z1 @ p["wq"][h] + p["bq"][h]
            k = z1 @ p["wk"][h] + p["bk"][h]
            v = z1 @ p["wv"][h] + p["bv"][h]
            s = jnp.einsum("bqd,bkd->bqk", q, k) / math.sqrt(d_attn)
            s = jnp.where(key_valid, s, -1e30)
            a = jax.nn.softmax(s, axis=-1)
            heads.append(jnp.einsum("bqk,bkd->bqd", a, v))
        attn = jnp.concatenate(heads, axis=-1) @ p["wo"] + p["bo"]
        z2 = z1 + attn
        z3 = _ref_layer_norm(z2, p["ln2_g"], p["ln2_b"])
        ff = jnp.maximum(z3 @ p["w1"] + p["b1"], 0.0) @ p["w2"] + p["b2"]
        z = z3 + ff
    return _ref_layer_norm(z, final_g, final_b)


# --------------------------------- main ---------------------------------------
if __name__ == "__main__":
    # Encoder(num_layers, num_heads, d_attn, d_x, d_z, d_out, d_mid, d_mlp, p_dropout)
    num_layers, num_heads = 2, 4
    d_attn, d_mid = 16, 16
    d_x = d_z = d_out = 32        # d_out == d_z required by the residual add
    d_mlp = 64
    B, S = 2, 8

    key = jax.random.PRNGKey(0)
    k_z, k_p = jax.random.split(key)
    z = jax.random.normal(k_z, (B, S, d_z), jnp.float32)
    padding_mask = jnp.ones((B, 1, S), jnp.float32)
    padding_mask = padding_mask.at[1, 0, 6:].set(0.0)      # exercise key masking

    layer_params, final_g, final_b = make_encoder_params(
        k_p, num_layers, num_heads, d_attn, d_z, d_out, d_mid, d_mlp)
    packed = pack_encoder_params(layer_params, final_g, final_b,
                                 num_heads, d_attn, d_mid)

    out = encoder_forward(z, padding_mask, packed, num_layers,
                          num_heads, d_attn, d_mid)
    out = jax.block_until_ready(out)

    ref = encoder_ref(z, padding_mask, layer_params, final_g, final_b,
                      num_heads, d_attn)
    np.testing.assert_allclose(np.asarray(out), np.asarray(ref),
                               atol=1e-4, rtol=1e-4)

    # TODO(synk): dropout (p_dropout) is eval-mode identity; LayerNorm eps fixed at 1e-6.
    print("KERNEL_OK")
</pallas_src>

<mosaic_0001>
module attributes {stable_mosaic.version = 11 : i64} {
  func.func @encoder_stack_kernel(%arg0: i32, %arg1: memref<16x32xf32, #tpu.memory_space<vmem>>, %arg2: memref<2x8xf32, #tpu.memory_space<vmem>>, %arg3: memref<1x1x32xf32, #tpu.memory_space<vmem>>, %arg4: memref<1x1x32xf32, #tpu.memory_space<vmem>>, %arg5: memref<1x32x192xf32, #tpu.memory_space<vmem>>, %arg6: memref<1x1x192xf32, #tpu.memory_space<vmem>>, %arg7: memref<1x64x32xf32, #tpu.memory_space<vmem>>, %arg8: memref<1x1x32xf32, #tpu.memory_space<vmem>>, %arg9: memref<1x1x32xf32, #tpu.memory_space<vmem>>, %arg10: memref<1x1x32xf32, #tpu.memory_space<vmem>>, %arg11: memref<1x32x64xf32, #tpu.memory_space<vmem>>, %arg12: memref<1x1x64xf32, #tpu.memory_space<vmem>>, %arg13: memref<1x64x32xf32, #tpu.memory_space<vmem>>, %arg14: memref<1x1x32xf32, #tpu.memory_space<vmem>>, %arg15: memref<1x32xf32, #tpu.memory_space<vmem>>, %arg16: memref<1x32xf32, #tpu.memory_space<vmem>>, %arg17: memref<16x32xf32, #tpu.memory_space<vmem>>) attributes {dimension_semantics = [#tpu.dimension_semantics<arbitrary>], iteration_bounds = array<i64: 2>, scalar_prefetch = 0 : i64, scratch_operands = 0 : i64, tpu.core_type = #tpu.core_type<tc>, window_params = [{pipeline_mode = #tpu.pipeline_mode<synchronous>, transform_indices = @transform_0, window_bounds = array<i64: 16, 32>}, {pipeline_mode = #tpu.pipeline_mode<synchronous>, transform_indices = @transform_1, window_bounds = array<i64: 2, 8>}, {transform_indices = @transform_2, window_bounds = array<i64: 1, 1, 32>}, {transform_indices = @transform_3, window_bounds = array<i64: 1, 1, 32>}, {transform_indices = @transform_4, window_bounds = array<i64: 1, 32, 192>}, {transform_indices = @transform_5, window_bounds = array<i64: 1, 1, 192>}, {transform_indices = @transform_6, window_bounds = array<i64: 1, 64, 32>}, {transform_indices = @transform_7, window_bounds = array<i64: 1, 1, 32>}, {transform_indices = @transform_8, window_bounds = array<i64: 1, 1, 32>}, {transform_indices = @transform_9, window_bounds = array<i64: 1, 1, 32>}, {transform_indices = @transform_10, window_bounds = array<i64: 1, 32, 64>}, {transform_indices = @transform_11, window_bounds = array<i64: 1, 1, 64>}, {transform_indices = @transform_12, window_bounds = array<i64: 1, 64, 32>}, {transform_indices = @transform_13, window_bounds = array<i64: 1, 1, 32>}, {pipeline_mode = #tpu.pipeline_mode<synchronous>, transform_indices = @transform_14, window_bounds = array<i64: 1, 32>}, {pipeline_mode = #tpu.pipeline_mode<synchronous>, transform_indices = @transform_15, window_bounds = array<i64: 1, 32>}, {pipeline_mode = #tpu.pipeline_mode<synchronous>, transform_indices = @transform_16, window_bounds = array<i64: 16, 32>}]} {
    %c0_i32 = arith.constant 0 : i32
    %0 = arith.cmpi eq, %arg0, %c0_i32 : i32
    %1 = arith.extui %0 : i1 to i32
    %c0_i32_0 = arith.constant 0 : i32
    %2 = arith.cmpi ne, %1, %c0_i32_0 : i32
    scf.if %2 {
      %c0_72 = arith.constant 0 : index
      %c0_73 = arith.constant 0 : index
      %181 = vector.load %arg1[%c0_72, %c0_73] : memref<16x32xf32, #tpu.memory_space<vmem>>, vector<16x32xf32>
      %c0_74 = arith.constant 0 : index
      %c0_75 = arith.constant 0 : index
      %182 = vector.load %arg17[%c0_74, %c0_75] : memref<16x32xf32, #tpu.memory_space<vmem>>, vector<16x32xf32>
      tpu.vector_store %arg17[%c0_74, %c0_75], %181 {strides = array<i32>} : memref<16x32xf32, #tpu.memory_space<vmem>>, vector<16x32xf32>,
    } else {
    }
    %c0 = arith.constant 0 : index
    %c0_1 = arith.constant 0 : index
    %3 = vector.load %arg17[%c0, %c0_1] : memref<16x32xf32, #tpu.memory_space<vmem>>, vector<16x32xf32>
    %c0_2 = arith.constant 0 : index
    %c0_3 = arith.constant 0 : index
    %4 = vector.load %arg2[%c0_2, %c0_3] : memref<2x8xf32, #tpu.memory_space<vmem>>, vector<2x8xf32>
    %5 = vector.shape_cast %4 : vector<2x8xf32> to vector<2x1x8xf32>
    %c0_4 = arith.constant 0 : index
    %c0_5 = arith.constant 0 : index
    %c0_6 = arith.constant 0 : index
    %6 = vector.load %arg3[%c0_4, %c0_5, %c0_6] : memref<1x1x32xf32, #tpu.memory_space<vmem>>, vector<1x1x32xf32>
    %7 = vector.shape_cast %6 : vector<1x1x32xf32> to vector<1x32xf32>
    %c0_7 = arith.constant 0 : index
    %c0_8 = arith.constant 0 : index
    %c0_9 = arith.constant 0 : index
    %8 = vector.load %arg4[%c0_7, %c0_8, %c0_9] : memref<1x1x32xf32, #tpu.memory_space<vmem>>, vector<1x1x32xf32>
    %9 = vector.shape_cast %8 : vector<1x1x32xf32> to vector<1x32xf32>
    %cst = arith.constant dense<0.000000e+00> : vector<16xf32>
    %10 = vector.multi_reduction <add>, %3, %cst [1] : vector<16x32xf32> to vector<16xf32>
    %11 = vector.shape_cast %10 : vector<16xf32> to vector<16x1xf32>
    %cst_10 = arith.constant 3.200000e+01 : f32
    %12 = vector.broadcast %cst_10 : f32 to vector<16x1xf32>
    %13 = arith.divf %11, %12 : vector<16x1xf32>
    %14 = vector.broadcast %13 : vector<16x1xf32> to vector<16x32xf32>
    %15 = arith.subf %3, %14 : vector<16x32xf32>
    %16 = arith.mulf %15, %15 : vector<16x32xf32>
    %cst_11 = arith.constant dense<0.000000e+00> : vector<16xf32>
    %17 = vector.multi_reduction <add>, %16, %cst_11 [1] : vector<16x32xf32> to vector<16xf32>
    %18 = vector.shape_cast %17 : vector<16xf32> to vector<16x1xf32>
    %cst_12 = arith.constant 3.200000e+01 : f32
    %19 = vector.broadcast %cst_12 : f32 to vector<16x1xf32>
    %20 = arith.divf %18, %19 : vector<16x1xf32>
    %21 = vector.broadcast %13 : vector<16x1xf32> to vector<16x32xf32>
    %22 = arith.subf %3, %21 : vector<16x32xf32>
    %cst_13 = arith.constant 9.99999997E-7 : f32
    %23 = vector.broadcast %cst_13 : f32 to vector<16x1xf32>
    %24 = arith.addf %20, %23 : vector<16x1xf32>
    %25 = math.rsqrt %24 : vector<16x1xf32>
    %26 = vector.broadcast %25 : vector<16x1xf32> to vector<16x32xf32>
    %27 = arith.mulf %22, %26 : vector<16x32xf32>
    %28 = vector.broadcast %7 : vector<1x32xf32> to vector<16x32xf32>
    %29 = arith.mulf %27, %28 : vector<16x32xf32>
    %30 = vector.broadcast %9 : vector<1x32xf32> to vector<16x32xf32>
    %31 = arith.addf %29, %30 : vector<16x32xf32>
    %c0_14 = arith.constant 0 : index
    %c0_15 = arith.constant 0 : index
    %c0_16 = arith.constant 0 : index
    %32 = vector.load %arg5[%c0_14, %c0_15, %c0_16] : memref<1x32x192xf32, #tpu.memory_space<vmem>>, vector<1x32x192xf32>
    %33 = vector.shape_cast %32 : vector<1x32x192xf32> to vector<32x192xf32>
    %cst_17 = arith.constant dense<0.000000e+00> : vector<16x192xf32>
    %34 = tpu.matmul %31, %33, %cst_17 {dimension_numbers = #tpu.dot_dimension_numbers<[1], [0], [0], [1], [0, 0, 1, 1], [], []>} : vector<16x32xf32>, vector<32x192xf32>, vector<16x192xf32> -> vector<16x192xf32>
    %c0_18 = arith.constant 0 : index
    %c0_19 = arith.constant 0 : index
    %c0_20 = arith.constant 0 : index
    %35 = vector.load %arg6[%c0_18, %c0_19, %c0_20] : memref<1x1x192xf32, #tpu.memory_space<vmem>>, vector<1x1x192xf32>
    %36 = vector.shape_cast %35 : vector<1x1x192xf32> to vector<1x192xf32>
    %37 = vector.broadcast %36 : vector<1x192xf32> to vector<16x192xf32>
    %38 = arith.addf %34, %37 : vector<16x192xf32>
    %39 = vector.extract_strided_slice %38 {offsets = [0, 0], sizes = [16, 16], strides = [1, 1]} : vector<16x192xf32> to vector<16x16xf32>
    %40 = vector.shape_cast %39 : vector<16x16xf32> to vector<2x8x16xf32>
    %41 = vector.extract_strided_slice %38 {offsets = [0, 64], sizes = [16, 16], strides = [1, 1]} : vector<16x192xf32> to vector<16x16xf32>
    %42 = vector.shape_cast %41 : vector<16x16xf32> to vector<2x8x16xf32>
    %43 = vector.extract_strided_slice %38 {offsets = [0, 128], sizes = [16, 16], strides = [1, 1]} : vector<16x192xf32> to vector<16x16xf32>
    %44 = vector.shape_cast %43 : vector<16x16xf32> to vector<2x8x16xf32>
    "tpu.trace_start"() <{level = 10 : i32, message = "bqd,bkd->bqk"}> : () -> ()
    %cst_21 = arith.constant dense<0.000000e+00> : vector<2x8x8xf32>
    %45 = tpu.matmul %40, %42, %cst_21 {dimension_numbers = #tpu.dot_dimension_numbers<[2], [2], [1], [1], [0, 0, 0, 1, 1, 1], [0], [0]>} : vector<2x8x16xf32>, vector<2x8x16xf32>, vector<2x8x8xf32> -> vector<2x8x8xf32>
    "tpu.trace_stop"() : () -> ()
    %46 = vector.broadcast %5 : vector<2x1x8xf32> to vector<2x8x8xf32>
    %47 = arith.addf %45, %46 : vector<2x8x8xf32>
    %cst_22 = arith.constant dense<0xFF800000> : vector<2x8xf32>
    %48 = vector.multi_reduction <maximumf>, %47, %cst_22 [2] : vector<2x8x8xf32> to vector<2x8xf32>
    %49 = vector.shape_cast %48 : vector<2x8xf32> to vector<2x8x1xf32>
    %50 = vector.broadcast %49 : vector<2x8x1xf32> to vector<2x8x8xf32>
    %51 = arith.subf %47, %50 : vector<2x8x8xf32>
    %52 = math.exp %51 : vector<2x8x8xf32>
    %cst_23 = arith.constant dense<0.000000e+00> : vector<2x8xf32>
    %53 = vector.multi_reduction <add>, %52, %cst_23 [2] : vector<2x8x8xf32> to vector<2x8xf32>
    %54 = vector.shape_cast %53 : vector<2x8xf32> to vector<2x8x1xf32>
    %55 = tpu.reciprocal %54 : vector<2x8x1xf32> -> vector<2x8x1xf32>
    %56 = vector.broadcast %55 : vector<2x8x1xf32> to vector<2x8x8xf32>
    %57 = arith.mulf %52, %56 : vector<2x8x8xf32>
    "tpu.trace_start"() <{level = 10 : i32, message = "bqk,bkd->bqd"}> : () -> ()
    %cst_24 = arith.constant dense<0.000000e+00> : vector<2x8x16xf32>
    %58 = tpu.matmul %57, %44, %cst_24 {dimension_numbers = #tpu.dot_dimension_numbers<[2], [1], [1], [2], [0, 0, 0, 1, 1, 2], [0], [0]>} : vector<2x8x8xf32>, vector<2x8x16xf32>, vector<2x8x16xf32> -> vector<2x8x16xf32>
    "tpu.trace_stop"() : () -> ()
    %59 = vector.shape_cast %58 : vector<2x8x16xf32> to vector<16x16xf32>
    %60 = vector.extract_strided_slice %38 {offsets = [0, 16], sizes = [16, 16], strides = [1, 1]} : vector<16x192xf32> to vector<16x16xf32>
    %61 = vector.shape_cast %60 : vector<16x16xf32> to vector<2x8x16xf32>
    %62 = vector.extract_strided_slice %38 {offsets = [0, 80], sizes = [16, 16], strides = [1, 1]} : vector<16x192xf32> to vector<16x16xf32>
    %63 = vector.shape_cast %62 : vector<16x16xf32> to vector<2x8x16xf32>
    %64 = vector.extract_strided_slice %38 {offsets = [0, 144], sizes = [16, 16], strides = [1, 1]} : vector<16x192xf32> to vector<16x16xf32>
    %65 = vector.shape_cast %64 : vector<16x16xf32> to vector<2x8x16xf32>
    "tpu.trace_start"() <{level = 10 : i32, message = "bqd,bkd->bqk"}> : () -> ()
    %cst_25 = arith.constant dense<0.000000e+00> : vector<2x8x8xf32>
    %66 = tpu.matmul %61, %63, %cst_25 {dimension_numbers = #tpu.dot_dimension_numbers<[2], [2], [1], [1], [0, 0, 0, 1, 1, 1], [0], [0]>} : vector<2x8x16xf32>, vector<2x8x16xf32>, vector<2x8x8xf32> -> vector<2x8x8xf32>
    "tpu.trace_stop"() : () -> ()
    %67 = vector.broadcast %5 : vector<2x1x8xf32> to vector<2x8x8xf32>
    %68 = arith.addf %66, %67 : vector<2x8x8xf32>
    %cst_26 = arith.constant dense<0xFF800000> : vector<2x8xf32>
    %69 = vector.multi_reduction <maximumf>, %68, %cst_26 [2] : vector<2x8x8xf32> to vector<2x8xf32>
    %70 = vector.shape_cast %69 : vector<2x8xf32> to vector<2x8x1xf32>
    %71 = vector.broadcast %70 : vector<2x8x1xf32> to vector<2x8x8xf32>
    %72 = arith.subf %68, %71 : vector<2x8x8xf32>
    %73 = math.exp %72 : vector<2x8x8xf32>
    %cst_27 = arith.constant dense<0.000000e+00> : vector<2x8xf32>
    %74 = vector.multi_reduction <add>, %73, %cst_27 [2] : vector<2x8x8xf32> to vector<2x8xf32>
    %75 = vector.shape_cast %74 : vector<2x8xf32> to vector<2x8x1xf32>
    %76 = tpu.reciprocal %75 : vector<2x8x1xf32> -> vector<2x8x1xf32>
    %77 = vector.broadcast %76 : vector<2x8x1xf32> to vector<2x8x8xf32>
    %78 = arith.mulf %73, %77 : vector<2x8x8xf32>
    "tpu.trace_start"() <{level = 10 : i32, message = "bqk,bkd->bqd"}> : () -> ()
    %cst_28 = arith.constant dense<0.000000e+00> : vector<2x8x16xf32>
    %79 = tpu.matmul %78, %65, %cst_28 {dimension_numbers = #tpu.dot_dimension_numbers<[2], [1], [1], [2], [0, 0, 0, 1, 1, 2], [0], [0]>} : vector<2x8x8xf32>, vector<2x8x16xf32>, vector<2x8x16xf32> -> vector<2x8x16xf32>
    "tpu.trace_stop"() : () -> ()
    %80 = vector.shape_cast %79 : vector<2x8x16xf32> to vector<16x16xf32>
    %81 = vector.extract_strided_slice %38 {offsets = [0, 32], sizes = [16, 16], strides = [1, 1]} : vector<16x192xf32> to vector<16x16xf32>
    %82 = vector.shape_cast %81 : vector<16x16xf32> to vector<2x8x16xf32>
    %83 = vector.extract_strided_slice %38 {offsets = [0, 96], sizes = [16, 16], strides = [1, 1]} : vector<16x192xf32> to vector<16x16xf32>
    %84 = vector.shape_cast %83 : vector<16x16xf32> to vector<2x8x16xf32>
    %85 = vector.extract_strided_slice %38 {offsets = [0, 160], sizes = [16, 16], strides = [1, 1]} : vector<16x192xf32> to vector<16x16xf32>
    %86 = vector.shape_cast %85 : vector<16x16xf32> to vector<2x8x16xf32>
    "tpu.trace_start"() <{level = 10 : i32, message = "bqd,bkd->bqk"}> : () -> ()
    %cst_29 = arith.constant dense<0.000000e+00> : vector<2x8x8xf32>
    %87 = tpu.matmul %82, %84, %cst_29 {dimension_numbers = #tpu.dot_dimension_numbers<[2], [2], [1], [1], [0, 0, 0, 1, 1, 1], [0], [0]>} : vector<2x8x16xf32>, vector<2x8x16xf32>, vector<2x8x8xf32> -> vector<2x8x8xf32>
    "tpu.trace_stop"() : () -> ()
    %88 = vector.broadcast %5 : vector<2x1x8xf32> to vector<2x8x8xf32>
    %89 = arith.addf %87, %88 : vector<2x8x8xf32>
    %cst_30 = arith.constant dense<0xFF800000> : vector<2x8xf32>
    %90 = vector.multi_reduction <maximumf>, %89, %cst_30 [2] : vector<2x8x8xf32> to vector<2x8xf32>
    %91 = vector.shape_cast %90 : vector<2x8xf32> to vector<2x8x1xf32>
    %92 = vector.broadcast %91 : vector<2x8x1xf32> to vector<2x8x8xf32>
    %93 = arith.subf %89, %92 : vector<2x8x8xf32>
    %94 = math.exp %93 : vector<2x8x8xf32>
    %cst_31 = arith.constant dense<0.000000e+00> : vector<2x8xf32>
    %95 = vector.multi_reduction <add>, %94, %cst_31 [2] : vector<2x8x8xf32> to vector<2x8xf32>
    %96 = vector.shape_cast %95 : vector<2x8xf32> to vector<2x8x1xf32>
    %97 = tpu.reciprocal %96 : vector<2x8x1xf32> -> vector<2x8x1xf32>
    %98 = vector.broadcast %97 : vector<2x8x1xf32> to vector<2x8x8xf32>
    %99 = arith.mulf %94, %98 : vector<2x8x8xf32>
    "tpu.trace_start"() <{level = 10 : i32, message = "bqk,bkd->bqd"}> : () -> ()
    %cst_32 = arith.constant dense<0.000000e+00> : vector<2x8x16xf32>
    %100 = tpu.matmul %99, %86, %cst_32 {dimension_numbers = #tpu.dot_dimension_numbers<[2], [1], [1], [2], [0, 0, 0, 1, 1, 2], [0], [0]>} : vector<2x8x8xf32>, vector<2x8x16xf32>, vector<2x8x16xf32> -> vector<2x8x16xf32>
    "tpu.trace_stop"() : () -> ()
    %101 = vector.shape_cast %100 : vector<2x8x16xf32> to vector<16x16xf32>
    %102 = vector.extract_strided_slice %38 {offsets = [0, 48], sizes = [16, 16], strides = [1, 1]} : vector<16x192xf32> to vector<16x16xf32>
    %103 = vector.shape_cast %102 : vector<16x16xf32> to vector<2x8x16xf32>
    %104 = vector.extract_strided_slice %38 {offsets = [0, 112], sizes = [16, 16], strides = [1, 1]} : vector<16x192xf32> to vector<16x16xf32>
    %105 = vector.shape_cast %104 : vector<16x16xf32> to vector<2x8x16xf32>
    %106 = vector.extract_strided_slice %38 {offsets = [0, 176], sizes = [16, 16], strides = [1, 1]} : vector<16x192xf32> to vector<16x16xf32>
    %107 = vector.shape_cast %106 : vector<16x16xf32> to vector<2x8x16xf32>
    "tpu.trace_start"() <{level = 10 : i32, message = "bqd,bkd->bqk"}> : () -> ()
    %cst_33 = arith.constant dense<0.000000e+00> : vector<2x8x8xf32>
    %108 = tpu.matmul %103, %105, %cst_33 {dimension_numbers = #tpu.dot_dimension_numbers<[2], [2], [1], [1], [0, 0, 0, 1, 1, 1], [0], [0]>} : vector<2x8x16xf32>, vector<2x8x16xf32>, vector<2x8x8xf32> -> vector<2x8x8xf32>
    "tpu.trace_stop"() : () -> ()
    %109 = vector.broadcast %5 : vector<2x1x8xf32> to vector<2x8x8xf32>
    %110 = arith.addf %108, %109 : vector<2x8x8xf32>
    %cst_34 = arith.constant dense<0xFF800000> : vector<2x8xf32>
    %111 = vector.multi_reduction <maximumf>, %110, %cst_34 [2] : vector<2x8x8xf32> to vector<2x8xf32>
    %112 = vector.shape_cast %111 : vector<2x8xf32> to vector<2x8x1xf32>
    %113 = vector.broadcast %112 : vector<2x8x1xf32> to vector<2x8x8xf32>
    %114 = arith.subf %110, %113 : vector<2x8x8xf32>
    %115 = math.exp %114 : vector<2x8x8xf32>
    %cst_35 = arith.constant dense<0.000000e+00> : vector<2x8xf32>
    %116 = vector.multi_reduction <add>, %115, %cst_35 [2] : vector<2x8x8xf32> to vector<2x8xf32>
    %117 = vector.shape_cast %116 : vector<2x8xf32> to vector<2x8x1xf32>
    %118 = tpu.reciprocal %117 : vector<2x8x1xf32> -> vector<2x8x1xf32>
    %119 = vector.broadcast %118 : vector<2x8x1xf32> to vector<2x8x8xf32>
    %120 = arith.mulf %115, %119 : vector<2x8x8xf32>
    "tpu.trace_start"() <{level = 10 : i32, message = "bqk,bkd->bqd"}> : () -> ()
    %cst_36 = arith.constant dense<0.000000e+00> : vector<2x8x16xf32>
    %121 = tpu.matmul %120, %107, %cst_36 {dimension_numbers = #tpu.dot_dimension_numbers<[2], [1], [1], [2], [0, 0, 0, 1, 1, 2], [0], [0]>} : vector<2x8x8xf32>, vector<2x8x16xf32>, vector<2x8x16xf32> -> vector<2x8x16xf32>
    "tpu.trace_stop"() : () -> ()
    %122 = vector.shape_cast %121 : vector<2x8x16xf32> to vector<16x16xf32>
    %123 = tpu.concatenate %59, %80, %101, %122 in 1 : vector<16x16xf32>, vector<16x16xf32>, vector<16x16xf32>, vector<16x16xf32> -> vector<16x64xf32>
    %c0_37 = arith.constant 0 : index
    %c0_38 = arith.constant 0 : index
    %c0_39 = arith.constant 0 : index
    %124 = vector.load %arg7[%c0_37, %c0_38, %c0_39] : memref<1x64x32xf32, #tpu.memory_space<vmem>>, vector<1x64x32xf32>
    %125 = vector.shape_cast %124 : vector<1x64x32xf32> to vector<64x32xf32>
    %cst_40 = arith.constant dense<0.000000e+00> : vector<16x32xf32>
    %126 = tpu.matmul %123, %125, %cst_40 {dimension_numbers = #tpu.dot_dimension_numbers<[1], [0], [0], [1], [0, 0, 1, 1], [], []>} : vector<16x64xf32>, vector<64x32xf32>, vector<16x32xf32> -> vector<16x32xf32>
    %c0_41 = arith.constant 0 : index
    %c0_42 = arith.constant 0 : index
    %c0_43 = arith.constant 0 : index
    %127 = vector.load %arg8[%c0_41, %c0_42, %c0_43] : memref<1x1x32xf32, #tpu.memory_space<vmem>>, vector<1x1x32xf32>
    %128 = vector.shape_cast %127 : vector<1x1x32xf32> to vector<1x32xf32>
    %129 = vector.broadcast %128 : vector<1x32xf32> to vector<16x32xf32>
    %130 = arith.addf %126, %129 : vector<16x32xf32>
    %131 = arith.addf %31, %130 : vector<16x32xf32>
    %c0_44 = arith.constant 0 : index
    %c0_45 = arith.constant 0 : index
    %c0_46 = arith.constant 0 : index
    %132 = vector.load %arg9[%c0_44, %c0_45, %c0_46] : memref<1x1x32xf32, #tpu.memory_space<vmem>>, vector<1x1x32xf32>
    %133 = vector.shape_cast %132 : vector<1x1x32xf32> to vector<1x32xf32>
    %c0_47 = arith.constant 0 : index
    %c0_48 = arith.constant 0 : index
    %c0_49 = arith.constant 0 : index
    %134 = vector.load %arg10[%c0_47, %c0_48, %c0_49] : memref<1x1x32xf32, #tpu.memory_space<vmem>>, vector<1x1x32xf32>
    %135 = vector.shape_cast %134 : vector<1x1x32xf32> to vector<1x32xf32>
    %cst_50 = arith.constant dense<0.000000e+00> : vector<16xf32>
    %136 = vector.multi_reduction <add>, %131, %cst_50 [1] : vector<16x32xf32> to vector<16xf32>
    %137 = vector.shape_cast %136 : vector<16xf32> to vector<16x1xf32>
    %cst_51 = arith.constant 3.200000e+01 : f32
    %138 = vector.broadcast %cst_51 : f32 to vector<16x1xf32>
    %139 = arith.divf %137, %138 : vector<16x1xf32>
    %140 = vector.broadcast %139 : vector<16x1xf32> to vector<16x32xf32>
    %141 = arith.subf %131, %140 : vector<16x32xf32>
    %142 = arith.mulf %141, %141 : vector<16x32xf32>
    %cst_52 = arith.constant dense<0.000000e+00> : vector<16xf32>
    %143 = vector.multi_reduction <add>, %142, %cst_52 [1] : vector<16x32xf32> to vector<16xf32>
    %144 = vector.shape_cast %143 : vector<16xf32> to vector<16x1xf32>
    %cst_53 = arith.constant 3.200000e+01 : f32
    %145 = vector.broadcast %cst_53 : f32 to vector<16x1xf32>
    %146 = arith.divf %144, %145 : vector<16x1xf32>
    %147 = vector.broadcast %139 : vector<16x1xf32> to vector<16x32xf32>
    %148 = arith.subf %131, %147 : vector<16x32xf32>
    %cst_54 = arith.constant 9.99999997E-7 : f32
    %149 = vector.broadcast %cst_54 : f32 to vector<16x1xf32>
    %150 = arith.addf %146, %149 : vector<16x1xf32>
    %151 = math.rsqrt %150 : vector<16x1xf32>
    %152 = vector.broadcast %151 : vector<16x1xf32> to vector<16x32xf32>
    %153 = arith.mulf %148, %152 : vector<16x32xf32>
    %154 = vector.broadcast %133 : vector<1x32xf32> to vector<16x32xf32>
    %155 = arith.mulf %153, %154 : vector<16x32xf32>
    %156 = vector.broadcast %135 : vector<1x32xf32> to vector<16x32xf32>
    %157 = arith.addf %155, %156 : vector<16x32xf32>
    %c0_55 = arith.constant 0 : index
    %c0_56 = arith.constant 0 : index
    %c0_57 = arith.constant 0 : index
    %158 = vector.load %arg11[%c0_55, %c0_56, %c0_57] : memref<1x32x64xf32, #tpu.memory_space<vmem>>, vector<1x32x64xf32>
    %159 = vector.shape_cast %158 : vector<1x32x64xf32> to vector<32x64xf32>
    %cst_58 = arith.constant dense<0.000000e+00> : vector<16x64xf32>
    %160 = tpu.matmul %157, %159, %cst_58 {dimension_numbers = #tpu.dot_dimension_numbers<[1], [0], [0], [1], [0, 0, 1, 1], [], []>} : vector<16x32xf32>, vector<32x64xf32>, vector<16x64xf32> -> vector<16x64xf32>
    %c0_59 = arith.constant 0 : index
    %c0_60 = arith.constant 0 : index
    %c0_61 = arith.constant 0 : index
    %161 = vector.load %arg12[%c0_59, %c0_60, %c0_61] : memref<1x1x64xf32, #tpu.memory_space<vmem>>, vector<1x1x64xf32>
    %162 = vector.shape_cast %161 : vector<1x1x64xf32> to vector<1x64xf32>
    %163 = vector.broadcast %162 : vector<1x64xf32> to vector<16x64xf32>
    %164 = arith.addf %160, %163 : vector<16x64xf32>
    %cst_62 = arith.constant 0.000000e+00 : f32
    %165 = vector.broadcast %cst_62 : f32 to vector<16x64xf32>
    %166 = arith.maximumf %164, %165 : vector<16x64xf32>
    %c0_63 = arith.constant 0 : index
    %c0_64 = arith.constant 0 : index
    %c0_65 = arith.constant 0 : index
    %167 = vector.load %arg13[%c0_63, %c0_64, %c0_65] : memref<1x64x32xf32, #tpu.memory_space<vmem>>, vector<1x64x32xf32>
    %168 = vector.shape_cast %167 : vector<1x64x32xf32> to vector<64x32xf32>
    %cst_66 = arith.constant dense<0.000000e+00> : vector<16x32xf32>
    %169 = tpu.matmul %166, %168, %cst_66 {dimension_numbers = #tpu.dot_dimension_numbers<[1], [0], [0], [1], [0, 0, 1, 1], [], []>} : vector<16x64xf32>, vector<64x32xf32>, vector<16x32xf32> -> vector<16x32xf32>
    %c0_67 = arith.constant 0 : index
    %c0_68 = arith.constant 0 : index
    %c0_69 = arith.constant 0 : index
    %170 = vector.load %arg14[%c0_67, %c0_68, %c0_69] : memref<1x1x32xf32, #tpu.memory_space<vmem>>, vector<1x1x32xf32>
    %171 = vector.shape_cast %170 : vector<1x1x32xf32> to vector<1x32xf32>
    %172 = vector.broadcast %171 : vector<1x32xf32> to vector<16x32xf32>
    %173 = arith.addf %169, %172 : vector<16x32xf32>
    %174 = arith.addf %157, %173 : vector<16x32xf32>
    %c1_i32 = arith.constant 1 : i32
    %175 = arith.cmpi eq, %arg0, %c1_i32 : i32
    %176 = arith.extui %175 : i1 to i32
    %c0_i32_70 = arith.constant 0 : i32
    %177 = arith.cmpi ne, %176, %c0_i32_70 : i32
    scf.if %177 {
      %c0_72 = arith.constant 0 : index
      %c0_73 = arith.constant 0 : index
      %181 = vector.load %arg15[%c0_72, %c0_73] : memref<1x32xf32, #tpu.memory_space<vmem>>, vector<1x32xf32>
      %c0_74 = arith.constant 0 : index
      %c0_75 = arith.constant 0 : index
      %182 = vector.load %arg16[%c0_74, %c0_75] : memref<1x32xf32, #tpu.memory_space<vmem>>, vector<1x32xf32>
      %cst_76 = arith.constant dense<0.000000e+00> : vector<16xf32>
      %183 = vector.multi_reduction <add>, %174, %cst_76 [1] : vector<16x32xf32> to vector<16xf32>
      %184 = vector.shape_cast %183 : vector<16xf32> to vector<16x1xf32>
      %cst_77 = arith.constant 3.200000e+01 : f32
      %185 = vector.broadcast %cst_77 : f32 to vector<16x1xf32>
      %186 = arith.divf %184, %185 : vector<16x1xf32>
      %187 = vector.broadcast %186 : vector<16x1xf32> to vector<16x32xf32>
      %188 = arith.subf %174, %187 : vector<16x32xf32>
      %189 = arith.mulf %188, %188 : vector<16x32xf32>
      %cst_78 = arith.constant dense<0.000000e+00> : vector<16xf32>
      %190 = vector.multi_reduction <add>, %189, %cst_78 [1] : vector<16x32xf32> to vector<16xf32>
      %191 = vector.shape_cast %190 : vector<16xf32> to vector<16x1xf32>
      %cst_79 = arith.constant 3.200000e+01 : f32
      %192 = vector.broadcast %cst_79 : f32 to vector<16x1xf32>
      %193 = arith.divf %191, %192 : vector<16x1xf32>
      %194 = vector.broadcast %186 : vector<16x1xf32> to vector<16x32xf32>
      %195 = arith.subf %174, %194 : vector<16x32xf32>
      %cst_80 = arith.constant 9.99999997E-7 : f32
      %196 = vector.broadcast %cst_80 : f32 to vector<16x1xf32>
      %197 = arith.addf %193, %196 : vector<16x1xf32>
      %198 = math.rsqrt %197 : vector<16x1xf32>
      %199 = vector.broadcast %198 : vector<16x1xf32> to vector<16x32xf32>
      %200 = arith.mulf %195, %199 : vector<16x32xf32>
      %201 = vector.broadcast %181 : vector<1x32xf32> to vector<16x32xf32>
      %202 = arith.mulf %200, %201 : vector<16x32xf32>
      %203 = vector.broadcast %182 : vector<1x32xf32> to vector<16x32xf32>
      %204 = arith.addf %202, %203 : vector<16x32xf32>
      %c0_81 = arith.constant 0 : index
      %c0_82 = arith.constant 0 : index
      %205 = vector.load %arg17[%c0_81, %c0_82] : memref<16x32xf32, #tpu.memory_space<vmem>>, vector<16x32xf32>
      tpu.vector_store %arg17[%c0_81, %c0_82], %204 {strides = array<i32>} : memref<16x32xf32, #tpu.memory_space<vmem>>, vector<16x32xf32>,
    } else {
    }
    %true = arith.constant true
    %178 = arith.xori %175, %true : i1
    %179 = arith.extui %178 : i1 to i32
    %c0_i32_71 = arith.constant 0 : i32
    %180 = arith.cmpi ne, %179, %c0_i32_71 : i32
    scf.if %180 {
      %c0_72 = arith.constant 0 : index
      %c0_73 = arith.constant 0 : index
      %181 = vector.load %arg17[%c0_72, %c0_73] : memref<16x32xf32, #tpu.memory_space<vmem>>, vector<16x32xf32>
      tpu.vector_store %arg17[%c0_72, %c0_73], %174 {strides = array<i32>} : memref<16x32xf32, #tpu.memory_space<vmem>>, vector<16x32xf32>,
    } else {
    }
    return
  }
  func.func @transform_0(%arg0: i32) -> (i32, i32) {
    %c0_i32 = arith.constant 0 : i32
    %c0_i32_0 = arith.constant 0 : i32
    %c0_i32_1 = arith.constant 0 : i32
    return %c0_i32, %c0_i32_0 : i32, i32
  }
  func.func @transform_1(%arg0: i32) -> (i32, i32) {
    %c0_i32 = arith.constant 0 : i32
    %c0_i32_0 = arith.constant 0 : i32
    %c0_i32_1 = arith.constant 0 : i32
    return %c0_i32, %c0_i32_0 : i32, i32
  }
  func.func @transform_2(%arg0: i32) -> (i32, i32, i32) {
    %c0_i32 = arith.constant 0 : i32
    %c0_i32_0 = arith.constant 0 : i32
    %c0_i32_1 = arith.constant 0 : i32
    return %arg0, %c0_i32, %c0_i32_0 : i32, i32, i32
  }
  func.func @transform_3(%arg0: i32) -> (i32, i32, i32) {
    %c0_i32 = arith.constant 0 : i32
    %c0_i32_0 = arith.constant 0 : i32
    %c0_i32_1 = arith.constant 0 : i32
    return %arg0, %c0_i32, %c0_i32_0 : i32, i32, i32
  }
  func.func @transform_4(%arg0: i32) -> (i32, i32, i32) {
    %c0_i32 = arith.constant 0 : i32
    %c0_i32_0 = arith.constant 0 : i32
    %c0_i32_1 = arith.constant 0 : i32
    return %arg0, %c0_i32, %c0_i32_0 : i32, i32, i32
  }
  func.func @transform_5(%arg0: i32) -> (i32, i32, i32) {
    %c0_i32 = arith.constant 0 : i32
    %c0_i32_0 = arith.constant 0 : i32
    %c0_i32_1 = arith.constant 0 : i32
    return %arg0, %c0_i32, %c0_i32_0 : i32, i32, i32
  }
  func.func @transform_6(%arg0: i32) -> (i32, i32, i32) {
    %c0_i32 = arith.constant 0 : i32
    %c0_i32_0 = arith.constant 0 : i32
    %c0_i32_1 = arith.constant 0 : i32
    return %arg0, %c0_i32, %c0_i32_0 : i32, i32, i32
  }
  func.func @transform_7(%arg0: i32) -> (i32, i32, i32) {
    %c0_i32 = arith.constant 0 : i32
    %c0_i32_0 = arith.constant 0 : i32
    %c0_i32_1 = arith.constant 0 : i32
    return %arg0, %c0_i32, %c0_i32_0 : i32, i32, i32
  }
  func.func @transform_8(%arg0: i32) -> (i32, i32, i32) {
    %c0_i32 = arith.constant 0 : i32
    %c0_i32_0 = arith.constant 0 : i32
    %c0_i32_1 = arith.constant 0 : i32
    return %arg0, %c0_i32, %c0_i32_0 : i32, i32, i32
  }
  func.func @transform_9(%arg0: i32) -> (i32, i32, i32) {
    %c0_i32 = arith.constant 0 : i32
    %c0_i32_0 = arith.constant 0 : i32
    %c0_i32_1 = arith.constant 0 : i32
    return %arg0, %c0_i32, %c0_i32_0 : i32, i32, i32
  }
  func.func @transform_10(%arg0: i32) -> (i32, i32, i32) {
    %c0_i32 = arith.constant 0 : i32
    %c0_i32_0 = arith.constant 0 : i32
    %c0_i32_1 = arith.constant 0 : i32
    return %arg0, %c0_i32, %c0_i32_0 : i32, i32, i32
  }
  func.func @transform_11(%arg0: i32) -> (i32, i32, i32) {
    %c0_i32 = arith.constant 0 : i32
    %c0_i32_0 = arith.constant 0 : i32
    %c0_i32_1 = arith.constant 0 : i32
    return %arg0, %c0_i32, %c0_i32_0 : i32, i32, i32
  }
  func.func @transform_12(%arg0: i32) -> (i32, i32, i32) {
    %c0_i32 = arith.constant 0 : i32
    %c0_i32_0 = arith.constant 0 : i32
    %c0_i32_1 = arith.constant 0 : i32
    return %arg0, %c0_i32, %c0_i32_0 : i32, i32, i32
  }
  func.func @transform_13(%arg0: i32) -> (i32, i32, i32) {
    %c0_i32 = arith.constant 0 : i32
    %c0_i32_0 = arith.constant 0 : i32
    %c0_i32_1 = arith.constant 0 : i32
    return %arg0, %c0_i32, %c0_i32_0 : i32, i32, i32
  }
  func.func @transform_14(%arg0: i32) -> (i32, i32) {
    %c0_i32 = arith.constant 0 : i32
    %c0_i32_0 = arith.constant 0 : i32
    %c0_i32_1 = arith.constant 0 : i32
    return %c0_i32, %c0_i32_0 : i32, i32
  }
  func.func @transform_15(%arg0: i32) -> (i32, i32) {
    %c0_i32 = arith.constant 0 : i32
    %c0_i32_0 = arith.constant 0 : i32
    %c0_i32_1 = arith.constant 0 : i32
    return %c0_i32, %c0_i32_0 : i32, i32
  }
  func.func @transform_16(%arg0: i32) -> (i32, i32) {
    %c0_i32 = arith.constant 0 : i32
    %c0_i32_0 = arith.constant 0 : i32
    %c0_i32_1 = arith.constant 0 : i32
    return %c0_i32, %c0_i32_0 : i32, i32
  }
}

</mosaic_0001>

<llo_original>
// kernel: tpu_custom_call.1
$region0: #{tpu_custom_call.1}
  #allocation0 [shape = 'u32[]', space=smem, size = 0x4, offset = 0x4, fixed_abs, tag = 'smem constant byte address 0x4 - core index']
  #allocation1 [shape = 'u32[144,128]{1,0:T(1,128)}', space=vmem, size = 0x12000, scoped, tag = 'internal scratch']
  %s0 = inlined_call_operand.vmem [shape: f32[16,32], index: 0, kind: input, shape index: {}]
  %s1 = inlined_call_operand.vmem [shape: f32[2,8], index: 1, kind: input, shape index: {}]
  %s2 = inlined_call_operand.vmem [shape: f32[2,1,32], index: 2, kind: input, shape index: {}]
  %s3 = inlined_call_operand.vmem [shape: f32[2,1,32], index: 3, kind: input, shape index: {}]
  %s4 = inlined_call_operand.vmem [shape: f32[2,32,192], index: 4, kind: input, shape index: {}]
  %s5 = inlined_call_operand.vmem [shape: f32[2,1,192], index: 5, kind: input, shape index: {}]
  %s6 = inlined_call_operand.vmem [shape: f32[2,64,32], index: 6, kind: input, shape index: {}]
  %s7 = inlined_call_operand.vmem [shape: f32[2,1,32], index: 7, kind: input, shape index: {}]
  %s8 = inlined_call_operand.vmem [shape: f32[2,1,32], index: 8, kind: input, shape index: {}]
  %s9 = inlined_call_operand.vmem [shape: f32[2,1,32], index: 9, kind: input, shape index: {}]
  %s10 = inlined_call_operand.vmem [shape: f32[2,32,64], index: 10, kind: input, shape index: {}]
  %s11 = inlined_call_operand.vmem [shape: f32[2,1,64], index: 11, kind: input, shape index: {}]
  %s12 = inlined_call_operand.vmem [shape: f32[2,64,32], index: 12, kind: input, shape index: {}]
  %s13 = inlined_call_operand.vmem [shape: f32[2,1,32], index: 13, kind: input, shape index: {}]
  %s14 = inlined_call_operand.vmem [shape: f32[1,32], index: 14, kind: input, shape index: {}]
  %s15 = inlined_call_operand.vmem [shape: f32[1,32], index: 15, kind: input, shape index: {}]
  %s16 = inlined_call_operand.hbm [shape: f32[16,32], index: 16, kind: output, shape index: {}]
  %s17 = sld [smem:[#allocation0]]
  $region109: #{tpu_custom_call.1} parent=0
    _
  %s19 = ssub.s32 1, %s17
  %s20 = scalar_select 0, %s19, %s17
  $region1: #{tpu_custom_call.1} parent=0
    #allocation2 [shape = 'u8[8192]{0}', space=vmem, size = 0x2000, scoped, tag = 'output window, operand 0, single buffered']
    #allocation3 [shape = 's32[2]{0}', space=sflag, size = 0x8, scoped, tag = 'scoped memory for tpu_custom_call.1']
    %21 = vsyncpa [#allocation3], 0
    loop: start=0, step=1, limit=4
    $region2: #{tpu_custom_call.1} parent=1 // loop_pre_header
      _
    $region3: #{tpu_custom_call.1} parent=1 // loop_header
      %s23 = sphi 0, %s27
      %p24 = scmp.ge.s32.totalorder %s23, 4
      %s31 = sphi 0, %s31
      %s33 = sphi 0, %s31
      %s34 = sphi 0, %s33
      %s48 = sphi 0, %s34
      %s52 = sphi 0, %s52
      %s54 = sphi 0, %s52
      %s55 = sphi 0, %s54
      %s69 = sphi 0, %s55
      %s75 = sphi 0, %s77
      %s78 = sphi 0, %s75
      %s79 = sphi 0, %s78
      %s95 = sphi 0, %s79
      %s101 = sphi 0, %s103
      %s104 = sphi 0, %s101
      %s105 = sphi 0, %s104
      %s121 = sphi 0, %s105
      %s127 = sphi 0, %s129
      %s130 = sphi 0, %s127
      %s131 = sphi 0, %s130
      %s147 = sphi 0, %s131
      %s153 = sphi 0, %s155
      %s156 = sphi 0, %s153
      %s157 = sphi 0, %s156
      %s173 = sphi 0, %s157
      %s179 = sphi 0, %s181
      %s182 = sphi 0, %s179
      %s183 = sphi 0, %s182
      %s199 = sphi 0, %s183
      %s205 = sphi 0, %s207
      %s208 = sphi 0, %s205
      %s209 = sphi 0, %s208
      %s225 = sphi 0, %s209
      %s231 = sphi 0, %s233
      %s234 = sphi 0, %s231
      %s235 = sphi 0, %s234
      %s251 = sphi 0, %s235
      %s257 = sphi 0, %s259
      %s260 = sphi 0, %s257
      %s261 = sphi 0, %s260
      %s277 = sphi 0, %s261
      %s283 = sphi 0, %s285
      %s286 = sphi 0, %s283
      %s287 = sphi 0, %s286
      %s303 = sphi 0, %s287
      %s309 = sphi 0, %s311
      %s312 = sphi 0, %s309
      %s313 = sphi 0, %s312
      %s329 = sphi 0, %s313
      %s335 = sphi 0, %s337
      %s338 = sphi 0, %s335
      %s339 = sphi 0, %s338
      %s355 = sphi 0, %s339
      %s361 = sphi 0, %s363
      %s364 = sphi 0, %s361
      %s365 = sphi 0, %s364
      %s381 = sphi 0, %s365
      %s385 = sphi 0, %s385
      %s387 = sphi 0, %s385
      %s388 = sphi 0, %s387
      %s402 = sphi 0, %s388
      %s406 = sphi 0, %s406
      %s408 = sphi 0, %s406
      %s409 = sphi 0, %s408
      %s423 = sphi 0, %s409
      %s427 = sphi 0, %s427
      %s429 = sphi 0, %s427
      %s430 = sphi 0, %s429
      %s444 = sphi 0, %s430
    $region4: #{tpu_custom_call.1} parent=1 // loop_header_branch
      %26 = sbr.rel (%p24) target = $region8
    $region5: #{tpu_custom_call.1} parent=1 // loop_body
      %s28 = ssub.s32 %s23, 1
      %s29 = ssub.s32 %s23, 2
      %s30 = sadd.s32 %s23, 1
      %s32 = sadd.s32 %s31, 1
      %p35 = scmp.eq.s32.totalorder %s23, 1
      %p36 = scmp.ne.s32.totalorder %s31, %s33
      %p37 = scmp.eq.s32.totalorder %s23, 0
      %p38 = por %p36, %p37
      %p39 = scmp.ne.s32.totalorder %s31, %s33
      %p40 = scmp.eq.s32.totalorder %s28, 1
      %p41 = por %p39, %p40
      %p42 = scmp.ne.s32.totalorder %s33, %s34
      %p43 = scmp.eq.s32.totalorder %s28, 0
      %p44 = por %p42, %p43
      %p45 = scmp.ne.s32.totalorder %s33, %s34
      %p46 = scmp.eq.s32.totalorder %s29, 1
      %p47 = por %p45, %p46
      %p49 = scmp.ne.s32.totalorder %s34, %s48
      %p50 = scmp.eq.s32.totalorder %s29, 0
      %p51 = por %p49, %p50
      %s53 = sadd.s32 %s52, 1
      %p56 = scmp.eq.s32.totalorder %s23, 1
      %p57 = scmp.ne.s32.totalorder %s52, %s54
      %p58 = scmp.eq.s32.totalorder %s23, 0
      %p59 = por %p57, %p58
      %p60 = scmp.ne.s32.totalorder %s52, %s54
      %p61 = scmp.eq.s32.totalorder %s28, 1
      %p62 = por %p60, %p61
      %p63 = scmp.ne.s32.totalorder %s54, %s55
      %p64 = scmp.eq.s32.totalorder %s28, 0
      %p65 = por %p63, %p64
      %p66 = scmp.ne.s32.totalorder %s54, %s55
      %p67 = scmp.eq.s32.totalorder %s29, 1
      %p68 = por %p66, %p67
      %p70 = scmp.ne.s32.totalorder %s55, %s69
      %p71 = scmp.eq.s32.totalorder %s29, 0
      %p72 = por %p70, %p71
      %s73 = ssub.s32 %s23, %s30
      %p74 = scmp.eq.s32.totalorder %s73, 0
      %s76 = sadd.s32 %s75, 1
      %s77 = scalar_select %p74, %s75, %s76
      %p80 = pneg %p74
      %p81 = scmp.eq.s32.totalorder %s23, 1
      %p82 = por %p80, %p81
      %p83 = scmp.ne.s32.totalorder %s75, %s78
      %p84 = scmp.eq.s32.totalorder %s23, 0
      %p85 = por %p83, %p84
      %p86 = scmp.ne.s32.totalorder %s75, %s78
      %p87 = scmp.eq.s32.totalorder %s28, 1
      %p88 = por %p86, %p87
      %p89 = scmp.ne.s32.totalorder %s78, %s79
      %p90 = scmp.eq.s32.totalorder %s28, 0
      %p91 = por %p89, %p90
      %p92 = scmp.ne.s32.totalorder %s78, %s79
      %p93 = scmp.eq.s32.totalorder %s29, 1
      %p94 = por %p92, %p93
      %p96 = scmp.ne.s32.totalorder %s79, %s95
      %p97 = scmp.eq.s32.totalorder %s29, 0
      %p98 = por %p96, %p97
      %s99 = ssub.s32 %s23, %s30
      %p100 = scmp.eq.s32.totalorder %s99, 0
      %s102 = sadd.s32 %s101, 1
      %s103 = scalar_select %p100, %s101, %s102
      %p106 = pneg %p100
      %p107 = scmp.eq.s32.totalorder %s23, 1
      %p108 = por %p106, %p107
      %p109 = scmp.ne.s32.totalorder %s101, %s104
      %p110 = scmp.eq.s32.totalorder %s23, 0
      %p111 = por %p109, %p110
      %p112 = scmp.ne.s32.totalorder %s101, %s104
      %p113 = scmp.eq.s32.totalorder %s28, 1
      %p114 = por %p112, %p113
      %p115 = scmp.ne.s32.totalorder %s104, %s105
      %p116 = scmp.eq.s32.totalorder %s28, 0
      %p117 = por %p115, %p116
      %p118 = scmp.ne.s32.totalorder %s104, %s105
      %p119 = scmp.eq.s32.totalorder %s29, 1
      %p120 = por %p118, %p119
      %p122 = scmp.ne.s32.totalorder %s105, %s121
      %p123 = scmp.eq.s32.totalorder %s29, 0
      %p124 = por %p122, %p123
      %s125 = ssub.s32 %s23, %s30
      %p126 = scmp.eq.s32.totalorder %s125, 0
      %s128 = sadd.s32 %s127, 1
      %s129 = scalar_select %p126, %s127, %s128
      %p132 = pneg %p126
      %p133 = scmp.eq.s32.totalorder %s23, 1
      %p134 = por %p132, %p133
      %p135 = scmp.ne.s32.totalorder %s127, %s130
      %p136 = scmp.eq.s32.totalorder %s23, 0
      %p137 = por %p135, %p136
      %p138 = scmp.ne.s32.totalorder %s127, %s130
      %p139 = scmp.eq.s32.totalorder %s28, 1
      %p140 = por %p138, %p139
      %p141 = scmp.ne.s32.totalorder %s130, %s131
      %p142 = scmp.eq.s32.totalorder %s28, 0
      %p143 = por %p141, %p142
      %p144 = scmp.ne.s32.totalorder %s130, %s131
      %p145 = scmp.eq.s32.totalorder %s29, 1
      %p146 = por %p144, %p145
      %p148 = scmp.ne.s32.totalorder %s131, %s147
      %p149 = scmp.eq.s32.totalorder %s29, 0
      %p150 = por %p148, %p149
      %s151 = ssub.s32 %s23, %s30
      %p152 = scmp.eq.s32.totalorder %s151, 0
      %s154 = sadd.s32 %s153, 1
      %s155 = scalar_select %p152, %s153, %s154
      %p158 = pneg %p152
      %p159 = scmp.eq.s32.totalorder %s23, 1
      %p160 = por %p158, %p159
      %p161 = scmp.ne.s32.totalorder %s153, %s156
      %p162 = scmp.eq.s32.totalorder %s23, 0
      %p163 = por %p161, %p162
      %p164 = scmp.ne.s32.totalorder %s153, %s156
      %p165 = scmp.eq.s32.totalorder %s28, 1
      %p166 = por %p164, %p165
      %p167 = scmp.ne.s32.totalorder %s156, %s157
      %p168 = scmp.eq.s32.totalorder %s28, 0
      %p169 = por %p167, %p168
      %p170 = scmp.ne.s32.totalorder %s156, %s157
      %p171 = scmp.eq.s32.totalorder %s29, 1
      %p172 = por %p170, %p171
      %p174 = scmp.ne.s32.totalorder %s157, %s173
      %p175 = scmp.eq.s32.totalorder %s29, 0
      %p176 = por %p174, %p175
      %s177 = ssub.s32 %s23, %s30
      %p178 = scmp.eq.s32.totalorder %s177, 0
      %s180 = sadd.s32 %s179, 1
      %s181 = scalar_select %p178, %s179, %s180
      %p184 = pneg %p178
      %p185 = scmp.eq.s32.totalorder %s23, 1
      %p186 = por %p184, %p185
      %p187 = scmp.ne.s32.totalorder %s179, %s182
      %p188 = scmp.eq.s32.totalorder %s23, 0
      %p189 = por %p187, %p188
      %p190 = scmp.ne.s32.totalorder %s179, %s182
      %p191 = scmp.eq.s32.totalorder %s28, 1
      %p192 = por %p190, %p191
      %p193 = scmp.ne.s32.totalorder %s182, %s183
      %p194 = scmp.eq.s32.totalorder %s28, 0
      %p195 = por %p193, %p194
      %p196 = scmp.ne.s32.totalorder %s182, %s183
      %p197 = scmp.eq.s32.totalorder %s29, 1
      %p198 = por %p196, %p197
      %p200 = scmp.ne.s32.totalorder %s183, %s199
      %p201 = scmp.eq.s32.totalorder %s29, 0
      %p202 = por %p200, %p201
      %s203 = ssub.s32 %s23, %s30
      %p204 = scmp.eq.s32.totalorder %s203, 0
      %s206 = sadd.s32 %s205, 1
      %s207 = scalar_select %p204, %s205, %s206
      %p210 = pneg %p204
      %p211 = scmp.eq.s32.totalorder %s23, 1
      %p212 = por %p210, %p211
      %p213 = scmp.ne.s32.totalorder %s205, %s208
      %p214 = scmp.eq.s32.totalorder %s23, 0
      %p215 = por %p213, %p214
      %p216 = scmp.ne.s32.totalorder %s205, %s208
      %p217 = scmp.eq.s32.totalorder %s28, 1
      %p218 = por %p216, %p217
      %p219 = scmp.ne.s32.totalorder %s208, %s209
      %p220 = scmp.eq.s32.totalorder %s28, 0
      %p221 = por %p219, %p220
      %p222 = scmp.ne.s32.totalorder %s208, %s209
      %p223 = scmp.eq.s32.totalorder %s29, 1
      %p224 = por %p222, %p223
      %p226 = scmp.ne.s32.totalorder %s209, %s225
      %p227 = scmp.eq.s32.totalorder %s29, 0
      %p228 = por %p226, %p227
      %s229 = ssub.s32 %s23, %s30
      %p230 = scmp.eq.s32.totalorder %s229, 0
      %s232 = sadd.s32 %s231, 1
      %s233 = scalar_select %p230, %s231, %s232
      %p236 = pneg %p230
      %p237 = scmp.eq.s32.totalorder %s23, 1
      %p238 = por %p236, %p237
      %p239 = scmp.ne.s32.totalorder %s231, %s234
      %p240 = scmp.eq.s32.totalorder %s23, 0
      %p241 = por %p239, %p240
      %p242 = scmp.ne.s32.totalorder %s231, %s234
      %p243 = scmp.eq.s32.totalorder %s28, 1
      %p244 = por %p242, %p243
      %p245 = scmp.ne.s32.totalorder %s234, %s235
      %p246 = scmp.eq.s32.totalorder %s28, 0
      %p247 = por %p245, %p246
      %p248 = scmp.ne.s32.totalorder %s234, %s235
      %p249 = scmp.eq.s32.totalorder %s29, 1
      %p250 = por %p248, %p249
      %p252 = scmp.ne.s32.totalorder %s235, %s251
      %p253 = scmp.eq.s32.totalorder %s29, 0
      %p254 = por %p252, %p253
      %s255 = ssub.s32 %s23, %s30
      %p256 = scmp.eq.s32.totalorder %s255, 0
      %s258 = sadd.s32 %s257, 1
      %s259 = scalar_select %p256, %s257, %s258
      %p262 = pneg %p256
      %p263 = scmp.eq.s32.totalorder %s23, 1
      %p264 = por %p262, %p263
      %p265 = scmp.ne.s32.totalorder %s257, %s260
      %p266 = scmp.eq.s32.totalorder %s23, 0
      %p267 = por %p265, %p266
      %p268 = scmp.ne.s32.totalorder %s257, %s260
      %p269 = scmp.eq.s32.totalorder %s28, 1
      %p270 = por %p268, %p269
      %p271 = scmp.ne.s32.totalorder %s260, %s261
      %p272 = scmp.eq.s32.totalorder %s28, 0
      %p273 = por %p271, %p272
      %p274 = scmp.ne.s32.totalorder %s260, %s261
      %p275 = scmp.eq.s32.totalorder %s29, 1
      %p276 = por %p274, %p275
      %p278 = scmp.ne.s32.totalorder %s261, %s277
      %p279 = scmp.eq.s32.totalorder %s29, 0
      %p280 = por %p278, %p279
      %s281 = ssub.s32 %s23, %s30
      %p282 = scmp.eq.s32.totalorder %s281, 0
      %s284 = sadd.s32 %s283, 1
      %s285 = scalar_select %p282, %s283, %s284
      %p288 = pneg %p282
      %p289 = scmp.eq.s32.totalorder %s23, 1
      %p290 = por %p288, %p289
      %p291 = scmp.ne.s32.totalorder %s283, %s286
      %p292 = scmp.eq.s32.totalorder %s23, 0
      %p293 = por %p291, %p292
      %p294 = scmp.ne.s32.totalorder %s283, %s286
      %p295 = scmp.eq.s32.totalorder %s28, 1
      %p296 = por %p294, %p295
      %p297 = scmp.ne.s32.totalorder %s286, %s287
      %p298 = scmp.eq.s32.totalorder %s28, 0
      %p299 = por %p297, %p298
      %p300 = scmp.ne.s32.totalorder %s286, %s287
      %p301 = scmp.eq.s32.totalorder %s29, 1
      %p302 = por %p300, %p301
      %p304 = scmp.ne.s32.totalorder %s287, %s303
      %p305 = scmp.eq.s32.totalorder %s29, 0
      %p306 = por %p304, %p305
      %s307 = ssub.s32 %s23, %s30
      %p308 = scmp.eq.s32.totalorder %s307, 0
      %s310 = sadd.s32 %s309, 1
      %s311 = scalar_select %p308, %s309, %s310
      %p314 = pneg %p308
      %p315 = scmp.eq.s32.totalorder %s23, 1
      %p316 = por %p314, %p315
      %p317 = scmp.ne.s32.totalorder %s309, %s312
      %p318 = scmp.eq.s32.totalorder %s23, 0
      %p319 = por %p317, %p318
      %p320 = scmp.ne.s32.totalorder %s309, %s312
      %p321 = scmp.eq.s32.totalorder %s28, 1
      %p322 = por %p320, %p321
      %p323 = scmp.ne.s32.totalorder %s312, %s313
      %p324 = scmp.eq.s32.totalorder %s28, 0
      %p325 = por %p323, %p324
      %p326 = scmp.ne.s32.totalorder %s312, %s313
      %p327 = scmp.eq.s32.totalorder %s29, 1
      %p328 = por %p326, %p327
      %p330 = scmp.ne.s32.totalorder %s313, %s329
      %p331 = scmp.eq.s32.totalorder %s29, 0
      %p332 = por %p330, %p331
      %s333 = ssub.s32 %s23, %s30
      %p334 = scmp.eq.s32.totalorder %s333, 0
      %s336 = sadd.s32 %s335, 1
      %s337 = scalar_select %p334, %s335, %s336
      %p340 = pneg %p334
      %p341 = scmp.eq.s32.totalorder %s23, 1
      %p342 = por %p340, %p341
      %p343 = scmp.ne.s32.totalorder %s335, %s338
      %p344 = scmp.eq.s32.totalorder %s23, 0
      %p345 = por %p343, %p344
      %p346 = scmp.ne.s32.totalorder %s335, %s338
      %p347 = scmp.eq.s32.totalorder %s28, 1
      %p348 = por %p346, %p347
      %p349 = scmp.ne.s32.totalorder %s338, %s339
      %p350 = scmp.eq.s32.totalorder %s28, 0
      %p351 = por %p349, %p350
      %p352 = scmp.ne.s32.totalorder %s338, %s339
      %p353 = scmp.eq.s32.totalorder %s29, 1
      %p354 = por %p352, %p353
      %p356 = scmp.ne.s32.totalorder %s339, %s355
      %p357 = scmp.eq.s32.totalorder %s29, 0
      %p358 = por %p356, %p357
      %s359 = ssub.s32 %s23, %s30
      %p360 = scmp.eq.s32.totalorder %s359, 0
      %s362 = sadd.s32 %s361, 1
      %s363 = scalar_select %p360, %s361, %s362
      %p366 = pneg %p360
      %p367 = scmp.eq.s32.totalorder %s23, 1
      %p368 = por %p366, %p367
      %p369 = scmp.ne.s32.totalorder %s361, %s364
      %p370 = scmp.eq.s32.totalorder %s23, 0
      %p371 = por %p369, %p370
      %p372 = scmp.ne.s32.totalorder %s361, %s364
      %p373 = scmp.eq.s32.totalorder %s28, 1
      %p374 = por %p372, %p373
      %p375 = scmp.ne.s32.totalorder %s364, %s365
      %p376 = scmp.eq.s32.totalorder %s28, 0
      %p377 = por %p375, %p376
      %p378 = scmp.ne.s32.totalorder %s364, %s365
      %p379 = scmp.eq.s32.totalorder %s29, 1
      %p380 = por %p378, %p379
      %p382 = scmp.ne.s32.totalorder %s365, %s381
      %p383 = scmp.eq.s32.totalorder %s29, 0
      %p384 = por %p382, %p383
      %s386 = sadd.s32 %s385, 1
      %p389 = scmp.eq.s32.totalorder %s23, 1
      %p390 = scmp.ne.s32.totalorder %s385, %s387
      %p391 = scmp.eq.s32.totalorder %s23, 0
      %p392 = por %p390, %p391
      %p393 = scmp.ne.s32.totalorder %s385, %s387
      %p394 = scmp.eq.s32.totalorder %s28, 1
      %p395 = por %p393, %p394
      %p396 = scmp.ne.s32.totalorder %s387, %s388
      %p397 = scmp.eq.s32.totalorder %s28, 0
      %p398 = por %p396, %p397
      %p399 = scmp.ne.s32.totalorder %s387, %s388
      %p400 = scmp.eq.s32.totalorder %s29, 1
      %p401 = por %p399, %p400
      %p403 = scmp.ne.s32.totalorder %s388, %s402
      %p404 = scmp.eq.s32.totalorder %s29, 0
      %p405 = por %p403, %p404
      %s407 = sadd.s32 %s406, 1
      %p410 = scmp.eq.s32.totalorder %s23, 1
      %p411 = scmp.ne.s32.totalorder %s406, %s408
      %p412 = scmp.eq.s32.totalorder %s23, 0
      %p413 = por %p411, %p412
      %p414 = scmp.ne.s32.totalorder %s406, %s408
      %p415 = scmp.eq.s32.totalorder %s28, 1
      %p416 = por %p414, %p415
      %p417 = scmp.ne.s32.totalorder %s408, %s409
      %p418 = scmp.eq.s32.totalorder %s28, 0
      %p419 = por %p417, %p418
      %p420 = scmp.ne.s32.totalorder %s408, %s409
      %p421 = scmp.eq.s32.totalorder %s29, 1
      %p422 = por %p420, %p421
      %p424 = scmp.ne.s32.totalorder %s409, %s423
      %p425 = scmp.eq.s32.totalorder %s29, 0
      %p426 = por %p424, %p425
      %s428 = sadd.s32 %s427, 1
      %p431 = scmp.eq.s32.totalorder %s23, 1
      %p432 = scmp.ne.s32.totalorder %s427, %s429
      %p433 = scmp.eq.s32.totalorder %s23, 0
      %p434 = por %p432, %p433
      %p435 = scmp.ne.s32.totalorder %s427, %s429
      %p436 = scmp.eq.s32.totalorder %s28, 1
      %p437 = por %p435, %p436
      %p438 = scmp.ne.s32.totalorder %s429, %s430
      %p439 = scmp.eq.s32.totalorder %s28, 0
      %p440 = por %p438, %p439
      %p441 = scmp.ne.s32.totalorder %s429, %s430
      %p442 = scmp.eq.s32.totalorder %s29, 1
      %p443 = por %p441, %p442
      %p445 = scmp.ne.s32.totalorder %s430, %s444
      %p446 = scmp.eq.s32.totalorder %s29, 0
      %p447 = por %p445, %p446
      %p448 = scmp.le.s32.totalorder 1, %s23
      %p449 = scmp.lt.s32.totalorder %s23, 3
      %p450 = pnand %p448, %p449
      %p451 = pneg %p450
      // Predicated region
      $region9: #{tpu_custom_call.1} parent=5 // pred_check
        _
      $region10: #{tpu_custom_call.1} parent=5 // pred_check_branch
        %453 = sbr.rel (%p450) target = $region12
      $region11: #{tpu_custom_call.1} parent=5 // pred_region
        %s454 = ssub.s32 %s23, 1
        // Predicated region
        $region13: #{tpu_custom_call.1} parent=11 // pred_check
          %p455 = pneg %p44
        $region14: #{tpu_custom_call.1} parent=11 // pred_check_branch
          %457 = sbr.rel (%p455) target = $region16
        $region15: #{tpu_custom_call.1} parent=11 // pred_region
          _
        $region16: #{tpu_custom_call.1} parent=11 // pred_fallthru
          _
        // Predicated region
        $region17: #{tpu_custom_call.1} parent=11 // pred_check
          %p458 = pneg %p65
        $region18: #{tpu_custom_call.1} parent=11 // pred_check_branch
          %460 = sbr.rel (%p458) target = $region20
        $region19: #{tpu_custom_call.1} parent=11 // pred_region
          _
        $region20: #{tpu_custom_call.1} parent=11 // pred_fallthru
          _
        // Predicated region
        $region21: #{tpu_custom_call.1} parent=11 // pred_check
          %p461 = pneg %p398
        $region22: #{tpu_custom_call.1} parent=11 // pred_check_branch
          %463 = sbr.rel (%p461) target = $region24
        $region23: #{tpu_custom_call.1} parent=11 // pred_region
          _
        $region24: #{tpu_custom_call.1} parent=11 // pred_fallthru
          _
        // Predicated region
        $region25: #{tpu_custom_call.1} parent=11 // pred_check
          %p464 = pneg %p419
        $region26: #{tpu_custom_call.1} parent=11 // pred_check_branch
          %466 = sbr.rel (%p464) target = $region28
        $region27: #{tpu_custom_call.1} parent=11 // pred_region
          _
        $region28: #{tpu_custom_call.1} parent=11 // pred_fallthru
          _
      $region12: #{tpu_custom_call.1} parent=5 // pred_fallthru
        _
      %p467 = scmp.lt.s32.totalorder %s23, 2
      // Predicated region
      $region29: #{tpu_custom_call.1} parent=5 // pred_check
        %p468 = pneg %p467
      $region30: #{tpu_custom_call.1} parent=5 // pred_check_branch
        %470 = sbr.rel (%p468) target = $region32
      $region31: #{tpu_custom_call.1} parent=5 // pred_region
        // Predicated region
        $region33: #{tpu_custom_call.1} parent=31 // pred_check
          %p471 = pneg %p85
        $region34: #{tpu_custom_call.1} parent=31 // pred_check_branch
          %473 = sbr.rel (%p471) target = $region36
        $region35: #{tpu_custom_call.1} parent=31 // pred_region
          %p474 = scmp.lt.s32.totalorder %s23, 1
          %s475 = scalar_select %p474, %s23, 1
          %s476 = scalar_lea.vmem %s2, %s475
        $region36: #{tpu_custom_call.1} parent=31 // pred_fallthru
          _
        // Predicated region
        $region37: #{tpu_custom_call.1} parent=31 // pred_check
          %p477 = pneg %p111
        $region38: #{tpu_custom_call.1} parent=31 // pred_check_branch
          %479 = sbr.rel (%p477) target = $region40
        $region39: #{tpu_custom_call.1} parent=31 // pred_region
          %p480 = scmp.lt.s32.totalorder %s23, 1
          %s481 = scalar_select %p480, %s23, 1
          %s482 = scalar_lea.vmem %s3, %s481
        $region40: #{tpu_custom_call.1} parent=31 // pred_fallthru
          _
        // Predicated region
        $region41: #{tpu_custom_call.1} parent=31 // pred_check
          %p483 = pneg %p137
        $region42: #{tpu_custom_call.1} parent=31 // pred_check_branch
          %485 = sbr.rel (%p483) target = $region44
        $region43: #{tpu_custom_call.1} parent=31 // pred_region
          %p486 = scmp.lt.s32.totalorder %s23, 1
          %s487 = scalar_select %p486, %s23, 1
          %s488 = smul.addr %s487, 8
          %s489 = smul.addr %s488, 8
          %s490 = scalar_lea.vmem %s4, %s489
        $region44: #{tpu_custom_call.1} parent=31 // pred_fallthru
          _
        // Predicated region
        $region45: #{tpu_custom_call.1} parent=31 // pred_check
          %p491 = pneg %p163
        $region46: #{tpu_custom_call.1} parent=31 // pred_check_branch
          %493 = sbr.rel (%p491) target = $region48
        $region47: #{tpu_custom_call.1} parent=31 // pred_region
          %p494 = scmp.lt.s32.totalorder %s23, 1
          %s495 = scalar_select %p494, %s23, 1
          %s496 = smul.addr %s495, 2
          %s497 = scalar_lea.vmem %s5, %s496
        $region48: #{tpu_custom_call.1} parent=31 // pred_fallthru
          _
        // Predicated region
        $region49: #{tpu_custom_call.1} parent=31 // pred_check
          %p498 = pneg %p189
        $region50: #{tpu_custom_call.1} parent=31 // pred_check_branch
          %500 = sbr.rel (%p498) target = $region52
        $region51: #{tpu_custom_call.1} parent=31 // pred_region
          %p501 = scmp.lt.s32.totalorder %s23, 1
          %s502 = scalar_select %p501, %s23, 1
          %s503 = smul.addr %s502, 8
          %s504 = smul.addr %s503, 8
          %s505 = scalar_lea.vmem %s6, %s504
        $region52: #{tpu_custom_call.1} parent=31 // pred_fallthru
          _
        // Predicated region
        $region53: #{tpu_custom_call.1} parent=31 // pred_check
          %p506 = pneg %p215
        $region54: #{tpu_custom_call.1} parent=31 // pred_check_branch
          %508 = sbr.rel (%p506) target = $region56
        $region55: #{tpu_custom_call.1} parent=31 // pred_region
          %p509 = scmp.lt.s32.totalorder %s23, 1
          %s510 = scalar_select %p509, %s23, 1
          %s511 = scalar_lea.vmem %s7, %s510
        $region56: #{tpu_custom_call.1} parent=31 // pred_fallthru
          _
        // Predicated region
        $region57: #{tpu_custom_call.1} parent=31 // pred_check
          %p512 = pneg %p241
        $region58: #{tpu_custom_call.1} parent=31 // pred_check_branch
          %514 = sbr.rel (%p512) target = $region60
        $region59: #{tpu_custom_call.1} parent=31 // pred_region
          %p515 = scmp.lt.s32.totalorder %s23, 1
          %s516 = scalar_select %p515, %s23, 1
          %s517 = scalar_lea.vmem %s8, %s516
        $region60: #{tpu_custom_call.1} parent=31 // pred_fallthru
          _
        // Predicated region
        $region61: #{tpu_custom_call.1} parent=31 // pred_check
          %p518 = pneg %p267
        $region62: #{tpu_custom_call.1} parent=31 // pred_check_branch
          %520 = sbr.rel (%p518) target = $region64
        $region63: #{tpu_custom_call.1} parent=31 // pred_region
          %p521 = scmp.lt.s32.totalorder %s23, 1
          %s522 = scalar_select %p521, %s23, 1
          %s523 = scalar_lea.vmem %s9, %s522
        $region64: #{tpu_custom_call.1} parent=31 // pred_fallthru
          _
        // Predicated region
        $region65: #{tpu_custom_call.1} parent=31 // pred_check
          %p524 = pneg %p293
        $region66: #{tpu_custom_call.1} parent=31 // pred_check_branch
          %526 = sbr.rel (%p524) target = $region68
        $region67: #{tpu_custom_call.1} parent=31 // pred_region
          %p527 = scmp.lt.s32.totalorder %s23, 1
          %s528 = scalar_select %p527, %s23, 1
          %s529 = smul.addr %s528, 4
          %s530 = smul.addr %s529, 8
          %s531 = scalar_lea.vmem %s10, %s530
        $region68: #{tpu_custom_call.1} parent=31 // pred_fallthru
          _
        // Predicated region
        $region69: #{tpu_custom_call.1} parent=31 // pred_check
          %p532 = pneg %p319
        $region70: #{tpu_custom_call.1} parent=31 // pred_check_branch
          %534 = sbr.rel (%p532) target = $region72
        $region71: #{tpu_custom_call.1} parent=31 // pred_region
          %p535 = scmp.lt.s32.totalorder %s23, 1
          %s536 = scalar_select %p535, %s23, 1
          %s537 = scalar_lea.vmem %s11, %s536
        $region72: #{tpu_custom_call.1} parent=31 // pred_fallthru
          _
        // Predicated region
        $region73: #{tpu_custom_call.1} parent=31 // pred_check
          %p538 = pneg %p345
        $region74: #{tpu_custom_call.1} parent=31 // pred_check_branch
          %540 = sbr.rel (%p538) target = $region76
        $region75: #{tpu_custom_call.1} parent=31 // pred_region
          %p541 = scmp.lt.s32.totalorder %s23, 1
          %s542 = scalar_select %p541, %s23, 1
          %s543 = smul.addr %s542, 8
          %s544 = smul.addr %s543, 8
          %s545 = scalar_lea.vmem %s12, %s544
        $region76: #{tpu_custom_call.1} parent=31 // pred_fallthru
          _
        // Predicated region
        $region77: #{tpu_custom_call.1} parent=31 // pred_check
          %p546 = pneg %p371
        $region78: #{tpu_custom_call.1} parent=31 // pred_check_branch
          %548 = sbr.rel (%p546) target = $region80
        $region79: #{tpu_custom_call.1} parent=31 // pred_region
          %p549 = scmp.lt.s32.totalorder %s23, 1
          %s550 = scalar_select %p549, %s23, 1
          %s551 = scalar_lea.vmem %s13, %s550
        $region80: #{tpu_custom_call.1} parent=31 // pred_fallthru
          _
      $region32: #{tpu_custom_call.1} parent=5 // pred_fallthru
        _
      %p552 = scmp.le.s32.totalorder 1, %s23
      %p553 = scmp.lt.s32.totalorder %s23, 3
      %p554 = pnand %p552, %p553
      %p555 = pneg %p554
      // Predicated region
      $region81: #{tpu_custom_call.1} parent=5 // pred_check
        _
      $region82: #{tpu_custom_call.1} parent=5 // pred_check_branch
        %557 = sbr.rel (%p554) target = $region84
      $region83: #{tpu_custom_call.1} parent=5 // pred_region
        %s558 = ssub.s32 %s23, 1
        %p559 = pneg %p44
        %p560 = pneg %p41
        %p561 = pneg %p65
        %p562 = pneg %p62
        %p563 = scmp.lt.s32.totalorder %s28, 1
        %s564 = scalar_select %p563, %s28, 1
        %s565 = scalar_lea.vmem %s2, %s564
        %p566 = pneg %p91
        %p567 = pneg %p88
        %p568 = scmp.lt.s32.totalorder %s28, 1
        %s569 = scalar_select %p568, %s28, 1
        %s570 = scalar_lea.vmem %s3, %s569
        %p571 = pneg %p117
        %p572 = pneg %p114
        %p573 = scmp.lt.s32.totalorder %s28, 1
        %s574 = scalar_select %p573, %s28, 1
        %s575 = smul.addr %s574, 8
        %s576 = smul.addr %s575, 8
        %s577 = scalar_lea.vmem %s4, %s576
        %p578 = pneg %p143
        %p579 = pneg %p140
        %p580 = scmp.lt.s32.totalorder %s28, 1
        %s581 = scalar_select %p580, %s28, 1
        %s582 = smul.addr %s581, 2
        %s583 = scalar_lea.vmem %s5, %s582
        %p584 = pneg %p169
        %p585 = pneg %p166
        %p586 = scmp.lt.s32.totalorder %s28, 1
        %s587 = scalar_select %p586, %s28, 1
        %s588 = smul.addr %s587, 8
        %s589 = smul.addr %s588, 8
        %s590 = scalar_lea.vmem %s6, %s589
        %p591 = pneg %p195
        %p592 = pneg %p192
        %p593 = scmp.lt.s32.totalorder %s28, 1
        %s594 = scalar_select %p593, %s28, 1
        %s595 = scalar_lea.vmem %s7, %s594
        %p596 = pneg %p221
        %p597 = pneg %p218
        %p598 = scmp.lt.s32.totalorder %s28, 1
        %s599 = scalar_select %p598, %s28, 1
        %s600 = scalar_lea.vmem %s8, %s599
        %p601 = pneg %p247
        %p602 = pneg %p244
        %p603 = scmp.lt.s32.totalorder %s28, 1
        %s604 = scalar_select %p603, %s28, 1
        %s605 = scalar_lea.vmem %s9, %s604
        %p606 = pneg %p273
        %p607 = pneg %p270
        %p608 = scmp.lt.s32.totalorder %s28, 1
        %s609 = scalar_select %p608, %s28, 1
        %s610 = smul.addr %s609, 4
        %s611 = smul.addr %s610, 8
        %s612 = scalar_lea.vmem %s10, %s611
        %p613 = pneg %p299
        %p614 = pneg %p296
        %p615 = scmp.lt.s32.totalorder %s28, 1
        %s616 = scalar_select %p615, %s28, 1
        %s617 = scalar_lea.vmem %s11, %s616
        %p618 = pneg %p325
        %p619 = pneg %p322
        %p620 = scmp.lt.s32.totalorder %s28, 1
        %s621 = scalar_select %p620, %s28, 1
        %s622 = smul.addr %s621, 8
        %s623 = smul.addr %s622, 8
        %s624 = scalar_lea.vmem %s12, %s623
        %p625 = pneg %p351
        %p626 = pneg %p348
        %p627 = scmp.lt.s32.totalorder %s28, 1
        %s628 = scalar_select %p627, %s28, 1
        %s629 = scalar_lea.vmem %s13, %s628
        %p630 = pneg %p377
        %p631 = pneg %p374
        %p632 = pneg %p398
        %p633 = pneg %p395
        %p634 = pneg %p419
        %p635 = pneg %p416
        %p636 = pneg %p440
        %p637 = pneg %p437
        %p638 = scmp.lt.s32.totalorder %s28, 1
        %s639 = scalar_select %p638, %s28, 1
        %s640 = scalar_lea.vmem %s2, %s639
        %p641 = scmp.lt.s32.totalorder %s28, 1
        %s642 = scalar_select %p641, %s28, 1
        %s643 = scalar_lea.vmem %s3, %s642
        %p644 = scmp.lt.s32.totalorder %s28, 1
        %s645 = scalar_select %p644, %s28, 1
        %s646 = smul.addr %s645, 8
        %s647 = smul.addr %s646, 8
        %s648 = scalar_lea.vmem %s4, %s647
        %p649 = scmp.lt.s32.totalorder %s28, 1
        %s650 = scalar_select %p649, %s28, 1
        %s651 = smul.addr %s650, 2
        %s652 = scalar_lea.vmem %s5, %s651
        %p653 = scmp.lt.s32.totalorder %s28, 1
        %s654 = scalar_select %p653, %s28, 1
        %s655 = smul.addr %s654, 8
        %s656 = smul.addr %s655, 8
        %s657 = scalar_lea.vmem %s6, %s656
        %p658 = scmp.lt.s32.totalorder %s28, 1
        %s659 = scalar_select %p658, %s28, 1
        %s660 = scalar_lea.vmem %s7, %s659
        %p661 = scmp.lt.s32.totalorder %s28, 1
        %s662 = scalar_select %p661, %s28, 1
        %s663 = scalar_lea.vmem %s8, %s662
        %p664 = scmp.lt.s32.totalorder %s28, 1
        %s665 = scalar_select %p664, %s28, 1
        %s666 = scalar_lea.vmem %s9, %s665
        %p667 = scmp.lt.s32.totalorder %s28, 1
        %s668 = scalar_select %p667, %s28, 1
        %s669 = smul.addr %s668, 4
        %s670 = smul.addr %s669, 8
        %s671 = scalar_lea.vmem %s10, %s670
        %p672 = scmp.lt.s32.totalorder %s28, 1
        %s673 = scalar_select %p672, %s28, 1
        %s674 = scalar_lea.vmem %s11, %s673
        %p675 = scmp.lt.s32.totalorder %s28, 1
        %s676 = scalar_select %p675, %s28, 1
        %s677 = smul.addr %s676, 8
        %s678 = smul.addr %s677, 8
        %s679 = scalar_lea.vmem %s12, %s678
        %p680 = scmp.lt.s32.totalorder %s28, 1
        %s681 = scalar_select %p680, %s28, 1
        %s682 = scalar_lea.vmem %s13, %s681
        %p683 = scmp.eq.s32.totalorder %s28, 0
        // Predicated region
        $region85: #{tpu_custom_call.1} parent=83 // pred_check
          %p684 = pneg %p683
        $region86: #{tpu_custom_call.1} parent=83 // pred_check_branch
          %686 = sbr.rel (%p684) target = $region88
        $region87: #{tpu_custom_call.1} parent=83 // pred_region
          %v687 = vld [vmem:[%s0] sm:$0xff]
          %v688 = vld [vmem:[%s0 + $0x8] sm:$0xff]
          %vm689 = vcmask 261120
          %690 = vst.msk [vmem:[#allocation2] sm:$0xff] %vm689, %v687
          %691 = vst.msk [vmem:[#allocation2 + $0x8] sm:$0xff] %vm689, %v688
        $region88: #{tpu_custom_call.1} parent=83 // pred_fallthru
          _
        %v692 = vld [vmem:[#allocation2] sm:$0xff]
        %v693 = vld [vmem:[#allocation2 + $0x8] sm:$0xff]
        %v694 = vld [vmem:[%s1] sm:$0x3]
        %v697 = vunpack.c.l.s4 1966171168
        %v698 = vunpack.c.0.s8 %v697
        %v699 = vlaneseq
        %v700 = vshrl.u32 %v699, 7
        %v701 = vsub.s32 %v698, %v700
        %v702 = vrot.slane %v694, %v701
        %v703 = vcombine.high %v702, %v702
        %v705 = vunpack.c.l.s4 1966171168
        %v706 = vunpack.c.0.s8 %v705
        %v707 = vlaneseq
        %v708 = vshrl.u32 %v707, 7
        %v709 = vsub.s32 %v706, %v708
        %v710 = vrot.slane %v702, %v709
        %v712 = vunpack.c.l.s4 1966171168
        %v713 = vunpack.c.0.s8 %v712
        %v714 = vlaneseq
        %v715 = vshrl.u32 %v714, 7
        %v716 = vsub.s32 %v713, %v715
        %v717 = vrot.slane %v703, %v716
        %v718 = vld [vmem:[%s640] sm:$0x1]
        %v719 = vld [vmem:[%s643] sm:$0x1]
        %vm720 = vcmask 261120
        %v721 = vsel %vm720, %v692, 0.0
        %722 = vadd.xlane.f32.xlu0 %v721
        %v723 = vpop.xlane.xlu0 %722
        %v724 = vsel %vm720, %v693, 0.0
        %725 = vadd.xlane.f32.xlu0 %v724
        %v726 = vpop.xlane.xlu0 %725
        %v727 = vrcp.pop 32.0
        %v728 = vmul.f32 %v723, %v727
        %v729 = vmul.f32 %v726, %v727
        %v730 = vsub.f32 %v692, %v728
        %v731 = vsub.f32 %v693, %v729
        %v732 = vmul.f32 %v730, %v730
        %v733 = vmul.f32 %v731, %v731
        %v734 = vsel %vm720, %v732, 0.0
        %735 = vadd.xlane.f32.xlu0 %v734
        %v736 = vpop.xlane.xlu0 %735
        %v737 = vsel %vm720, %v733, 0.0
        %738 = vadd.xlane.f32.xlu0 %v737
        %v739 = vpop.xlane.xlu0 %738
        %v740 = vmul.f32 %v736, %v727
        %v741 = vmul.f32 %v739, %v727
        %v742 = vadd.f32 %v740, 1e-06
        %v743 = vadd.f32 %v741, 1e-06
        %v744 = vrsqrt.pop %v742
        %v745 = vrsqrt.pop %v743
        %v746 = vmul.f32 %v730, %v744
        %v747 = vmul.f32 %v731, %v745
        %v749 = vlaneseq
        %v750 = vshrl.u32 %v749, 7
        %v751 = vsub.s32 0, %v750
        %v752 = vrot.slane %v718, %v751
        %v754 = vmul.f32 %v746, %v752
        %v755 = vmul.f32 %v747, %v752
        %v757 = vlaneseq
        %v758 = vshrl.u32 %v757, 7
        %v759 = vsub.s32 0, %v758
        %v760 = vrot.slane %v719, %v759
        %v762 = vadd.f32 %v754, %v760
        %v763 = vadd.f32 %v755, %v760
        %v764 = vld [vmem:[%s648] sm:$0xff]
        %v765 = vld [vmem:[%s648 + $0x8] sm:$0xff]
        %v766 = vld [vmem:[%s648 + $0x10] sm:$0xff]
        %v767 = vld [vmem:[%s648 + $0x18] sm:$0xff]
        %v768 = vld [vmem:[%s648 + $0x20] sm:$0xff]
        %v769 = vld [vmem:[%s648 + $0x28] sm:$0xff]
        %v770 = vld [vmem:[%s648 + $0x30] sm:$0xff]
        %v771 = vld [vmem:[%s648 + $0x38] sm:$0xff]
        %v772 = vld [vmem:[%s652] sm:$0x3]
        %v774 = vlaneseq
        %v775 = vshrl.u32 %v774, 7
        %v776 = vsub.s32 0, %v775
        %v777 = vrot.slane %v772, %v776
        %v778 = vlaneseq
        %v779 = vshrl.u32 %v778, 7
        %v780 = vsub.s32 1, %v779
        %v781 = vrot.slane %v772, %v780
        %v785 = vsel %vm720, %v762, 0
        %v788 = vsel %vm720, %v763, 0
        %790 = vmatprep.subr.mxu0 %v765
        %791 = vmatpush1.msra.mxu0 %v764
        %792 = vmatprep.subr.mxu0 %v767
        %793 = vmatpush1.msra.mxu0 %v766
        %794 = vmatprep.subr.mxu0 %v769
        %795 = vmatpush1.msra.mxu0 %v768
        %796 = vmatprep.subr.mxu0 %v771
        %797 = vmatpush1.msra.mxu0 %v770
        %798 = vmatprep.subr.mxu0 0.0
        %799 = vmatpush1.msra.mxu0 0.0
        %800 = vmatprep.subr.mxu0 0.0
        %801 = vmatpush1.msra.mxu0 0.0
        %802 = vmatprep.subr.mxu0 0.0
        %803 = vmatpush1.msra.mxu0 0.0
        %804 = vmatprep.subr.mxu0 0.0
        %805 = vmatpush1.msra.mxu0 0.0
        %806 = vmatprep.subr.mxu0 0.0
        %807 = vmatpush1.msra.mxu0 0.0
        %808 = vmatprep.subr.mxu0 0.0
        %809 = vmatpush1.msra.mxu0 0.0
        %810 = vmatprep.subr.mxu0 0.0
        %811 = vmatpush1.msra.mxu0 0.0
        %812 = vmatprep.subr.mxu0 0.0
        %813 = vmatpush1.msra.mxu0 0.0
        %814 = vmatprep.subr.mxu0 0.0
        %815 = vmatpush1.msra.mxu0 0.0
        %816 = vmatprep.subr.mxu0 0.0
        %817 = vmatpush1.msra.mxu0 0.0
        %818 = vmatprep.subr.mxu0 0.0
        %819 = vmatpush1.msra.mxu0 0.0
        %820 = vmatprep.subr.mxu0 0.0
        %821 = vmatpush1.msra.mxu0 0.0
        %822 = vmatprep.subr.mxu0 0.0
        %823 = vmatpush1.msra.mxu0 0.0
        %824 = vmatprep.subr.mxu0 0.0
        %825 = vmatpush1.msra.mxu0 0.0
        %826 = vmatprep.subr.mxu0 0.0
        %827 = vmatpush1.msra.mxu0 0.0
        %828 = vmatprep.subr.mxu0 0.0
        %829 = vmatpush1.msra.mxu0 0.0
        %830 = vmatprep.subr.mxu0 0.0
        %831 = vmatpush1.msra.mxu0 0.0
        %832 = vmatprep.subr.mxu0 0.0
        %833 = vmatpush1.msra.mxu0 0.0
        %834 = vmatprep.subr.mxu0 0.0
        %835 = vmatpush1.msra.mxu0 0.0
        %836 = vmatprep.subr.mxu0 0.0
        %837 = vmatpush1.msra.mxu0 0.0
        %838 = vmatprep.subr.mxu0 0.0
        %839 = vmatpush1.msra.mxu0 0.0
        %840 = vmatprep.subr.mxu0 0.0
        %841 = vmatpush1.msra.mxu0 0.0
        %842 = vmatprep.subr.mxu0 0.0
        %843 = vmatpush1.msra.mxu0 0.0
        %844 = vmatprep.subr.mxu0 0.0
        %845 = vmatpush1.msra.mxu0 0.0
        %846 = vmatprep.subr.mxu0 0.0
        %847 = vmatpush1.msra.mxu0 0.0
        %848 = vmatprep.subr.mxu0 0.0
        %849 = vmatpush1.msra.mxu0 0.0
        %850 = vmatprep.subr.mxu0 0.0
        %851 = vmatpush1.msra.mxu0 0.0
        %852 = vmatprep.subr.mxu0 0.0
        %853 = vmatpush1.msra.mxu0 0.0
        %854 = vmatprep.mubr.f32.mxu0 0.0
        %855 = vmatmul.mubr.f32.gmra.mrb[0].mxu0 %v785
        %v856 = vpop.f32.mrb[0].mxu0
        %v857 = vadd.f32 %v777, %v856
        %v858 = vpop.f32.mrb[0].mxu0
        %v859 = vadd.f32 %v781, %v858
        %860 = vmatprep.mubr.f32.mxu0 0.0
        %861 = vmatmul.mubr.f32.gmra.mrb[0].mxu0 %v788
        %v862 = vpop.f32.mrb[0].mxu0
        %v863 = vadd.f32 %v777, %v862
        %v864 = vpop.f32.mrb[0].mxu0
        %v865 = vadd.f32 %v781, %v864
        %866 = vdwg.mxu0
        %v867 = vlaneseq
        %v868 = vshrl.u32 %v867, 7
        %v869 = vsub.s32 0, %v868
        %v870 = vrot.slane %v710, %v869
        %v871 = vlaneseq
        %v872 = vshrl.u32 %v871, 7
        %v873 = vsub.s32 0, %v872
        %v874 = vrot.slane %v717, %v873
        %878 = vrot.lane.b32.xlu0 %v857, 64
        %v879 = vpop.permute.xlu0 %878
        %vm880 = vcmask 130048
        %v881 = vsel %vm880, %v857, 0
        %v883 = vsel %vm880, %v879, 0
        %885 = vmatprep.subr.mxu0 0.0
        %886 = vmatpush1.xpose.msra.mxu0 %v883
        %887 = vmatprep.subr.mxu0 0.0
        %888 = vmatpush1.xpose.msra.mxu0 0.0
        %889 = vmatprep.subr.mxu0 0.0
        %890 = vmatpush1.xpose.msra.mxu0 0.0
        %891 = vmatprep.subr.mxu0 0.0
        %892 = vmatpush1.xpose.msra.mxu0 0.0
        %893 = vmatprep.subr.mxu0 0.0
        %894 = vmatpush1.xpose.msra.mxu0 0.0
        %895 = vmatprep.subr.mxu0 0.0
        %896 = vmatpush1.xpose.msra.mxu0 0.0
        %897 = vmatprep.subr.mxu0 0.0
        %898 = vmatpush1.xpose.msra.mxu0 0.0
        %899 = vmatprep.subr.mxu0 0.0
        %900 = vmatpush1.xpose.msra.mxu0 0.0
        %901 = vmatprep.subr.mxu0 0.0
        %902 = vmatpush1.xpose.msra.mxu0 0.0
        %903 = vmatprep.subr.mxu0 0.0
        %904 = vmatpush1.xpose.msra.mxu0 0.0
        %905 = vmatprep.subr.mxu0 0.0
        %906 = vmatpush1.xpose.msra.mxu0 0.0
        %907 = vmatprep.subr.mxu0 0.0
        %908 = vmatpush1.xpose.msra.mxu0 0.0
        %909 = vmatprep.subr.mxu0 0.0
        %910 = vmatpush1.xpose.msra.mxu0 0.0
        %911 = vmatprep.subr.mxu0 0.0
        %912 = vmatpush1.xpose.msra.mxu0 0.0
        %913 = vmatprep.subr.mxu0 0.0
        %914 = vmatpush1.xpose.msra.mxu0 0.0
        %915 = vmatprep.subr.mxu0 0.0
        %916 = vmatpush1.xpose.msra.mxu0 0.0
        %917 = vmatprep.subr.mxu0 0.0
        %918 = vmatpush1.xpose.msra.mxu0 0.0
        %919 = vmatprep.subr.mxu0 0.0
        %920 = vmatpush1.xpose.msra.mxu0 0.0
        %921 = vmatprep.subr.mxu0 0.0
        %922 = vmatpush1.xpose.msra.mxu0 0.0
        %923 = vmatprep.subr.mxu0 0.0
        %924 = vmatpush1.xpose.msra.mxu0 0.0
        %925 = vmatprep.subr.mxu0 0.0
        %926 = vmatpush1.xpose.msra.mxu0 0.0
        %927 = vmatprep.subr.mxu0 0.0
        %928 = vmatpush1.xpose.msra.mxu0 0.0
        %929 = vmatprep.subr.mxu0 0.0
        %930 = vmatpush1.xpose.msra.mxu0 0.0
        %931 = vmatprep.subr.mxu0 0.0
        %932 = vmatpush1.xpose.msra.mxu0 0.0
        %933 = vmatprep.subr.mxu0 0.0
        %934 = vmatpush1.xpose.msra.mxu0 0.0
        %935 = vmatprep.subr.mxu0 0.0
        %936 = vmatpush1.xpose.msra.mxu0 0.0
        %937 = vmatprep.subr.mxu0 0.0
        %938 = vmatpush1.xpose.msra.mxu0 0.0
        %939 = vmatprep.subr.mxu0 0.0
        %940 = vmatpush1.xpose.msra.mxu0 0.0
        %941 = vmatprep.subr.mxu0 0.0
        %942 = vmatpush1.xpose.msra.mxu0 0.0
        %943 = vmatprep.subr.mxu0 0.0
        %944 = vmatpush1.xpose.msra.mxu0 0.0
        %945 = vmatprep.subr.mxu0 0.0
        %946 = vmatpush1.xpose.msra.mxu0 0.0
        %947 = vmatprep.subr.mxu0 0.0
        %948 = vmatpush1.xpose.msra.mxu0 0.0
        %949 = vmatprep.mubr.f32.mxu0 0.0
        %950 = vmatmul.mubr.f32.gmra.mrb[0].mxu0 %v881
        %v951 = vpop.f32.mrb[0].mxu0
        %v952 = vadd.f32 %v870, %v951
        %v953 = vpop.f32.mrb[0].mxu0
        %954 = vdwg.mxu0
        %956 = vrot.lane.b32.xlu0 %v863, 64
        %v957 = vpop.permute.xlu0 %956
        %v958 = vsel %vm880, %v863, 0
        %v960 = vsel %vm880, %v957, 0
        %962 = vmatprep.subr.mxu0 0.0
        %963 = vmatpush1.xpose.msra.mxu0 %v960
        %964 = vmatprep.subr.mxu0 0.0
        %965 = vmatpush1.xpose.msra.mxu0 0.0
        %966 = vmatprep.subr.mxu0 0.0
        %967 = vmatpush1.xpose.msra.mxu0 0.0
        %968 = vmatprep.subr.mxu0 0.0
        %969 = vmatpush1.xpose.msra.mxu0 0.0
        %970 = vmatprep.subr.mxu0 0.0
        %971 = vmatpush1.xpose.msra.mxu0 0.0
        %972 = vmatprep.subr.mxu0 0.0
        %973 = vmatpush1.xpose.msra.mxu0 0.0
        %974 = vmatprep.subr.mxu0 0.0
        %975 = vmatpush1.xpose.msra.mxu0 0.0
        %976 = vmatprep.subr.mxu0 0.0
        %977 = vmatpush1.xpose.msra.mxu0 0.0
        %978 = vmatprep.subr.mxu0 0.0
        %979 = vmatpush1.xpose.msra.mxu0 0.0
        %980 = vmatprep.subr.mxu0 0.0
        %981 = vmatpush1.xpose.msra.mxu0 0.0
        %982 = vmatprep.subr.mxu0 0.0
        %983 = vmatpush1.xpose.msra.mxu0 0.0
        %984 = vmatprep.subr.mxu0 0.0
        %985 = vmatpush1.xpose.msra.mxu0 0.0
        %986 = vmatprep.subr.mxu0 0.0
        %987 = vmatpush1.xpose.msra.mxu0 0.0
        %988 = vmatprep.subr.mxu0 0.0
        %989 = vmatpush1.xpose.msra.mxu0 0.0
        %990 = vmatprep.subr.mxu0 0.0
        %991 = vmatpush1.xpose.msra.mxu0 0.0
        %992 = vmatprep.subr.mxu0 0.0
        %993 = vmatpush1.xpose.msra.mxu0 0.0
        %994 = vmatprep.subr.mxu0 0.0
        %995 = vmatpush1.xpose.msra.mxu0 0.0
        %996 = vmatprep.subr.mxu0 0.0
        %997 = vmatpush1.xpose.msra.mxu0 0.0
        %998 = vmatprep.subr.mxu0 0.0
        %999 = vmatpush1.xpose.msra.mxu0 0.0
        %1000 = vmatprep.subr.mxu0 0.0
        %1001 = vmatpush1.xpose.msra.mxu0 0.0
        %1002 = vmatprep.subr.mxu0 0.0
        %1003 = vmatpush1.xpose.msra.mxu0 0.0
        %1004 = vmatprep.subr.mxu0 0.0
        %1005 = vmatpush1.xpose.msra.mxu0 0.0
        %1006 = vmatprep.subr.mxu0 0.0
        %1007 = vmatpush1.xpose.msra.mxu0 0.0
        %1008 = vmatprep.subr.mxu0 0.0
        %1009 = vmatpush1.xpose.msra.mxu0 0.0
        %1010 = vmatprep.subr.mxu0 0.0
        %1011 = vmatpush1.xpose.msra.mxu0 0.0
        %1012 = vmatprep.subr.mxu0 0.0
        %1013 = vmatpush1.xpose.msra.mxu0 0.0
        %1014 = vmatprep.subr.mxu0 0.0
        %1015 = vmatpush1.xpose.msra.mxu0 0.0
        %1016 = vmatprep.subr.mxu0 0.0
        %1017 = vmatpush1.xpose.msra.mxu0 0.0
        %1018 = vmatprep.subr.mxu0 0.0
        %1019 = vmatpush1.xpose.msra.mxu0 0.0
        %1020 = vmatprep.subr.mxu0 0.0
        %1021 = vmatpush1.xpose.msra.mxu0 0.0
        %1022 = vmatprep.subr.mxu0 0.0
        %1023 = vmatpush1.xpose.msra.mxu0 0.0
        %1024 = vmatprep.subr.mxu0 0.0
        %1025 = vmatpush1.xpose.msra.mxu0 0.0
        %1026 = vmatprep.mubr.f32.mxu0 0.0
        %1027 = vmatmul.mubr.f32.gmra.mrb[0].mxu0 %v958
        %v1028 = vpop.f32.mrb[0].mxu0
        %v1029 = vadd.f32 %v874, %v1028
        %v1030 = vpop.f32.mrb[0].mxu0
        %1031 = vdwg.mxu0
        %vm1032 = vcmask 64512
        %v1033 = vsel %vm1032, %v952, -inf
        %1034 = vmax.xlane.f32.xlu0 %v1033
        %v1035 = vpop.xlane.xlu0 %1034
        %v1036 = vsel %vm1032, %v1029, -inf
        %1037 = vmax.xlane.f32.xlu0 %v1036
        %v1038 = vpop.xlane.xlu0 %1037
        %v1039 = vsub.f32 %v952, %v1035
        %v1040 = vsub.f32 %v1029, %v1038
        %v1041 = vmul.f32 %v1039, 1.442695
        %v1042 = vpow.pop %v1041
        %v1043 = vmul.f32 %v1040, 1.442695
        %v1044 = vpow.pop %v1043
        %v1045 = vsel %vm1032, %v1042, 0.0
        %1046 = vadd.xlane.f32.xlu0 %v1045
        %v1047 = vpop.xlane.xlu0 %1046
        %v1048 = vsel %vm1032, %v1044, 0.0
        %1049 = vadd.xlane.f32.xlu0 %v1048
        %v1050 = vpop.xlane.xlu0 %1049
        %v1051 = vrcp.pop %v1047
        %v1052 = vrcp.pop %v1050
        %v1053 = vmul.f32 %v1042, %v1051
        %v1054 = vmul.f32 %v1044, %v1052
        %v1056 = vsel %vm1032, %v1053, 0
        %1058 = vmatprep.subr.mxu0 0.0
        %1059 = vmatpush1.msra.mxu0 %v859
        %1060 = vmatprep.subr.mxu0 0.0
        %1061 = vmatpush1.msra.mxu0 0.0
        %1062 = vmatprep.subr.mxu0 0.0
        %1063 = vmatpush1.msra.mxu0 0.0
        %1064 = vmatprep.subr.mxu0 0.0
        %1065 = vmatpush1.msra.mxu0 0.0
        %1066 = vmatprep.subr.mxu0 0.0
        %1067 = vmatpush1.msra.mxu0 0.0
        %1068 = vmatprep.subr.mxu0 0.0
        %1069 = vmatpush1.msra.mxu0 0.0
        %1070 = vmatprep.subr.mxu0 0.0
        %1071 = vmatpush1.msra.mxu0 0.0
        %1072 = vmatprep.subr.mxu0 0.0
        %1073 = vmatpush1.msra.mxu0 0.0
        %1074 = vmatprep.subr.mxu0 0.0
        %1075 = vmatpush1.msra.mxu0 0.0
        %1076 = vmatprep.subr.mxu0 0.0
        %1077 = vmatpush1.msra.mxu0 0.0
        %1078 = vmatprep.subr.mxu0 0.0
        %1079 = vmatpush1.msra.mxu0 0.0
        %1080 = vmatprep.subr.mxu0 0.0
        %1081 = vmatpush1.msra.mxu0 0.0
        %1082 = vmatprep.subr.mxu0 0.0
        %1083 = vmatpush1.msra.mxu0 0.0
        %1084 = vmatprep.subr.mxu0 0.0
        %1085 = vmatpush1.msra.mxu0 0.0
        %1086 = vmatprep.subr.mxu0 0.0
        %1087 = vmatpush1.msra.mxu0 0.0
        %1088 = vmatprep.subr.mxu0 0.0
        %1089 = vmatpush1.msra.mxu0 0.0
        %1090 = vmatprep.subr.mxu0 0.0
        %1091 = vmatpush1.msra.mxu0 0.0
        %1092 = vmatprep.subr.mxu0 0.0
        %1093 = vmatpush1.msra.mxu0 0.0
        %1094 = vmatprep.subr.mxu0 0.0
        %1095 = vmatpush1.msra.mxu0 0.0
        %1096 = vmatprep.subr.mxu0 0.0
        %1097 = vmatpush1.msra.mxu0 0.0
        %1098 = vmatprep.subr.mxu0 0.0
        %1099 = vmatpush1.msra.mxu0 0.0
        %1100 = vmatprep.subr.mxu0 0.0
        %1101 = vmatpush1.msra.mxu0 0.0
        %1102 = vmatprep.subr.mxu0 0.0
        %1103 = vmatpush1.msra.mxu0 0.0
        %1104 = vmatprep.subr.mxu0 0.0
        %1105 = vmatpush1.msra.mxu0 0.0
        %1106 = vmatprep.subr.mxu0 0.0
        %1107 = vmatpush1.msra.mxu0 0.0
        %1108 = vmatprep.subr.mxu0 0.0
        %1109 = vmatpush1.msra.mxu0 0.0
        %1110 = vmatprep.subr.mxu0 0.0
        %1111 = vmatpush1.msra.mxu0 0.0
        %1112 = vmatprep.subr.mxu0 0.0
        %1113 = vmatpush1.msra.mxu0 0.0
        %1114 = vmatprep.subr.mxu0 0.0
        %1115 = vmatpush1.msra.mxu0 0.0
        %1116 = vmatprep.subr.mxu0 0.0
        %1117 = vmatpush1.msra.mxu0 0.0
        %1118 = vmatprep.subr.mxu0 0.0
        %1119 = vmatpush1.msra.mxu0 0.0
        %1120 = vmatprep.subr.mxu0 0.0
        %1121 = vmatpush1.msra.mxu0 0.0
        %1122 = vmatprep.mubr.f32.mxu0 0.0
        %1123 = vmatmul.mubr.f32.gmra.mrb[0].mxu0 %v1056
        %v1124 = vpop.f32.mrb[0].mxu0
        %v1125 = vadd.f32 0.0, %v1124
        %v1126 = vpop.f32.mrb[0].mxu0
        %1127 = vdwg.mxu0
        %v1129 = vsel %vm1032, %v1054, 0
        %1131 = vmatprep.subr.mxu0 0.0
        %1132 = vmatpush1.msra.mxu0 %v865
        %1133 = vmatprep.subr.mxu0 0.0
        %1134 = vmatpush1.msra.mxu0 0.0
        %1135 = vmatprep.subr.mxu0 0.0
        %1136 = vmatpush1.msra.mxu0 0.0
        %1137 = vmatprep.subr.mxu0 0.0
        %1138 = vmatpush1.msra.mxu0 0.0
        %1139 = vmatprep.subr.mxu0 0.0
        %1140 = vmatpush1.msra.mxu0 0.0
        %1141 = vmatprep.subr.mxu0 0.0
        %1142 = vmatpush1.msra.mxu0 0.0
        %1143 = vmatprep.subr.mxu0 0.0
        %1144 = vmatpush1.msra.mxu0 0.0
        %1145 = vmatprep.subr.mxu0 0.0
        %1146 = vmatpush1.msra.mxu0 0.0
        %1147 = vmatprep.subr.mxu0 0.0
        %1148 = vmatpush1.msra.mxu0 0.0
        %1149 = vmatprep.subr.mxu0 0.0
        %1150 = vmatpush1.msra.mxu0 0.0
        %1151 = vmatprep.subr.mxu0 0.0
        %1152 = vmatpush1.msra.mxu0 0.0
        %1153 = vmatprep.subr.mxu0 0.0
        %1154 = vmatpush1.msra.mxu0 0.0
        %1155 = vmatprep.subr.mxu0 0.0
        %1156 = vmatpush1.msra.mxu0 0.0
        %1157 = vmatprep.subr.mxu0 0.0
        %1158 = vmatpush1.msra.mxu0 0.0
        %1159 = vmatprep.subr.mxu0 0.0
        %1160 = vmatpush1.msra.mxu0 0.0
        %1161 = vmatprep.subr.mxu0 0.0
        %1162 = vmatpush1.msra.mxu0 0.0
        %1163 = vmatprep.subr.mxu0 0.0
        %1164 = vmatpush1.msra.mxu0 0.0
        %1165 = vmatprep.subr.mxu0 0.0
        %1166 = vmatpush1.msra.mxu0 0.0
        %1167 = vmatprep.subr.mxu0 0.0
        %1168 = vmatpush1.msra.mxu0 0.0
        %1169 = vmatprep.subr.mxu0 0.0
        %1170 = vmatpush1.msra.mxu0 0.0
        %1171 = vmatprep.subr.mxu0 0.0
        %1172 = vmatpush1.msra.mxu0 0.0
        %1173 = vmatprep.subr.mxu0 0.0
        %1174 = vmatpush1.msra.mxu0 0.0
        %1175 = vmatprep.subr.mxu0 0.0
        %1176 = vmatpush1.msra.mxu0 0.0
        %1177 = vmatprep.subr.mxu0 0.0
        %1178 = vmatpush1.msra.mxu0 0.0
        %1179 = vmatprep.subr.mxu0 0.0
        %1180 = vmatpush1.msra.mxu0 0.0
        %1181 = vmatprep.subr.mxu0 0.0
        %1182 = vmatpush1.msra.mxu0 0.0
        %1183 = vmatprep.subr.mxu0 0.0
        %1184 = vmatpush1.msra.mxu0 0.0
        %1185 = vmatprep.subr.mxu0 0.0
        %1186 = vmatpush1.msra.mxu0 0.0
        %1187 = vmatprep.subr.mxu0 0.0
        %1188 = vmatpush1.msra.mxu0 0.0
        %1189 = vmatprep.subr.mxu0 0.0
        %1190 = vmatpush1.msra.mxu0 0.0
        %1191 = vmatprep.subr.mxu0 0.0
        %1192 = vmatpush1.msra.mxu0 0.0
        %1193 = vmatprep.subr.mxu0 0.0
        %1194 = vmatpush1.msra.mxu0 0.0
        %1195 = vmatprep.mubr.f32.mxu0 0.0
        %1196 = vmatmul.mubr.f32.gmra.mrb[0].mxu0 %v1129
        %v1197 = vpop.f32.mrb[0].mxu0
        %v1198 = vadd.f32 0.0, %v1197
        %v1199 = vpop.f32.mrb[0].mxu0
        %1200 = vdwg.mxu0
        %1201 = vrot.lane.b32.xlu0 %v857, 112
        %v1202 = vpop.permute.xlu0 %1201
        %1203 = vrot.lane.b32.xlu0 %v857, 48
        %v1204 = vpop.permute.xlu0 %1203
        %v1205 = vsel %vm880, %v1202, 0
        %v1207 = vsel %vm880, %v1204, 0
        %1209 = vmatprep.subr.mxu0 0.0
        %1210 = vmatpush1.xpose.msra.mxu0 %v1207
        %1211 = vmatprep.subr.mxu0 0.0
        %1212 = vmatpush1.xpose.msra.mxu0 0.0
        %1213 = vmatprep.subr.mxu0 0.0
        %1214 = vmatpush1.xpose.msra.mxu0 0.0
        %1215 = vmatprep.subr.mxu0 0.0
        %1216 = vmatpush1.xpose.msra.mxu0 0.0
        %1217 = vmatprep.subr.mxu0 0.0
        %1218 = vmatpush1.xpose.msra.mxu0 0.0
        %1219 = vmatprep.subr.mxu0 0.0
        %1220 = vmatpush1.xpose.msra.mxu0 0.0
        %1221 = vmatprep.subr.mxu0 0.0
        %1222 = vmatpush1.xpose.msra.mxu0 0.0
        %1223 = vmatprep.subr.mxu0 0.0
        %1224 = vmatpush1.xpose.msra.mxu0 0.0
        %1225 = vmatprep.subr.mxu0 0.0
        %1226 = vmatpush1.xpose.msra.mxu0 0.0
        %1227 = vmatprep.subr.mxu0 0.0
        %1228 = vmatpush1.xpose.msra.mxu0 0.0
        %1229 = vmatprep.subr.mxu0 0.0
        %1230 = vmatpush1.xpose.msra.mxu0 0.0
        %1231 = vmatprep.subr.mxu0 0.0
        %1232 = vmatpush1.xpose.msra.mxu0 0.0
        %1233 = vmatprep.subr.mxu0 0.0
        %1234 = vmatpush1.xpose.msra.mxu0 0.0
        %1235 = vmatprep.subr.mxu0 0.0
        %1236 = vmatpush1.xpose.msra.mxu0 0.0
        %1237 = vmatprep.subr.mxu0 0.0
        %1238 = vmatpush1.xpose.msra.mxu0 0.0
        %1239 = vmatprep.subr.mxu0 0.0
        %1240 = vmatpush1.xpose.msra.mxu0 0.0
        %1241 = vmatprep.subr.mxu0 0.0
        %1242 = vmatpush1.xpose.msra.mxu0 0.0
        %1243 = vmatprep.subr.mxu0 0.0
        %1244 = vmatpush1.xpose.msra.mxu0 0.0
        %1245 = vmatprep.subr.mxu0 0.0
        %1246 = vmatpush1.xpose.msra.mxu0 0.0
        %1247 = vmatprep.subr.mxu0 0.0
        %1248 = vmatpush1.xpose.msra.mxu0 0.0
        %1249 = vmatprep.subr.mxu0 0.0
        %1250 = vmatpush1.xpose.msra.mxu0 0.0
        %1251 = vmatprep.subr.mxu0 0.0
        %1252 = vmatpush1.xpose.msra.mxu0 0.0
        %1253 = vmatprep.subr.mxu0 0.0
        %1254 = vmatpush1.xpose.msra.mxu0 0.0
        %1255 = vmatprep.subr.mxu0 0.0
        %1256 = vmatpush1.xpose.msra.mxu0 0.0
        %1257 = vmatprep.subr.mxu0 0.0
        %1258 = vmatpush1.xpose.msra.mxu0 0.0
        %1259 = vmatprep.subr.mxu0 0.0
        %1260 = vmatpush1.xpose.msra.mxu0 0.0
        %1261 = vmatprep.subr.mxu0 0.0
        %1262 = vmatpush1.xpose.msra.mxu0 0.0
        %1263 = vmatprep.subr.mxu0 0.0
        %1264 = vmatpush1.xpose.msra.mxu0 0.0
        %1265 = vmatprep.subr.mxu0 0.0
        %1266 = vmatpush1.xpose.msra.mxu0 0.0
        %1267 = vmatprep.subr.mxu0 0.0
        %1268 = vmatpush1.xpose.msra.mxu0 0.0
        %1269 = vmatprep.subr.mxu0 0.0
        %1270 = vmatpush1.xpose.msra.mxu0 0.0
        %1271 = vmatprep.subr.mxu0 0.0
        %1272 = vmatpush1.xpose.msra.mxu0 0.0
        %1273 = vmatprep.mubr.f32.mxu0 0.0
        %1274 = vmatmul.mubr.f32.gmra.mrb[0].mxu0 %v1205
        %v1275 = vpop.f32.mrb[0].mxu0
        %v1276 = vadd.f32 %v870, %v1275
        %v1277 = vpop.f32.mrb[0].mxu0
        %1278 = vdwg.mxu0
        %1279 = vrot.lane.b32.xlu0 %v863, 112
        %v1280 = vpop.permute.xlu0 %1279
        %1281 = vrot.lane.b32.xlu0 %v863, 48
        %v1282 = vpop.permute.xlu0 %1281
        %v1283 = vsel %vm880, %v1280, 0
        %v1285 = vsel %vm880, %v1282, 0
        %1287 = vmatprep.subr.mxu0 0.0
        %1288 = vmatpush1.xpose.msra.mxu0 %v1285
        %1289 = vmatprep.subr.mxu0 0.0
        %1290 = vmatpush1.xpose.msra.mxu0 0.0
        %1291 = vmatprep.subr.mxu0 0.0
        %1292 = vmatpush1.xpose.msra.mxu0 0.0
        %1293 = vmatprep.subr.mxu0 0.0
        %1294 = vmatpush1.xpose.msra.mxu0 0.0
        %1295 = vmatprep.subr.mxu0 0.0
        %1296 = vmatpush1.xpose.msra.mxu0 0.0
        %1297 = vmatprep.subr.mxu0 0.0
        %1298 = vmatpush1.xpose.msra.mxu0 0.0
        %1299 = vmatprep.subr.mxu0 0.0
        %1300 = vmatpush1.xpose.msra.mxu0 0.0
        %1301 = vmatprep.subr.mxu0 0.0
        %1302 = vmatpush1.xpose.msra.mxu0 0.0
        %1303 = vmatprep.subr.mxu0 0.0
        %1304 = vmatpush1.xpose.msra.mxu0 0.0
        %1305 = vmatprep.subr.mxu0 0.0
        %1306 = vmatpush1.xpose.msra.mxu0 0.0
        %1307 = vmatprep.subr.mxu0 0.0
        %1308 = vmatpush1.xpose.msra.mxu0 0.0
        %1309 = vmatprep.subr.mxu0 0.0
        %1310 = vmatpush1.xpose.msra.mxu0 0.0
        %1311 = vmatprep.subr.mxu0 0.0
        %1312 = vmatpush1.xpose.msra.mxu0 0.0
        %1313 = vmatprep.subr.mxu0 0.0
        %1314 = vmatpush1.xpose.msra.mxu0 0.0
        %1315 = vmatprep.subr.mxu0 0.0
        %1316 = vmatpush1.xpose.msra.mxu0 0.0
        %1317 = vmatprep.subr.mxu0 0.0
        %1318 = vmatpush1.xpose.msra.mxu0 0.0
        %1319 = vmatprep.subr.mxu0 0.0
        %1320 = vmatpush1.xpose.msra.mxu0 0.0
        %1321 = vmatprep.subr.mxu0 0.0
        %1322 = vmatpush1.xpose.msra.mxu0 0.0
        %1323 = vmatprep.subr.mxu0 0.0
        %1324 = vmatpush1.xpose.msra.mxu0 0.0
        %1325 = vmatprep.subr.mxu0 0.0
        %1326 = vmatpush1.xpose.msra.mxu0 0.0
        %1327 = vmatprep.subr.mxu0 0.0
        %1328 = vmatpush1.xpose.msra.mxu0 0.0
        %1329 = vmatprep.subr.mxu0 0.0
        %1330 = vmatpush1.xpose.msra.mxu0 0.0
        %1331 = vmatprep.subr.mxu0 0.0
        %1332 = vmatpush1.xpose.msra.mxu0 0.0
        %1333 = vmatprep.subr.mxu0 0.0
        %1334 = vmatpush1.xpose.msra.mxu0 0.0
        %1335 = vmatprep.subr.mxu0 0.0
        %1336 = vmatpush1.xpose.msra.mxu0 0.0
        %1337 = vmatprep.subr.mxu0 0.0
        %1338 = vmatpush1.xpose.msra.mxu0 0.0
        %1339 = vmatprep.subr.mxu0 0.0
        %1340 = vmatpush1.xpose.msra.mxu0 0.0
        %1341 = vmatprep.subr.mxu0 0.0
        %1342 = vmatpush1.xpose.msra.mxu0 0.0
        %1343 = vmatprep.subr.mxu0 0.0
        %1344 = vmatpush1.xpose.msra.mxu0 0.0
        %1345 = vmatprep.subr.mxu0 0.0
        %1346 = vmatpush1.xpose.msra.mxu0 0.0
        %1347 = vmatprep.subr.mxu0 0.0
        %1348 = vmatpush1.xpose.msra.mxu0 0.0
        %1349 = vmatprep.subr.mxu0 0.0
        %1350 = vmatpush1.xpose.msra.mxu0 0.0
        %1351 = vmatprep.mubr.f32.mxu0 0.0
        %1352 = vmatmul.mubr.f32.gmra.mrb[0].mxu0 %v1283
        %v1353 = vpop.f32.mrb[0].mxu0
        %v1354 = vadd.f32 %v874, %v1353
        %v1355 = vpop.f32.mrb[0].mxu0
        %1356 = vdwg.mxu0
        %v1357 = vsel %vm1032, %v1276, -inf
        %1358 = vmax.xlane.f32.xlu0 %v1357
        %v1359 = vpop.xlane.xlu0 %1358
        %v1360 = vsel %vm1032, %v1354, -inf
        %1361 = vmax.xlane.f32.xlu0 %v1360
        %v1362 = vpop.xlane.xlu0 %1361
        %v1363 = vsub.f32 %v1276, %v1359
        %v1364 = vsub.f32 %v1354, %v1362
        %v1365 = vmul.f32 %v1363, 1.442695
        %v1366 = vpow.pop %v1365
        %v1367 = vmul.f32 %v1364, 1.442695
        %v1368 = vpow.pop %v1367
        %v1369 = vsel %vm1032, %v1366, 0.0
        %1370 = vadd.xlane.f32.xlu0 %v1369
        %v1371 = vpop.xlane.xlu0 %1370
        %v1372 = vsel %vm1032, %v1368, 0.0
        %1373 = vadd.xlane.f32.xlu0 %v1372
        %v1374 = vpop.xlane.xlu0 %1373
        %v1375 = vrcp.pop %v1371
        %v1376 = vrcp.pop %v1374
        %v1377 = vmul.f32 %v1366, %v1375
        %v1378 = vmul.f32 %v1368, %v1376
        %1380 = vrot.lane.b32.xlu0 %v859, 112
        %v1381 = vpop.permute.xlu0 %1380
        %v1384 = vsel %vm1032, %v1377, 0
        %1386 = vmatprep.subr.mxu0 0.0
        %1387 = vmatpush1.msra.mxu0 %v1381
        %1388 = vmatprep.subr.mxu0 0.0
        %1389 = vmatpush1.msra.mxu0 0.0
        %1390 = vmatprep.subr.mxu0 0.0
        %1391 = vmatpush1.msra.mxu0 0.0
        %1392 = vmatprep.subr.mxu0 0.0
        %1393 = vmatpush1.msra.mxu0 0.0
        %1394 = vmatprep.subr.mxu0 0.0
        %1395 = vmatpush1.msra.mxu0 0.0
        %1396 = vmatprep.subr.mxu0 0.0
        %1397 = vmatpush1.msra.mxu0 0.0
        %1398 = vmatprep.subr.mxu0 0.0
        %1399 = vmatpush1.msra.mxu0 0.0
        %1400 = vmatprep.subr.mxu0 0.0
        %1401 = vmatpush1.msra.mxu0 0.0
        %1402 = vmatprep.subr.mxu0 0.0
        %1403 = vmatpush1.msra.mxu0 0.0
        %1404 = vmatprep.subr.mxu0 0.0
        %1405 = vmatpush1.msra.mxu0 0.0
        %1406 = vmatprep.subr.mxu0 0.0
        %1407 = vmatpush1.msra.mxu0 0.0
        %1408 = vmatprep.subr.mxu0 0.0
        %1409 = vmatpush1.msra.mxu0 0.0
        %1410 = vmatprep.subr.mxu0 0.0
        %1411 = vmatpush1.msra.mxu0 0.0
        %1412 = vmatprep.subr.mxu0 0.0
        %1413 = vmatpush1.msra.mxu0 0.0
        %1414 = vmatprep.subr.mxu0 0.0
        %1415 = vmatpush1.msra.mxu0 0.0
        %1416 = vmatprep.subr.mxu0 0.0
        %1417 = vmatpush1.msra.mxu0 0.0
        %1418 = vmatprep.subr.mxu0 0.0
        %1419 = vmatpush1.msra.mxu0 0.0
        %1420 = vmatprep.subr.mxu0 0.0
        %1421 = vmatpush1.msra.mxu0 0.0
        %1422 = vmatprep.subr.mxu0 0.0
        %1423 = vmatpush1.msra.mxu0 0.0
        %1424 = vmatprep.subr.mxu0 0.0
        %1425 = vmatpush1.msra.mxu0 0.0
        %1426 = vmatprep.subr.mxu0 0.0
        %1427 = vmatpush1.msra.mxu0 0.0
        %1428 = vmatprep.subr.mxu0 0.0
        %1429 = vmatpush1.msra.mxu0 0.0
        %1430 = vmatprep.subr.mxu0 0.0
        %1431 = vmatpush1.msra.mxu0 0.0
        %1432 = vmatprep.subr.mxu0 0.0
        %1433 = vmatpush1.msra.mxu0 0.0
        %1434 = vmatprep.subr.mxu0 0.0
        %1435 = vmatpush1.msra.mxu0 0.0
        %1436 = vmatprep.subr.mxu0 0.0
        %1437 = vmatpush1.msra.mxu0 0.0
        %1438 = vmatprep.subr.mxu0 0.0
        %1439 = vmatpush1.msra.mxu0 0.0
        %1440 = vmatprep.subr.mxu0 0.0
        %1441 = vmatpush1.msra.mxu0 0.0
        %1442 = vmatprep.subr.mxu0 0.0
        %1443 = vmatpush1.msra.mxu0 0.0
        %1444 = vmatprep.subr.mxu0 0.0
        %1445 = vmatpush1.msra.mxu0 0.0
        %1446 = vmatprep.subr.mxu0 0.0
        %1447 = vmatpush1.msra.mxu0 0.0
        %1448 = vmatprep.subr.mxu0 0.0
        %1449 = vmatpush1.msra.mxu0 0.0
        %1450 = vmatprep.mubr.f32.mxu0 0.0
        %1451 = vmatmul.mubr.f32.gmra.mrb[0].mxu0 %v1384
        %v1452 = vpop.f32.mrb[0].mxu0
        %v1453 = vadd.f32 0.0, %v1452
        %v1454 = vpop.f32.mrb[0].mxu0
        %1455 = vdwg.mxu0
        %1457 = vrot.lane.b32.xlu0 %v865, 112
        %v1458 = vpop.permute.xlu0 %1457
        %v1461 = vsel %vm1032, %v1378, 0
        %1463 = vmatprep.subr.mxu0 0.0
        %1464 = vmatpush1.msra.mxu0 %v1458
        %1465 = vmatprep.subr.mxu0 0.0
        %1466 = vmatpush1.msra.mxu0 0.0
        %1467 = vmatprep.subr.mxu0 0.0
        %1468 = vmatpush1.msra.mxu0 0.0
        %1469 = vmatprep.subr.mxu0 0.0
        %1470 = vmatpush1.msra.mxu0 0.0
        %1471 = vmatprep.subr.mxu0 0.0
        %1472 = vmatpush1.msra.mxu0 0.0
        %1473 = vmatprep.subr.mxu0 0.0
        %1474 = vmatpush1.msra.mxu0 0.0
        %1475 = vmatprep.subr.mxu0 0.0
        %1476 = vmatpush1.msra.mxu0 0.0
        %1477 = vmatprep.subr.mxu0 0.0
        %1478 = vmatpush1.msra.mxu0 0.0
        %1479 = vmatprep.subr.mxu0 0.0
        %1480 = vmatpush1.msra.mxu0 0.0
        %1481 = vmatprep.subr.mxu0 0.0
        %1482 = vmatpush1.msra.mxu0 0.0
        %1483 = vmatprep.subr.mxu0 0.0
        %1484 = vmatpush1.msra.mxu0 0.0
        %1485 = vmatprep.subr.mxu0 0.0
        %1486 = vmatpush1.msra.mxu0 0.0
        %1487 = vmatprep.subr.mxu0 0.0
        %1488 = vmatpush1.msra.mxu0 0.0
        %1489 = vmatprep.subr.mxu0 0.0
        %1490 = vmatpush1.msra.mxu0 0.0
        %1491 = vmatprep.subr.mxu0 0.0
        %1492 = vmatpush1.msra.mxu0 0.0
        %1493 = vmatprep.subr.mxu0 0.0
        %1494 = vmatpush1.msra.mxu0 0.0
        %1495 = vmatprep.subr.mxu0 0.0
        %1496 = vmatpush1.msra.mxu0 0.0
        %1497 = vmatprep.subr.mxu0 0.0
        %1498 = vmatpush1.msra.mxu0 0.0
        %1499 = vmatprep.subr.mxu0 0.0
        %1500 = vmatpush1.msra.mxu0 0.0
        %1501 = vmatprep.subr.mxu0 0.0
        %1502 = vmatpush1.msra.mxu0 0.0
        %1503 = vmatprep.subr.mxu0 0.0
        %1504 = vmatpush1.msra.mxu0 0.0
        %1505 = vmatprep.subr.mxu0 0.0
        %1506 = vmatpush1.msra.mxu0 0.0
        %1507 = vmatprep.subr.mxu0 0.0
        %1508 = vmatpush1.msra.mxu0 0.0
        %1509 = vmatprep.subr.mxu0 0.0
        %1510 = vmatpush1.msra.mxu0 0.0
        %1511 = vmatprep.subr.mxu0 0.0
        %1512 = vmatpush1.msra.mxu0 0.0
        %1513 = vmatprep.subr.mxu0 0.0
        %1514 = vmatpush1.msra.mxu0 0.0
        %1515 = vmatprep.subr.mxu0 0.0
        %1516 = vmatpush1.msra.mxu0 0.0
        %1517 = vmatprep.subr.mxu0 0.0
        %1518 = vmatpush1.msra.mxu0 0.0
        %1519 = vmatprep.subr.mxu0 0.0
        %1520 = vmatpush1.msra.mxu0 0.0
        %1521 = vmatprep.subr.mxu0 0.0
        %1522 = vmatpush1.msra.mxu0 0.0
        %1523 = vmatprep.subr.mxu0 0.0
        %1524 = vmatpush1.msra.mxu0 0.0
        %1525 = vmatprep.subr.mxu0 0.0
        %1526 = vmatpush1.msra.mxu0 0.0
        %1527 = vmatprep.mubr.f32.mxu0 0.0
        %1528 = vmatmul.mubr.f32.gmra.mrb[0].mxu0 %v1461
        %v1529 = vpop.f32.mrb[0].mxu0
        %v1530 = vadd.f32 0.0, %v1529
        %v1531 = vpop.f32.mrb[0].mxu0
        %1532 = vdwg.mxu0
        %1533 = vrot.lane.b32.xlu0 %v857, 96
        %v1534 = vpop.permute.xlu0 %1533
        %1535 = vrot.lane.b32.xlu0 %v857, 32
        %v1536 = vpop.permute.xlu0 %1535
        %v1537 = vsel %vm880, %v1534, 0
        %v1539 = vsel %vm880, %v1536, 0
        %1541 = vmatprep.subr.mxu0 0.0
        %1542 = vmatpush1.xpose.msra.mxu0 %v1539
        %1543 = vmatprep.subr.mxu0 0.0
        %1544 = vmatpush1.xpose.msra.mxu0 0.0
        %1545 = vmatprep.subr.mxu0 0.0
        %1546 = vmatpush1.xpose.msra.mxu0 0.0
        %1547 = vmatprep.subr.mxu0 0.0
        %1548 = vmatpush1.xpose.msra.mxu0 0.0
        %1549 = vmatprep.subr.mxu0 0.0
        %1550 = vmatpush1.xpose.msra.mxu0 0.0
        %1551 = vmatprep.subr.mxu0 0.0
        %1552 = vmatpush1.xpose.msra.mxu0 0.0
        %1553 = vmatprep.subr.mxu0 0.0
        %1554 = vmatpush1.xpose.msra.mxu0 0.0
        %1555 = vmatprep.subr.mxu0 0.0
        %1556 = vmatpush1.xpose.msra.mxu0 0.0
        %1557 = vmatprep.subr.mxu0 0.0
        %1558 = vmatpush1.xpose.msra.mxu0 0.0
        %1559 = vmatprep.subr.mxu0 0.0
        %1560 = vmatpush1.xpose.msra.mxu0 0.0
        %1561 = vmatprep.subr.mxu0 0.0
        %1562 = vmatpush1.xpose.msra.mxu0 0.0
        %1563 = vmatprep.subr.mxu0 0.0
        %1564 = vmatpush1.xpose.msra.mxu0 0.0
        %1565 = vmatprep.subr.mxu0 0.0
        %1566 = vmatpush1.xpose.msra.mxu0 0.0
        %1567 = vmatprep.subr.mxu0 0.0
        %1568 = vmatpush1.xpose.msra.mxu0 0.0
        %1569 = vmatprep.subr.mxu0 0.0
        %1570 = vmatpush1.xpose.msra.mxu0 0.0
        %1571 = vmatprep.subr.mxu0 0.0
        %1572 = vmatpush1.xpose.msra.mxu0 0.0
        %1573 = vmatprep.subr.mxu0 0.0
        %1574 = vmatpush1.xpose.msra.mxu0 0.0
        %1575 = vmatprep.subr.mxu0 0.0
        %1576 = vmatpush1.xpose.msra.mxu0 0.0
        %1577 = vmatprep.subr.mxu0 0.0
        %1578 = vmatpush1.xpose.msra.mxu0 0.0
        %1579 = vmatprep.subr.mxu0 0.0
        %1580 = vmatpush1.xpose.msra.mxu0 0.0
        %1581 = vmatprep.subr.mxu0 0.0
        %1582 = vmatpush1.xpose.msra.mxu0 0.0
        %1583 = vmatprep.subr.mxu0 0.0
        %1584 = vmatpush1.xpose.msra.mxu0 0.0
        %1585 = vmatprep.subr.mxu0 0.0
        %1586 = vmatpush1.xpose.msra.mxu0 0.0
        %1587 = vmatprep.subr.mxu0 0.0
        %1588 = vmatpush1.xpose.msra.mxu0 0.0
        %1589 = vmatprep.subr.mxu0 0.0
        %1590 = vmatpush1.xpose.msra.mxu0 0.0
        %1591 = vmatprep.subr.mxu0 0.0
        %1592 = vmatpush1.xpose.msra.mxu0 0.0
        %1593 = vmatprep.subr.mxu0 0.0
        %1594 = vmatpush1.xpose.msra.mxu0 0.0
        %1595 = vmatprep.subr.mxu0 0.0
        %1596 = vmatpush1.xpose.msra.mxu0 0.0
        %1597 = vmatprep.subr.mxu0 0.0
        %1598 = vmatpush1.xpose.msra.mxu0 0.0
        %1599 = vmatprep.subr.mxu0 0.0
        %1600 = vmatpush1.xpose.msra.mxu0 0.0
        %1601 = vmatprep.subr.mxu0 0.0
        %1602 = vmatpush1.xpose.msra.mxu0 0.0
        %1603 = vmatprep.subr.mxu0 0.0
        %1604 = vmatpush1.xpose.msra.mxu0 0.0
        %1605 = vmatprep.mubr.f32.mxu0 0.0
        %1606 = vmatmul.mubr.f32.gmra.mrb[0].mxu0 %v1537
        %v1607 = vpop.f32.mrb[0].mxu0
        %v1608 = vadd.f32 %v870, %v1607
        %v1609 = vpop.f32.mrb[0].mxu0
        %1610 = vdwg.mxu0
        %1611 = vrot.lane.b32.xlu0 %v863, 96
        %v1612 = vpop.permute.xlu0 %1611
        %1613 = vrot.lane.b32.xlu0 %v863, 32
        %v1614 = vpop.permute.xlu0 %1613
        %v1615 = vsel %vm880, %v1612, 0
        %v1617 = vsel %vm880, %v1614, 0
        %1619 = vmatprep.subr.mxu0 0.0
        %1620 = vmatpush1.xpose.msra.mxu0 %v1617
        %1621 = vmatprep.subr.mxu0 0.0
        %1622 = vmatpush1.xpose.msra.mxu0 0.0
        %1623 = vmatprep.subr.mxu0 0.0
        %1624 = vmatpush1.xpose.msra.mxu0 0.0
        %1625 = vmatprep.subr.mxu0 0.0
        %1626 = vmatpush1.xpose.msra.mxu0 0.0
        %1627 = vmatprep.subr.mxu0 0.0
        %1628 = vmatpush1.xpose.msra.mxu0 0.0
        %1629 = vmatprep.subr.mxu0 0.0
        %1630 = vmatpush1.xpose.msra.mxu0 0.0
        %1631 = vmatprep.subr.mxu0 0.0
        %1632 = vmatpush1.xpose.msra.mxu0 0.0
        %1633 = vmatprep.subr.mxu0 0.0
        %1634 = vmatpush1.xpose.msra.mxu0 0.0
        %1635 = vmatprep.subr.mxu0 0.0
        %1636 = vmatpush1.xpose.msra.mxu0 0.0
        %1637 = vmatprep.subr.mxu0 0.0
        %1638 = vmatpush1.xpose.msra.mxu0 0.0
        %1639 = vmatprep.subr.mxu0 0.0
        %1640 = vmatpush1.xpose.msra.mxu0 0.0
        %1641 = vmatprep.subr.mxu0 0.0
        %1642 = vmatpush1.xpose.msra.mxu0 0.0
        %1643 = vmatprep.subr.mxu0 0.0
        %1644 = vmatpush1.xpose.msra.mxu0 0.0
        %1645 = vmatprep.subr.mxu0 0.0
        %1646 = vmatpush1.xpose.msra.mxu0 0.0
        %1647 = vmatprep.subr.mxu0 0.0
        %1648 = vmatpush1.xpose.msra.mxu0 0.0
        %1649 = vmatprep.subr.mxu0 0.0
        %1650 = vmatpush1.xpose.msra.mxu0 0.0
        %1651 = vmatprep.subr.mxu0 0.0
        %1652 = vmatpush1.xpose.msra.mxu0 0.0
        %1653 = vmatprep.subr.mxu0 0.0
        %1654 = vmatpush1.xpose.msra.mxu0 0.0
        %1655 = vmatprep.subr.mxu0 0.0
        %1656 = vmatpush1.xpose.msra.mxu0 0.0
        %1657 = vmatprep.subr.mxu0 0.0
        %1658 = vmatpush1.xpose.msra.mxu0 0.0
        %1659 = vmatprep.subr.mxu0 0.0
        %1660 = vmatpush1.xpose.msra.mxu0 0.0
        %1661 = vmatprep.subr.mxu0 0.0
        %1662 = vmatpush1.xpose.msra.mxu0 0.0
        %1663 = vmatprep.subr.mxu0 0.0
        %1664 = vmatpush1.xpose.msra.mxu0 0.0
        %1665 = vmatprep.subr.mxu0 0.0
        %1666 = vmatpush1.xpose.msra.mxu0 0.0
        %1667 = vmatprep.subr.mxu0 0.0
        %1668 = vmatpush1.xpose.msra.mxu0 0.0
        %1669 = vmatprep.subr.mxu0 0.0
        %1670 = vmatpush1.xpose.msra.mxu0 0.0
        %1671 = vmatprep.subr.mxu0 0.0
        %1672 = vmatpush1.xpose.msra.mxu0 0.0
        %1673 = vmatprep.subr.mxu0 0.0
        %1674 = vmatpush1.xpose.msra.mxu0 0.0
        %1675 = vmatprep.subr.mxu0 0.0
        %1676 = vmatpush1.xpose.msra.mxu0 0.0
        %1677 = vmatprep.subr.mxu0 0.0
        %1678 = vmatpush1.xpose.msra.mxu0 0.0
        %1679 = vmatprep.subr.mxu0 0.0
        %1680 = vmatpush1.xpose.msra.mxu0 0.0
        %1681 = vmatprep.subr.mxu0 0.0
        %1682 = vmatpush1.xpose.msra.mxu0 0.0
        %1683 = vmatprep.mubr.f32.mxu0 0.0
        %1684 = vmatmul.mubr.f32.gmra.mrb[0].mxu0 %v1615
        %v1685 = vpop.f32.mrb[0].mxu0
        %v1686 = vadd.f32 %v874, %v1685
        %v1687 = vpop.f32.mrb[0].mxu0
        %1688 = vdwg.mxu0
        %v1689 = vsel %vm1032, %v1608, -inf
        %1690 = vmax.xlane.f32.xlu0 %v1689
        %v1691 = vpop.xlane.xlu0 %1690
        %v1692 = vsel %vm1032, %v1686, -inf
        %1693 = vmax.xlane.f32.xlu0 %v1692
        %v1694 = vpop.xlane.xlu0 %1693
        %v1695 = vsub.f32 %v1608, %v1691
        %v1696 = vsub.f32 %v1686, %v1694
        %v1697 = vmul.f32 %v1695, 1.442695
        %v1698 = vpow.pop %v1697
        %v1699 = vmul.f32 %v1696, 1.442695
        %v1700 = vpow.pop %v1699
        %v1701 = vsel %vm1032, %v1698, 0.0
        %1702 = vadd.xlane.f32.xlu0 %v1701
        %v1703 = vpop.xlane.xlu0 %1702
        %v1704 = vsel %vm1032, %v1700, 0.0
        %1705 = vadd.xlane.f32.xlu0 %v1704
        %v1706 = vpop.xlane.xlu0 %1705
        %v1707 = vrcp.pop %v1703
        %v1708 = vrcp.pop %v1706
        %v1709 = vmul.f32 %v1698, %v1707
        %v1710 = vmul.f32 %v1700, %v1708
        %1711 = vrot.lane.b32.xlu0 %v859, 96
        %v1712 = vpop.permute.xlu0 %1711
        %v1715 = vsel %vm1032, %v1709, 0
        %1717 = vmatprep.subr.mxu0 0.0
        %1718 = vmatpush1.msra.mxu0 %v1712
        %1719 = vmatprep.subr.mxu0 0.0
        %1720 = vmatpush1.msra.mxu0 0.0
        %1721 = vmatprep.subr.mxu0 0.0
        %1722 = vmatpush1.msra.mxu0 0.0
        %1723 = vmatprep.subr.mxu0 0.0
        %1724 = vmatpush1.msra.mxu0 0.0
        %1725 = vmatprep.subr.mxu0 0.0
        %1726 = vmatpush1.msra.mxu0 0.0
        %1727 = vmatprep.subr.mxu0 0.0
        %1728 = vmatpush1.msra.mxu0 0.0
        %1729 = vmatprep.subr.mxu0 0.0
        %1730 = vmatpush1.msra.mxu0 0.0
        %1731 = vmatprep.subr.mxu0 0.0
        %1732 = vmatpush1.msra.mxu0 0.0
        %1733 = vmatprep.subr.mxu0 0.0
        %1734 = vmatpush1.msra.mxu0 0.0
        %1735 = vmatprep.subr.mxu0 0.0
        %1736 = vmatpush1.msra.mxu0 0.0
        %1737 = vmatprep.subr.mxu0 0.0
        %1738 = vmatpush1.msra.mxu0 0.0
        %1739 = vmatprep.subr.mxu0 0.0
        %1740 = vmatpush1.msra.mxu0 0.0
        %1741 = vmatprep.subr.mxu0 0.0
        %1742 = vmatpush1.msra.mxu0 0.0
        %1743 = vmatprep.subr.mxu0 0.0
        %1744 = vmatpush1.msra.mxu0 0.0
        %1745 = vmatprep.subr.mxu0 0.0
        %1746 = vmatpush1.msra.mxu0 0.0
        %1747 = vmatprep.subr.mxu0 0.0
        %1748 = vmatpush1.msra.mxu0 0.0
        %1749 = vmatprep.subr.mxu0 0.0
        %1750 = vmatpush1.msra.mxu0 0.0
        %1751 = vmatprep.subr.mxu0 0.0
        %1752 = vmatpush1.msra.mxu0 0.0
        %1753 = vmatprep.subr.mxu0 0.0
        %1754 = vmatpush1.msra.mxu0 0.0
        %1755 = vmatprep.subr.mxu0 0.0
        %1756 = vmatpush1.msra.mxu0 0.0
        %1757 = vmatprep.subr.mxu0 0.0
        %1758 = vmatpush1.msra.mxu0 0.0
        %1759 = vmatprep.subr.mxu0 0.0
        %1760 = vmatpush1.msra.mxu0 0.0
        %1761 = vmatprep.subr.mxu0 0.0
        %1762 = vmatpush1.msra.mxu0 0.0
        %1763 = vmatprep.subr.mxu0 0.0
        %1764 = vmatpush1.msra.mxu0 0.0
        %1765 = vmatprep.subr.mxu0 0.0
        %1766 = vmatpush1.msra.mxu0 0.0
        %1767 = vmatprep.subr.mxu0 0.0
        %1768 = vmatpush1.msra.mxu0 0.0
        %1769 = vmatprep.subr.mxu0 0.0
        %1770 = vmatpush1.msra.mxu0 0.0
        %1771 = vmatprep.subr.mxu0 0.0
        %1772 = vmatpush1.msra.mxu0 0.0
        %1773 = vmatprep.subr.mxu0 0.0
        %1774 = vmatpush1.msra.mxu0 0.0
        %1775 = vmatprep.subr.mxu0 0.0
        %1776 = vmatpush1.msra.mxu0 0.0
        %1777 = vmatprep.subr.mxu0 0.0
        %1778 = vmatpush1.msra.mxu0 0.0
        %1779 = vmatprep.subr.mxu0 0.0
        %1780 = vmatpush1.msra.mxu0 0.0
        %1781 = vmatprep.mubr.f32.mxu0 0.0
        %1782 = vmatmul.mubr.f32.gmra.mrb[0].mxu0 %v1715
        %v1783 = vpop.f32.mrb[0].mxu0
        %v1784 = vadd.f32 0.0, %v1783
        %v1785 = vpop.f32.mrb[0].mxu0
        %1786 = vdwg.mxu0
        %1787 = vrot.lane.b32.xlu0 %v865, 96
        %v1788 = vpop.permute.xlu0 %1787
        %v1791 = vsel %vm1032, %v1710, 0
        %1793 = vmatprep.subr.mxu0 0.0
        %1794 = vmatpush1.msra.mxu0 %v1788
        %1795 = vmatprep.subr.mxu0 0.0
        %1796 = vmatpush1.msra.mxu0 0.0
        %1797 = vmatprep.subr.mxu0 0.0
        %1798 = vmatpush1.msra.mxu0 0.0
        %1799 = vmatprep.subr.mxu0 0.0
        %1800 = vmatpush1.msra.mxu0 0.0
        %1801 = vmatprep.subr.mxu0 0.0
        %1802 = vmatpush1.msra.mxu0 0.0
        %1803 = vmatprep.subr.mxu0 0.0
        %1804 = vmatpush1.msra.mxu0 0.0
        %1805 = vmatprep.subr.mxu0 0.0
        %1806 = vmatpush1.msra.mxu0 0.0
        %1807 = vmatprep.subr.mxu0 0.0
        %1808 = vmatpush1.msra.mxu0 0.0
        %1809 = vmatprep.subr.mxu0 0.0
        %1810 = vmatpush1.msra.mxu0 0.0
        %1811 = vmatprep.subr.mxu0 0.0
        %1812 = vmatpush1.msra.mxu0 0.0
        %1813 = vmatprep.subr.mxu0 0.0
        %1814 = vmatpush1.msra.mxu0 0.0
        %1815 = vmatprep.subr.mxu0 0.0
        %1816 = vmatpush1.msra.mxu0 0.0
        %1817 = vmatprep.subr.mxu0 0.0
        %1818 = vmatpush1.msra.mxu0 0.0
        %1819 = vmatprep.subr.mxu0 0.0
        %1820 = vmatpush1.msra.mxu0 0.0
        %1821 = vmatprep.subr.mxu0 0.0
        %1822 = vmatpush1.msra.mxu0 0.0
        %1823 = vmatprep.subr.mxu0 0.0
        %1824 = vmatpush1.msra.mxu0 0.0
        %1825 = vmatprep.subr.mxu0 0.0
        %1826 = vmatpush1.msra.mxu0 0.0
        %1827 = vmatprep.subr.mxu0 0.0
        %1828 = vmatpush1.msra.mxu0 0.0
        %1829 = vmatprep.subr.mxu0 0.0
        %1830 = vmatpush1.msra.mxu0 0.0
        %1831 = vmatprep.subr.mxu0 0.0
        %1832 = vmatpush1.msra.mxu0 0.0
        %1833 = vmatprep.subr.mxu0 0.0
        %1834 = vmatpush1.msra.mxu0 0.0
        %1835 = vmatprep.subr.mxu0 0.0
        %1836 = vmatpush1.msra.mxu0 0.0
        %1837 = vmatprep.subr.mxu0 0.0
        %1838 = vmatpush1.msra.mxu0 0.0
        %1839 = vmatprep.subr.mxu0 0.0
        %1840 = vmatpush1.msra.mxu0 0.0
        %1841 = vmatprep.subr.mxu0 0.0
        %1842 = vmatpush1.msra.mxu0 0.0
        %1843 = vmatprep.subr.mxu0 0.0
        %1844 = vmatpush1.msra.mxu0 0.0
        %1845 = vmatprep.subr.mxu0 0.0
        %1846 = vmatpush1.msra.mxu0 0.0
        %1847 = vmatprep.subr.mxu0 0.0
        %1848 = vmatpush1.msra.mxu0 0.0
        %1849 = vmatprep.subr.mxu0 0.0
        %1850 = vmatpush1.msra.mxu0 0.0
        %1851 = vmatprep.subr.mxu0 0.0
        %1852 = vmatpush1.msra.mxu0 0.0
        %1853 = vmatprep.subr.mxu0 0.0
        %1854 = vmatpush1.msra.mxu0 0.0
        %1855 = vmatprep.subr.mxu0 0.0
        %1856 = vmatpush1.msra.mxu0 0.0
        %1857 = vmatprep.mubr.f32.mxu0 0.0
        %1858 = vmatmul.mubr.f32.gmra.mrb[0].mxu0 %v1791
        %v1859 = vpop.f32.mrb[0].mxu0
        %v1860 = vadd.f32 0.0, %v1859
        %v1861 = vpop.f32.mrb[0].mxu0
        %1862 = vdwg.mxu0
        %1863 = vrot.lane.b32.xlu0 %v857, 80
        %v1864 = vpop.permute.xlu0 %1863
        %1865 = vrot.lane.b32.xlu0 %v857, 16
        %v1866 = vpop.permute.xlu0 %1865
        %v1867 = vsel %vm880, %v1864, 0
        %v1869 = vsel %vm880, %v1866, 0
        %1871 = vmatprep.subr.mxu0 0.0
        %1872 = vmatpush1.xpose.msra.mxu0 %v1869
        %1873 = vmatprep.subr.mxu0 0.0
        %1874 = vmatpush1.xpose.msra.mxu0 0.0
        %1875 = vmatprep.subr.mxu0 0.0
        %1876 = vmatpush1.xpose.msra.mxu0 0.0
        %1877 = vmatprep.subr.mxu0 0.0
        %1878 = vmatpush1.xpose.msra.mxu0 0.0
        %1879 = vmatprep.subr.mxu0 0.0
        %1880 = vmatpush1.xpose.msra.mxu0 0.0
        %1881 = vmatprep.subr.mxu0 0.0
        %1882 = vmatpush1.xpose.msra.mxu0 0.0
        %1883 = vmatprep.subr.mxu0 0.0
        %1884 = vmatpush1.xpose.msra.mxu0 0.0
        %1885 = vmatprep.subr.mxu0 0.0
        %1886 = vmatpush1.xpose.msra.mxu0 0.0
        %1887 = vmatprep.subr.mxu0 0.0
        %1888 = vmatpush1.xpose.msra.mxu0 0.0
        %1889 = vmatprep.subr.mxu0 0.0
        %1890 = vmatpush1.xpose.msra.mxu0 0.0
        %1891 = vmatprep.subr.mxu0 0.0
        %1892 = vmatpush1.xpose.msra.mxu0 0.0
        %1893 = vmatprep.subr.mxu0 0.0
        %1894 = vmatpush1.xpose.msra.mxu0 0.0
        %1895 = vmatprep.subr.mxu0 0.0
        %1896 = vmatpush1.xpose.msra.mxu0 0.0
        %1897 = vmatprep.subr.mxu0 0.0
        %1898 = vmatpush1.xpose.msra.mxu0 0.0
        %1899 = vmatprep.subr.mxu0 0.0
        %1900 = vmatpush1.xpose.msra.mxu0 0.0
        %1901 = vmatprep.subr.mxu0 0.0
        %1902 = vmatpush1.xpose.msra.mxu0 0.0
        %1903 = vmatprep.subr.mxu0 0.0
        %1904 = vmatpush1.xpose.msra.mxu0 0.0
        %1905 = vmatprep.subr.mxu0 0.0
        %1906 = vmatpush1.xpose.msra.mxu0 0.0
        %1907 = vmatprep.subr.mxu0 0.0
        %1908 = vmatpush1.xpose.msra.mxu0 0.0
        %1909 = vmatprep.subr.mxu0 0.0
        %1910 = vmatpush1.xpose.msra.mxu0 0.0
        %1911 = vmatprep.subr.mxu0 0.0
        %1912 = vmatpush1.xpose.msra.mxu0 0.0
        %1913 = vmatprep.subr.mxu0 0.0
        %1914 = vmatpush1.xpose.msra.mxu0 0.0
        %1915 = vmatprep.subr.mxu0 0.0
        %1916 = vmatpush1.xpose.msra.mxu0 0.0
        %1917 = vmatprep.subr.mxu0 0.0
        %1918 = vmatpush1.xpose.msra.mxu0 0.0
        %1919 = vmatprep.subr.mxu0 0.0
        %1920 = vmatpush1.xpose.msra.mxu0 0.0
        %1921 = vmatprep.subr.mxu0 0.0
        %1922 = vmatpush1.xpose.msra.mxu0 0.0
        %1923 = vmatprep.subr.mxu0 0.0
        %1924 = vmatpush1.xpose.msra.mxu0 0.0
        %1925 = vmatprep.subr.mxu0 0.0
        %1926 = vmatpush1.xpose.msra.mxu0 0.0
        %1927 = vmatprep.subr.mxu0 0.0
        %1928 = vmatpush1.xpose.msra.mxu0 0.0
        %1929 = vmatprep.subr.mxu0 0.0
        %1930 = vmatpush1.xpose.msra.mxu0 0.0
        %1931 = vmatprep.subr.mxu0 0.0
        %1932 = vmatpush1.xpose.msra.mxu0 0.0
        %1933 = vmatprep.subr.mxu0 0.0
        %1934 = vmatpush1.xpose.msra.mxu0 0.0
        %1935 = vmatprep.mubr.f32.mxu0 0.0
        %1936 = vmatmul.mubr.f32.gmra.mrb[0].mxu0 %v1867
        %v1937 = vpop.f32.mrb[0].mxu0
        %v1938 = vadd.f32 %v870, %v1937
        %v1939 = vpop.f32.mrb[0].mxu0
        %1940 = vdwg.mxu0
        %1941 = vrot.lane.b32.xlu0 %v863, 80
        %v1942 = vpop.permute.xlu0 %1941
        %1943 = vrot.lane.b32.xlu0 %v863, 16
        %v1944 = vpop.permute.xlu0 %1943
        %v1945 = vsel %vm880, %v1942, 0
        %v1947 = vsel %vm880, %v1944, 0
        %1949 = vmatprep.subr.mxu0 0.0
        %1950 = vmatpush1.xpose.msra.mxu0 %v1947
        %1951 = vmatprep.subr.mxu0 0.0
        %1952 = vmatpush1.xpose.msra.mxu0 0.0
        %1953 = vmatprep.subr.mxu0 0.0
        %1954 = vmatpush1.xpose.msra.mxu0 0.0
        %1955 = vmatprep.subr.mxu0 0.0
        %1956 = vmatpush1.xpose.msra.mxu0 0.0
        %1957 = vmatprep.subr.mxu0 0.0
        %1958 = vmatpush1.xpose.msra.mxu0 0.0
        %1959 = vmatprep.subr.mxu0 0.0
        %1960 = vmatpush1.xpose.msra.mxu0 0.0
        %1961 = vmatprep.subr.mxu0 0.0
        %1962 = vmatpush1.xpose.msra.mxu0 0.0
        %1963 = vmatprep.subr.mxu0 0.0
        %1964 = vmatpush1.xpose.msra.mxu0 0.0
        %1965 = vmatprep.subr.mxu0 0.0
        %1966 = vmatpush1.xpose.msra.mxu0 0.0
        %1967 = vmatprep.subr.mxu0 0.0
        %1968 = vmatpush1.xpose.msra.mxu0 0.0
        %1969 = vmatprep.subr.mxu0 0.0
        %1970 = vmatpush1.xpose.msra.mxu0 0.0
        %1971 = vmatprep.subr.mxu0 0.0
        %1972 = vmatpush1.xpose.msra.mxu0 0.0
        %1973 = vmatprep.subr.mxu0 0.0
        %1974 = vmatpush1.xpose.msra.mxu0 0.0
        %1975 = vmatprep.subr.mxu0 0.0
        %1976 = vmatpush1.xpose.msra.mxu0 0.0
        %1977 = vmatprep.subr.mxu0 0.0
        %1978 = vmatpush1.xpose.msra.mxu0 0.0
        %1979 = vmatprep.subr.mxu0 0.0
        %1980 = vmatpush1.xpose.msra.mxu0 0.0
        %1981 = vmatprep.subr.mxu0 0.0
        %1982 = vmatpush1.xpose.msra.mxu0 0.0
        %1983 = vmatprep.subr.mxu0 0.0
        %1984 = vmatpush1.xpose.msra.mxu0 0.0
        %1985 = vmatprep.subr.mxu0 0.0
        %1986 = vmatpush1.xpose.msra.mxu0 0.0
        %1987 = vmatprep.subr.mxu0 0.0
        %1988 = vmatpush1.xpose.msra.mxu0 0.0
        %1989 = vmatprep.subr.mxu0 0.0
        %1990 = vmatpush1.xpose.msra.mxu0 0.0
        %1991 = vmatprep.subr.mxu0 0.0
        %1992 = vmatpush1.xpose.msra.mxu0 0.0
        %1993 = vmatprep.subr.mxu0 0.0
        %1994 = vmatpush1.xpose.msra.mxu0 0.0
        %1995 = vmatprep.subr.mxu0 0.0
        %1996 = vmatpush1.xpose.msra.mxu0 0.0
        %1997 = vmatprep.subr.mxu0 0.0
        %1998 = vmatpush1.xpose.msra.mxu0 0.0
        %1999 = vmatprep.subr.mxu0 0.0
        %2000 = vmatpush1.xpose.msra.mxu0 0.0
        %2001 = vmatprep.subr.mxu0 0.0
        %2002 = vmatpush1.xpose.msra.mxu0 0.0
        %2003 = vmatprep.subr.mxu0 0.0
        %2004 = vmatpush1.xpose.msra.mxu0 0.0
        %2005 = vmatprep.subr.mxu0 0.0
        %2006 = vmatpush1.xpose.msra.mxu0 0.0
        %2007 = vmatprep.subr.mxu0 0.0
        %2008 = vmatpush1.xpose.msra.mxu0 0.0
        %2009 = vmatprep.subr.mxu0 0.0
        %2010 = vmatpush1.xpose.msra.mxu0 0.0
        %2011 = vmatprep.subr.mxu0 0.0
        %2012 = vmatpush1.xpose.msra.mxu0 0.0
        %2013 = vmatprep.mubr.f32.mxu0 0.0
        %2014 = vmatmul.mubr.f32.gmra.mrb[0].mxu0 %v1945
        %v2015 = vpop.f32.mrb[0].mxu0
        %v2016 = vadd.f32 %v874, %v2015
        %v2017 = vpop.f32.mrb[0].mxu0
        %2018 = vdwg.mxu0
        %v2019 = vsel %vm1032, %v1938, -inf
        %2020 = vmax.xlane.f32.xlu0 %v2019
        %v2021 = vpop.xlane.xlu0 %2020
        %v2022 = vsel %vm1032, %v2016, -inf
        %2023 = vmax.xlane.f32.xlu0 %v2022
        %v2024 = vpop.xlane.xlu0 %2023
        %v2025 = vsub.f32 %v1938, %v2021
        %v2026 = vsub.f32 %v2016, %v2024
        %v2027 = vmul.f32 %v2025, 1.442695
        %v2028 = vpow.pop %v2027
        %v2029 = vmul.f32 %v2026, 1.442695
        %v2030 = vpow.pop %v2029
        %v2031 = vsel %vm1032, %v2028, 0.0
        %2032 = vadd.xlane.f32.xlu0 %v2031
        %v2033 = vpop.xlane.xlu0 %2032
        %v2034 = vsel %vm1032, %v2030, 0.0
        %2035 = vadd.xlane.f32.xlu0 %v2034
        %v2036 = vpop.xlane.xlu0 %2035
        %v2037 = vrcp.pop %v2033
        %v2038 = vrcp.pop %v2036
        %v2039 = vmul.f32 %v2028, %v2037
        %v2040 = vmul.f32 %v2030, %v2038
        %2041 = vrot.lane.b32.xlu0 %v859, 80
        %v2042 = vpop.permute.xlu0 %2041
        %v2045 = vsel %vm1032, %v2039, 0
        %2047 = vmatprep.subr.mxu0 0.0
        %2048 = vmatpush1.msra.mxu0 %v2042
        %2049 = vmatprep.subr.mxu0 0.0
        %2050 = vmatpush1.msra.mxu0 0.0
        %2051 = vmatprep.subr.mxu0 0.0
        %2052 = vmatpush1.msra.mxu0 0.0
        %2053 = vmatprep.subr.mxu0 0.0
        %2054 = vmatpush1.msra.mxu0 0.0
        %2055 = vmatprep.subr.mxu0 0.0
        %2056 = vmatpush1.msra.mxu0 0.0
        %2057 = vmatprep.subr.mxu0 0.0
        %2058 = vmatpush1.msra.mxu0 0.0
        %2059 = vmatprep.subr.mxu0 0.0
        %2060 = vmatpush1.msra.mxu0 0.0
        %2061 = vmatprep.subr.mxu0 0.0
        %2062 = vmatpush1.msra.mxu0 0.0
        %2063 = vmatprep.subr.mxu0 0.0
        %2064 = vmatpush1.msra.mxu0 0.0
        %2065 = vmatprep.subr.mxu0 0.0
        %2066 = vmatpush1.msra.mxu0 0.0
        %2067 = vmatprep.subr.mxu0 0.0
        %2068 = vmatpush1.msra.mxu0 0.0
        %2069 = vmatprep.subr.mxu0 0.0
        %2070 = vmatpush1.msra.mxu0 0.0
        %2071 = vmatprep.subr.mxu0 0.0
        %2072 = vmatpush1.msra.mxu0 0.0
        %2073 = vmatprep.subr.mxu0 0.0
        %2074 = vmatpush1.msra.mxu0 0.0
        %2075 = vmatprep.subr.mxu0 0.0
        %2076 = vmatpush1.msra.mxu0 0.0
        %2077 = vmatprep.subr.mxu0 0.0
        %2078 = vmatpush1.msra.mxu0 0.0
        %2079 = vmatprep.subr.mxu0 0.0
        %2080 = vmatpush1.msra.mxu0 0.0
        %2081 = vmatprep.subr.mxu0 0.0
        %2082 = vmatpush1.msra.mxu0 0.0
        %2083 = vmatprep.subr.mxu0 0.0
        %2084 = vmatpush1.msra.mxu0 0.0
        %2085 = vmatprep.subr.mxu0 0.0
        %2086 = vmatpush1.msra.mxu0 0.0
        %2087 = vmatprep.subr.mxu0 0.0
        %2088 = vmatpush1.msra.mxu0 0.0
        %2089 = vmatprep.subr.mxu0 0.0
        %2090 = vmatpush1.msra.mxu0 0.0
        %2091 = vmatprep.subr.mxu0 0.0
        %2092 = vmatpush1.msra.mxu0 0.0
        %2093 = vmatprep.subr.mxu0 0.0
        %2094 = vmatpush1.msra.mxu0 0.0
        %2095 = vmatprep.subr.mxu0 0.0
        %2096 = vmatpush1.msra.mxu0 0.0
        %2097 = vmatprep.subr.mxu0 0.0
        %2098 = vmatpush1.msra.mxu0 0.0
        %2099 = vmatprep.subr.mxu0 0.0
        %2100 = vmatpush1.msra.mxu0 0.0
        %2101 = vmatprep.subr.mxu0 0.0
        %2102 = vmatpush1.msra.mxu0 0.0
        %2103 = vmatprep.subr.mxu0 0.0
        %2104 = vmatpush1.msra.mxu0 0.0
        %2105 = vmatprep.subr.mxu0 0.0
        %2106 = vmatpush1.msra.mxu0 0.0
        %2107 = vmatprep.subr.mxu0 0.0
        %2108 = vmatpush1.msra.mxu0 0.0
        %2109 = vmatprep.subr.mxu0 0.0
        %2110 = vmatpush1.msra.mxu0 0.0
        %2111 = vmatprep.mubr.f32.mxu0 0.0
        %2112 = vmatmul.mubr.f32.gmra.mrb[0].mxu0 %v2045
        %v2113 = vpop.f32.mrb[0].mxu0
        %v2114 = vadd.f32 0.0, %v2113
        %v2115 = vpop.f32.mrb[0].mxu0
        %2116 = vdwg.mxu0
        %2117 = vrot.lane.b32.xlu0 %v865, 80
        %v2118 = vpop.permute.xlu0 %2117
        %v2121 = vsel %vm1032, %v2040, 0
        %2123 = vmatprep.subr.mxu0 0.0
        %2124 = vmatpush1.msra.mxu0 %v2118
        %2125 = vmatprep.subr.mxu0 0.0
        %2126 = vmatpush1.msra.mxu0 0.0
        %2127 = vmatprep.subr.mxu0 0.0
        %2128 = vmatpush1.msra.mxu0 0.0
        %2129 = vmatprep.subr.mxu0 0.0
        %2130 = vmatpush1.msra.mxu0 0.0
        %2131 = vmatprep.subr.mxu0 0.0
        %2132 = vmatpush1.msra.mxu0 0.0
        %2133 = vmatprep.subr.mxu0 0.0
        %2134 = vmatpush1.msra.mxu0 0.0
        %2135 = vmatprep.subr.mxu0 0.0
        %2136 = vmatpush1.msra.mxu0 0.0
        %2137 = vmatprep.subr.mxu0 0.0
        %2138 = vmatpush1.msra.mxu0 0.0
        %2139 = vmatprep.subr.mxu0 0.0
        %2140 = vmatpush1.msra.mxu0 0.0
        %2141 = vmatprep.subr.mxu0 0.0
        %2142 = vmatpush1.msra.mxu0 0.0
        %2143 = vmatprep.subr.mxu0 0.0
        %2144 = vmatpush1.msra.mxu0 0.0
        %2145 = vmatprep.subr.mxu0 0.0
        %2146 = vmatpush1.msra.mxu0 0.0
        %2147 = vmatprep.subr.mxu0 0.0
        %2148 = vmatpush1.msra.mxu0 0.0
        %2149 = vmatprep.subr.mxu0 0.0
        %2150 = vmatpush1.msra.mxu0 0.0
        %2151 = vmatprep.subr.mxu0 0.0
        %2152 = vmatpush1.msra.mxu0 0.0
        %2153 = vmatprep.subr.mxu0 0.0
        %2154 = vmatpush1.msra.mxu0 0.0
        %2155 = vmatprep.subr.mxu0 0.0
        %2156 = vmatpush1.msra.mxu0 0.0
        %2157 = vmatprep.subr.mxu0 0.0
        %2158 = vmatpush1.msra.mxu0 0.0
        %2159 = vmatprep.subr.mxu0 0.0
        %2160 = vmatpush1.msra.mxu0 0.0
        %2161 = vmatprep.subr.mxu0 0.0
        %2162 = vmatpush1.msra.mxu0 0.0
        %2163 = vmatprep.subr.mxu0 0.0
        %2164 = vmatpush1.msra.mxu0 0.0
        %2165 = vmatprep.subr.mxu0 0.0
        %2166 = vmatpush1.msra.mxu0 0.0
        %2167 = vmatprep.subr.mxu0 0.0
        %2168 = vmatpush1.msra.mxu0 0.0
        %2169 = vmatprep.subr.mxu0 0.0
        %2170 = vmatpush1.msra.mxu0 0.0
        %2171 = vmatprep.subr.mxu0 0.0
        %2172 = vmatpush1.msra.mxu0 0.0
        %2173 = vmatprep.subr.mxu0 0.0
        %2174 = vmatpush1.msra.mxu0 0.0
        %2175 = vmatprep.subr.mxu0 0.0
        %2176 = vmatpush1.msra.mxu0 0.0
        %2177 = vmatprep.subr.mxu0 0.0
        %2178 = vmatpush1.msra.mxu0 0.0
        %2179 = vmatprep.subr.mxu0 0.0
        %2180 = vmatpush1.msra.mxu0 0.0
        %2181 = vmatprep.subr.mxu0 0.0
        %2182 = vmatpush1.msra.mxu0 0.0
        %2183 = vmatprep.subr.mxu0 0.0
        %2184 = vmatpush1.msra.mxu0 0.0
        %2185 = vmatprep.subr.mxu0 0.0
        %2186 = vmatpush1.msra.mxu0 0.0
        %2187 = vmatprep.mubr.f32.mxu0 0.0
        %2188 = vmatmul.mubr.f32.gmra.mrb[0].mxu0 %v2121
        %v2189 = vpop.f32.mrb[0].mxu0
        %v2190 = vadd.f32 0.0, %v2189
        %v2191 = vpop.f32.mrb[0].mxu0
        %2192 = vdwg.mxu0
        %2195 = vrot.lane.b32.xlu0 %v1453, 16
        %v2196 = vpop.permute.xlu0 %2195
        %2197 = vrot.lane.b32.xlu0 %v1530, 16
        %v2198 = vpop.permute.xlu0 %2197
        %2203 = vrot.lane.b32.xlu0 %v1784, 32
        %v2204 = vpop.permute.xlu0 %2203
        %2205 = vrot.lane.b32.xlu0 %v1860, 32
        %v2206 = vpop.permute.xlu0 %2205
        %2211 = vrot.lane.b32.xlu0 %v2114, 48
        %v2212 = vpop.permute.xlu0 %2211
        %2213 = vrot.lane.b32.xlu0 %v2190, 48
        %v2214 = vpop.permute.xlu0 %2213
        %v2217 = vsel %vm880, %v1125, %v2196
        %v2218 = vsel %vm880, %v1198, %v2198
        %v2219 = vsel %vm720, %v2217, %v2204
        %v2220 = vsel %vm720, %v2218, %v2206
        %vm2221 = vcmask 392192
        %v2222 = vsel %vm2221, %v2219, %v2212
        %v2223 = vsel %vm2221, %v2220, %v2214
        %v2224 = vld [vmem:[%s657] sm:$0xff]
        %v2225 = vld [vmem:[%s657 + $0x8] sm:$0xff]
        %v2226 = vld [vmem:[%s657 + $0x10] sm:$0xff]
        %v2227 = vld [vmem:[%s657 + $0x18] sm:$0xff]
        %v2228 = vld [vmem:[%s657 + $0x20] sm:$0xff]
        %v2229 = vld [vmem:[%s657 + $0x28] sm:$0xff]
        %v2230 = vld [vmem:[%s657 + $0x30] sm:$0xff]
        %v2231 = vld [vmem:[%s657 + $0x38] sm:$0xff]
        %v2232 = vld [vmem:[%s660] sm:$0x1]
        %v2234 = vlaneseq
        %v2235 = vshrl.u32 %v2234, 7
        %v2236 = vsub.s32 0, %v2235
        %v2237 = vrot.slane %v2232, %v2236
        %vm2239 = vcmask 523264
        %v2241 = vsel %vm2239, %v2222, 0
        %v2244 = vsel %vm2239, %v2223, 0
        %2246 = vmatprep.subr.mxu0 0.0
        %2247 = vmatpush1.msra.mxu0 %v2224
        %2248 = vmatprep.subr.mxu0 0.0
        %2249 = vmatpush1.msra.mxu0 %v2225
        %2250 = vmatprep.subr.mxu0 0.0
        %2251 = vmatpush1.msra.mxu0 %v2226
        %2252 = vmatprep.subr.mxu0 0.0
        %2253 = vmatpush1.msra.mxu0 %v2227
        %2254 = vmatprep.subr.mxu0 0.0
        %2255 = vmatpush1.msra.mxu0 %v2228
        %2256 = vmatprep.subr.mxu0 0.0
        %2257 = vmatpush1.msra.mxu0 %v2229
        %2258 = vmatprep.subr.mxu0 0.0
        %2259 = vmatpush1.msra.mxu0 %v2230
        %2260 = vmatprep.subr.mxu0 0.0
        %2261 = vmatpush1.msra.mxu0 %v2231
        %2262 = vmatprep.subr.mxu0 0.0
        %2263 = vmatpush1.msra.mxu0 0.0
        %2264 = vmatprep.subr.mxu0 0.0
        %2265 = vmatpush1.msra.mxu0 0.0
        %2266 = vmatprep.subr.mxu0 0.0
        %2267 = vmatpush1.msra.mxu0 0.0
        %2268 = vmatprep.subr.mxu0 0.0
        %2269 = vmatpush1.msra.mxu0 0.0
        %2270 = vmatprep.subr.mxu0 0.0
        %2271 = vmatpush1.msra.mxu0 0.0
        %2272 = vmatprep.subr.mxu0 0.0
        %2273 = vmatpush1.msra.mxu0 0.0
        %2274 = vmatprep.subr.mxu0 0.0
        %2275 = vmatpush1.msra.mxu0 0.0
        %2276 = vmatprep.subr.mxu0 0.0
        %2277 = vmatpush1.msra.mxu0 0.0
        %2278 = vmatprep.subr.mxu0 0.0
        %2279 = vmatpush1.msra.mxu0 0.0
        %2280 = vmatprep.subr.mxu0 0.0
        %2281 = vmatpush1.msra.mxu0 0.0
        %2282 = vmatprep.subr.mxu0 0.0
        %2283 = vmatpush1.msra.mxu0 0.0
        %2284 = vmatprep.subr.mxu0 0.0
        %2285 = vmatpush1.msra.mxu0 0.0
        %2286 = vmatprep.subr.mxu0 0.0
        %2287 = vmatpush1.msra.mxu0 0.0
        %2288 = vmatprep.subr.mxu0 0.0
        %2289 = vmatpush1.msra.mxu0 0.0
        %2290 = vmatprep.subr.mxu0 0.0
        %2291 = vmatpush1.msra.mxu0 0.0
        %2292 = vmatprep.subr.mxu0 0.0
        %2293 = vmatpush1.msra.mxu0 0.0
        %2294 = vmatprep.subr.mxu0 0.0
        %2295 = vmatpush1.msra.mxu0 0.0
        %2296 = vmatprep.subr.mxu0 0.0
        %2297 = vmatpush1.msra.mxu0 0.0
        %2298 = vmatprep.subr.mxu0 0.0
        %2299 = vmatpush1.msra.mxu0 0.0
        %2300 = vmatprep.subr.mxu0 0.0
        %2301 = vmatpush1.msra.mxu0 0.0
        %2302 = vmatprep.subr.mxu0 0.0
        %2303 = vmatpush1.msra.mxu0 0.0
        %2304 = vmatprep.subr.mxu0 0.0
        %2305 = vmatpush1.msra.mxu0 0.0
        %2306 = vmatprep.subr.mxu0 0.0
        %2307 = vmatpush1.msra.mxu0 0.0
        %2308 = vmatprep.subr.mxu0 0.0
        %2309 = vmatpush1.msra.mxu0 0.0
        %2310 = vmatprep.mubr.f32.mxu0 0.0
        %2311 = vmatmul.mubr.f32.gmra.mrb[0].mxu0 %v2241
        %v2312 = vpop.f32.mrb[0].mxu0
        %v2313 = vadd.f32 %v2237, %v2312
        %v2314 = vpop.f32.mrb[0].mxu0
        %2315 = vmatprep.mubr.f32.mxu0 0.0
        %2316 = vmatmul.mubr.f32.gmra.mrb[0].mxu0 %v2244
        %v2317 = vpop.f32.mrb[0].mxu0
        %v2318 = vadd.f32 %v2237, %v2317
        %v2319 = vpop.f32.mrb[0].mxu0
        %2320 = vdwg.mxu0
        %v2321 = vadd.f32 %v762, %v2313
        %v2322 = vadd.f32 %v763, %v2318
        %v2323 = vld [vmem:[%s663] sm:$0x1]
        %v2324 = vld [vmem:[%s666] sm:$0x1]
        %v2325 = vsel %vm720, %v2321, 0.0
        %2326 = vadd.xlane.f32.xlu0 %v2325
        %v2327 = vpop.xlane.xlu0 %2326
        %v2328 = vsel %vm720, %v2322, 0.0
        %2329 = vadd.xlane.f32.xlu0 %v2328
        %v2330 = vpop.xlane.xlu0 %2329
        %v2331 = vmul.f32 %v2327, %v727
        %v2332 = vmul.f32 %v2330, %v727
        %v2333 = vsub.f32 %v2321, %v2331
        %v2334 = vsub.f32 %v2322, %v2332
        %v2335 = vmul.f32 %v2333, %v2333
        %v2336 = vmul.f32 %v2334, %v2334
        %v2337 = vsel %vm720, %v2335, 0.0
        %2338 = vadd.xlane.f32.xlu0 %v2337
        %v2339 = vpop.xlane.xlu0 %2338
        %v2340 = vsel %vm720, %v2336, 0.0
        %2341 = vadd.xlane.f32.xlu0 %v2340
        %v2342 = vpop.xlane.xlu0 %2341
        %v2343 = vmul.f32 %v2339, %v727
        %v2344 = vmul.f32 %v2342, %v727
        %v2345 = vadd.f32 %v2343, 1e-06
        %v2346 = vadd.f32 %v2344, 1e-06
        %v2347 = vrsqrt.pop %v2345
        %v2348 = vrsqrt.pop %v2346
        %v2349 = vmul.f32 %v2333, %v2347
        %v2350 = vmul.f32 %v2334, %v2348
        %v2352 = vlaneseq
        %v2353 = vshrl.u32 %v2352, 7
        %v2354 = vsub.s32 0, %v2353
        %v2355 = vrot.slane %v2323, %v2354
        %v2357 = vmul.f32 %v2349, %v2355
        %v2358 = vmul.f32 %v2350, %v2355
        %v2360 = vlaneseq
        %v2361 = vshrl.u32 %v2360, 7
        %v2362 = vsub.s32 0, %v2361
        %v2363 = vrot.slane %v2324, %v2362
        %v2365 = vadd.f32 %v2357, %v2363
        %v2366 = vadd.f32 %v2358, %v2363
        %v2367 = vld [vmem:[%s671] sm:$0xff]
        %v2368 = vld [vmem:[%s671 + $0x8] sm:$0xff]
        %v2369 = vld [vmem:[%s671 + $0x10] sm:$0xff]
        %v2370 = vld [vmem:[%s671 + $0x18] sm:$0xff]
        %v2371 = vld [vmem:[%s674] sm:$0x1]
        %v2373 = vlaneseq
        %v2374 = vshrl.u32 %v2373, 7
        %v2375 = vsub.s32 0, %v2374
        %v2376 = vrot.slane %v2371, %v2375
        %v2379 = vsel %vm720, %v2365, 0
        %v2382 = vsel %vm720, %v2366, 0
        %2384 = vmatprep.subr.mxu0 0.0
        %2385 = vmatpush1.msra.mxu0 %v2367
        %2386 = vmatprep.subr.mxu0 0.0
        %2387 = vmatpush1.msra.mxu0 %v2368
        %2388 = vmatprep.subr.mxu0 0.0
        %2389 = vmatpush1.msra.mxu0 %v2369
        %2390 = vmatprep.subr.mxu0 0.0
        %2391 = vmatpush1.msra.mxu0 %v2370
        %2392 = vmatprep.subr.mxu0 0.0
        %2393 = vmatpush1.msra.mxu0 0.0
        %2394 = vmatprep.subr.mxu0 0.0
        %2395 = vmatpush1.msra.mxu0 0.0
        %2396 = vmatprep.subr.mxu0 0.0
        %2397 = vmatpush1.msra.mxu0 0.0
        %2398 = vmatprep.subr.mxu0 0.0
        %2399 = vmatpush1.msra.mxu0 0.0
        %2400 = vmatprep.subr.mxu0 0.0
        %2401 = vmatpush1.msra.mxu0 0.0
        %2402 = vmatprep.subr.mxu0 0.0
        %2403 = vmatpush1.msra.mxu0 0.0
        %2404 = vmatprep.subr.mxu0 0.0
        %2405 = vmatpush1.msra.mxu0 0.0
        %2406 = vmatprep.subr.mxu0 0.0
        %2407 = vmatpush1.msra.mxu0 0.0
        %2408 = vmatprep.subr.mxu0 0.0
        %2409 = vmatpush1.msra.mxu0 0.0
        %2410 = vmatprep.subr.mxu0 0.0
        %2411 = vmatpush1.msra.mxu0 0.0
        %2412 = vmatprep.subr.mxu0 0.0
        %2413 = vmatpush1.msra.mxu0 0.0
        %2414 = vmatprep.subr.mxu0 0.0
        %2415 = vmatpush1.msra.mxu0 0.0
        %2416 = vmatprep.subr.mxu0 0.0
        %2417 = vmatpush1.msra.mxu0 0.0
        %2418 = vmatprep.subr.mxu0 0.0
        %2419 = vmatpush1.msra.mxu0 0.0
        %2420 = vmatprep.subr.mxu0 0.0
        %2421 = vmatpush1.msra.mxu0 0.0
        %2422 = vmatprep.subr.mxu0 0.0
        %2423 = vmatpush1.msra.mxu0 0.0
        %2424 = vmatprep.subr.mxu0 0.0
        %2425 = vmatpush1.msra.mxu0 0.0
        %2426 = vmatprep.subr.mxu0 0.0
        %2427 = vmatpush1.msra.mxu0 0.0
        %2428 = vmatprep.subr.mxu0 0.0
        %2429 = vmatpush1.msra.mxu0 0.0
        %2430 = vmatprep.subr.mxu0 0.0
        %2431 = vmatpush1.msra.mxu0 0.0
        %2432 = vmatprep.subr.mxu0 0.0
        %2433 = vmatpush1.msra.mxu0 0.0
        %2434 = vmatprep.subr.mxu0 0.0
        %2435 = vmatpush1.msra.mxu0 0.0
        %2436 = vmatprep.subr.mxu0 0.0
        %2437 = vmatpush1.msra.mxu0 0.0
        %2438 = vmatprep.subr.mxu0 0.0
        %2439 = vmatpush1.msra.mxu0 0.0
        %2440 = vmatprep.subr.mxu0 0.0
        %2441 = vmatpush1.msra.mxu0 0.0
        %2442 = vmatprep.subr.mxu0 0.0
        %2443 = vmatpush1.msra.mxu0 0.0
        %2444 = vmatprep.subr.mxu0 0.0
        %2445 = vmatpush1.msra.mxu0 0.0
        %2446 = vmatprep.subr.mxu0 0.0
        %2447 = vmatpush1.msra.mxu0 0.0
        %2448 = vmatprep.mubr.f32.mxu0 0.0
        %2449 = vmatmul.mubr.f32.gmra.mrb[0].mxu0 %v2379
        %v2450 = vpop.f32.mrb[0].mxu0
        %v2451 = vadd.f32 %v2376, %v2450
        %v2452 = vpop.f32.mrb[0].mxu0
        %2453 = vmatprep.mubr.f32.mxu0 0.0
        %2454 = vmatmul.mubr.f32.gmra.mrb[0].mxu0 %v2382
        %v2455 = vpop.f32.mrb[0].mxu0
        %v2456 = vadd.f32 %v2376, %v2455
        %v2457 = vpop.f32.mrb[0].mxu0
        %2458 = vdwg.mxu0
        %v2459 = vmax.f32 %v2451, 0.0
        %v2460 = vmax.f32 %v2456, 0.0
        %v2461 = vld [vmem:[%s679] sm:$0xff]
        %v2462 = vld [vmem:[%s679 + $0x8] sm:$0xff]
        %v2463 = vld [vmem:[%s679 + $0x10] sm:$0xff]
        %v2464 = vld [vmem:[%s679 + $0x18] sm:$0xff]
        %v2465 = vld [vmem:[%s679 + $0x20] sm:$0xff]
        %v2466 = vld [vmem:[%s679 + $0x28] sm:$0xff]
        %v2467 = vld [vmem:[%s679 + $0x30] sm:$0xff]
        %v2468 = vld [vmem:[%s679 + $0x38] sm:$0xff]
        %v2469 = vld [vmem:[%s682] sm:$0x1]
        %v2471 = vlaneseq
        %v2472 = vshrl.u32 %v2471, 7
        %v2473 = vsub.s32 0, %v2472
        %v2474 = vrot.slane %v2469, %v2473
        %v2477 = vsel %vm2239, %v2459, 0
        %v2480 = vsel %vm2239, %v2460, 0
        %2482 = vmatprep.subr.mxu0 0.0
        %2483 = vmatpush1.msra.mxu0 %v2461
        %2484 = vmatprep.subr.mxu0 0.0
        %2485 = vmatpush1.msra.mxu0 %v2462
        %2486 = vmatprep.subr.mxu0 0.0
        %2487 = vmatpush1.msra.mxu0 %v2463
        %2488 = vmatprep.subr.mxu0 0.0
        %2489 = vmatpush1.msra.mxu0 %v2464
        %2490 = vmatprep.subr.mxu0 0.0
        %2491 = vmatpush1.msra.mxu0 %v2465
        %2492 = vmatprep.subr.mxu0 0.0
        %2493 = vmatpush1.msra.mxu0 %v2466
        %2494 = vmatprep.subr.mxu0 0.0
        %2495 = vmatpush1.msra.mxu0 %v2467
        %2496 = vmatprep.subr.mxu0 0.0
        %2497 = vmatpush1.msra.mxu0 %v2468
        %2498 = vmatprep.subr.mxu0 0.0
        %2499 = vmatpush1.msra.mxu0 0.0
        %2500 = vmatprep.subr.mxu0 0.0
        %2501 = vmatpush1.msra.mxu0 0.0
        %2502 = vmatprep.subr.mxu0 0.0
        %2503 = vmatpush1.msra.mxu0 0.0
        %2504 = vmatprep.subr.mxu0 0.0
        %2505 = vmatpush1.msra.mxu0 0.0
        %2506 = vmatprep.subr.mxu0 0.0
        %2507 = vmatpush1.msra.mxu0 0.0
        %2508 = vmatprep.subr.mxu0 0.0
        %2509 = vmatpush1.msra.mxu0 0.0
        %2510 = vmatprep.subr.mxu0 0.0
        %2511 = vmatpush1.msra.mxu0 0.0
        %2512 = vmatprep.subr.mxu0 0.0
        %2513 = vmatpush1.msra.mxu0 0.0
        %2514 = vmatprep.subr.mxu0 0.0
        %2515 = vmatpush1.msra.mxu0 0.0
        %2516 = vmatprep.subr.mxu0 0.0
        %2517 = vmatpush1.msra.mxu0 0.0
        %2518 = vmatprep.subr.mxu0 0.0
        %2519 = vmatpush1.msra.mxu0 0.0
        %2520 = vmatprep.subr.mxu0 0.0
        %2521 = vmatpush1.msra.mxu0 0.0
        %2522 = vmatprep.subr.mxu0 0.0
        %2523 = vmatpush1.msra.mxu0 0.0
        %2524 = vmatprep.subr.mxu0 0.0
        %2525 = vmatpush1.msra.mxu0 0.0
        %2526 = vmatprep.subr.mxu0 0.0
        %2527 = vmatpush1.msra.mxu0 0.0
        %2528 = vmatprep.subr.mxu0 0.0
        %2529 = vmatpush1.msra.mxu0 0.0
        %2530 = vmatprep.subr.mxu0 0.0
        %2531 = vmatpush1.msra.mxu0 0.0
        %2532 = vmatprep.subr.mxu0 0.0
        %2533 = vmatpush1.msra.mxu0 0.0
        %2534 = vmatprep.subr.mxu0 0.0
        %2535 = vmatpush1.msra.mxu0 0.0
        %2536 = vmatprep.subr.mxu0 0.0
        %2537 = vmatpush1.msra.mxu0 0.0
        %2538 = vmatprep.subr.mxu0 0.0
        %2539 = vmatpush1.msra.mxu0 0.0
        %2540 = vmatprep.subr.mxu0 0.0
        %2541 = vmatpush1.msra.mxu0 0.0
        %2542 = vmatprep.subr.mxu0 0.0
        %2543 = vmatpush1.msra.mxu0 0.0
        %2544 = vmatprep.subr.mxu0 0.0
        %2545 = vmatpush1.msra.mxu0 0.0
        %2546 = vmatprep.mubr.f32.mxu0 0.0
        %2547 = vmatmul.mubr.f32.gmra.mrb[0].mxu0 %v2477
        %v2548 = vpop.f32.mrb[0].mxu0
        %v2549 = vadd.f32 %v2474, %v2548
        %v2550 = vpop.f32.mrb[0].mxu0
        %2551 = vmatprep.mubr.f32.mxu0 0.0
        %2552 = vmatmul.mubr.f32.gmra.mrb[0].mxu0 %v2480
        %v2553 = vpop.f32.mrb[0].mxu0
        %v2554 = vadd.f32 %v2474, %v2553
        %v2555 = vpop.f32.mrb[0].mxu0
        %2556 = vdwg.mxu0
        %v2557 = vadd.f32 %v2365, %v2549
        %v2558 = vadd.f32 %v2366, %v2554
        %p2559 = scmp.eq.s32.totalorder %s28, 1
        // Predicated region
        $region89: #{tpu_custom_call.1} parent=83 // pred_check
          %p2560 = pneg %p2559
        $region90: #{tpu_custom_call.1} parent=83 // pred_check_branch
          %2562 = sbr.rel (%p2560) target = $region92
        $region91: #{tpu_custom_call.1} parent=83 // pred_region
          %v2563 = vld [vmem:[%s14] sm:$0x1]
          %v2564 = vld [vmem:[%s15] sm:$0x1]
          %v2565 = vsel %vm720, %v2557, 0.0
          %2566 = vadd.xlane.f32.xlu0 %v2565
          %v2567 = vpop.xlane.xlu0 %2566
          %v2568 = vsel %vm720, %v2558, 0.0
          %2569 = vadd.xlane.f32.xlu0 %v2568
          %v2570 = vpop.xlane.xlu0 %2569
          %v2571 = vmul.f32 %v2567, %v727
          %v2572 = vmul.f32 %v2570, %v727
          %v2573 = vsub.f32 %v2557, %v2571
          %v2574 = vsub.f32 %v2558, %v2572
          %v2575 = vmul.f32 %v2573, %v2573
          %v2576 = vmul.f32 %v2574, %v2574
          %v2577 = vsel %vm720, %v2575, 0.0
          %2578 = vadd.xlane.f32.xlu0 %v2577
          %v2579 = vpop.xlane.xlu0 %2578
          %v2580 = vsel %vm720, %v2576, 0.0
          %2581 = vadd.xlane.f32.xlu0 %v2580
          %v2582 = vpop.xlane.xlu0 %2581
          %v2583 = vmul.f32 %v2579, %v727
          %v2584 = vmul.f32 %v2582, %v727
          %v2585 = vadd.f32 %v2583, 1e-06
          %v2586 = vadd.f32 %v2584, 1e-06
          %v2587 = vrsqrt.pop %v2585
          %v2588 = vrsqrt.pop %v2586
          %v2589 = vmul.f32 %v2573, %v2587
          %v2590 = vmul.f32 %v2574, %v2588
          %v2592 = vlaneseq
          %v2593 = vshrl.u32 %v2592, 7
          %v2594 = vsub.s32 0, %v2593
          %v2595 = vrot.slane %v2563, %v2594
          %v2597 = vmul.f32 %v2589, %v2595
          %v2598 = vmul.f32 %v2590, %v2595
          %v2600 = vlaneseq
          %v2601 = vshrl.u32 %v2600, 7
          %v2602 = vsub.s32 0, %v2601
          %v2603 = vrot.slane %v2564, %v2602
          %v2605 = vadd.f32 %v2597, %v2603
          %v2606 = vadd.f32 %v2598, %v2603
          %2607 = vst.msk [vmem:[#allocation2] sm:$0xff] %vm720, %v2605
          %2608 = vst.msk [vmem:[#allocation2 + $0x8] sm:$0xff] %vm720, %v2606
        $region92: #{tpu_custom_call.1} parent=83 // pred_fallthru
          _
        %p2609 = scmp.ne.s32.totalorder %s28, 1
        // Predicated region
        $region93: #{tpu_custom_call.1} parent=83 // pred_check
          %p2610 = pneg %p2609
        $region94: #{tpu_custom_call.1} parent=83 // pred_check_branch
          %2612 = sbr.rel (%p2610) target = $region96
        $region95: #{tpu_custom_call.1} parent=83 // pred_region
          %2613 = vst.msk [vmem:[#allocation2] sm:$0xff] %vm720, %v2557
          %2614 = vst.msk [vmem:[#allocation2 + $0x8] sm:$0xff] %vm720, %v2558
        $region96: #{tpu_custom_call.1} parent=83 // pred_fallthru
          _
        // Predicated region
        $region97: #{tpu_custom_call.1} parent=83 // pred_check
          %p2615 = pneg %p437
        $region98: #{tpu_custom_call.1} parent=83 // pred_check_branch
          %2617 = sbr.rel (%p2615) target = $region100
        $region99: #{tpu_custom_call.1} parent=83 // pred_region
          %s2619 = ssub.s32 256, 256
          %2620 = vsyncadd [#allocation3], %s2619
          %s2621 = sshll.u32 [#allocation2], 4
          %s2622 = int_to_ptr.vmem [resolvable:$true] %s2621
          %2627 = dma.vmem_to_hbm [thread:$0]  %s2622, 256, %s16, [#allocation3], 128, 128, 8
        $region100: #{tpu_custom_call.1} parent=83 // pred_fallthru
          _
        // Predicated region
        $region101: #{tpu_custom_call.1} parent=83 // pred_check
          %p2628 = pneg %p437
        $region102: #{tpu_custom_call.1} parent=83 // pred_check_branch
          %2630 = sbr.rel (%p2628) target = $region104
        $region103: #{tpu_custom_call.1} parent=83 // pred_region
          %2631 = dma.done [#allocation3], 256
        $region104: #{tpu_custom_call.1} parent=83 // pred_fallthru
          _
      $region84: #{tpu_custom_call.1} parent=5 // pred_fallthru
        _
      %p2632 = scmp.le.s32.totalorder 2, %s23
      // Predicated region
      $region105: #{tpu_custom_call.1} parent=5 // pred_check
        %p2633 = pneg %p2632
      $region106: #{tpu_custom_call.1} parent=5 // pred_check_branch
        %2635 = sbr.rel (%p2633) target = $region108
      $region107: #{tpu_custom_call.1} parent=5 // pred_region
        %s2636 = ssub.s32 %s23, 2
      $region108: #{tpu_custom_call.1} parent=5 // pred_fallthru
        _
    $region6: #{tpu_custom_call.1} parent=1 // loop_footer
      %s27 = sadd.s32 1, %s23
    $region7: #{tpu_custom_call.1} parent=1 // loop_footer_branch
      %22 = sbr.rel target = $region3
    $region8: #{tpu_custom_call.1} parent=1 // loop_exit
      _
    %2637 = vsyncpa [#allocation3], 1
    %s2638 = scalar_lea.sflag [#allocation3], 1
    %2639 = vsyncpa %s2638, 1

</llo_original>
